<compile_context>
chip_gen: v5e
topology: v5e:2x2
jax: 0.10.0
libtpu: 0.0.40
codegen_flags: <defaults>
</compile_context>

<pallas_src>
import functools

import jax
import jax.numpy as jnp
from jax.experimental import pallas as pl
from jax.experimental.pallas import tpu as pltpu

_BN_EPS = 1e-5


# ----------------------------------------------------------------------------
# Fused kernel
# ----------------------------------------------------------------------------
def _conv3x3_bn_relu(xp_ref, w_ref, s_ref, b_ref):
    """3x3/s1/p1 conv + folded BN + ReLU on one zero-haloed VMEM slab.

    xp_ref: VMEM ref (H+2, W+2, Cin) f32 (halo already zeroed).
    w_ref : (3, 3*Cin, Cout) bf16 weights, kw-major along the K axis.
    s_ref, b_ref: (1, Cout) f32 folded BatchNorm scale / bias.
    Returns (H*W, Cout) f32.
    """
    Hp, Wp, cin = xp_ref.shape
    H, W = Hp - 2, Wp - 2
    cout = w_ref.shape[-1]
    acc = jnp.zeros((H * W, cout), jnp.float32)
    for kh in range(3):
        slab = xp_ref[kh:kh + H]                       # (H, W+2, Cin)
        patch = jnp.concatenate(                       # kw shifts -> lane axis
            [slab[:, 0:W, :], slab[:, 1:W + 1, :], slab[:, 2:W + 2, :]],
            axis=-1)                                   # (H, W, 3*Cin)
        patch = patch.reshape(H * W, 3 * cin).astype(jnp.bfloat16)
        acc = acc + jnp.dot(patch, w_ref[kh],          # bf16 MXU, f32 acc
                            preferred_element_type=jnp.float32)
    y = acc * s_ref[...] + b_ref[...]                  # folded BN (eval stats)
    return jnp.maximum(y, 0.0)                         # ReLU, f32


def dbga_fused_kernel(x1_ref, x2_ref, x3_ref,
                      w_sp_ref, s_sp_ref, b_sp_ref,
                      w_rf_ref, s_rf_ref, b_rf_ref,
                      w_cx_ref, s_cx_ref, b_cx_ref,
                      a_ref, o_ref,
                      xp1, xp2, xpf):
    H, W = x1_ref.shape[1], x1_ref.shape[2]
    Ho, Wo, cout = o_ref.shape[1], o_ref.shape[2], o_ref.shape[3]

    # Build the 1-px zero halo entirely in VMEM (no HBM pad copies).  The
    # slabs are re-zeroed every step so the kernel is correct regardless of
    # how a parallel grid axis is split across TensorCores.
    xp1[...] = jnp.zeros_like(xp1)
    xp2[...] = jnp.zeros_like(xp2)
    xpf[...] = jnp.zeros_like(xpf)
    xp1[1:H + 1, 1:W + 1, :] = x1_ref[0].astype(jnp.float32)
    xp2[1:H + 1, 1:W + 1, :] = x2_ref[0].astype(jnp.float32)

    s = _conv3x3_bn_relu(xp1, w_sp_ref, s_sp_ref, b_sp_ref)   # (H*W, 128)
    r = _conv3x3_bn_relu(xp2, w_rf_ref, s_rf_ref, b_rf_ref)   # (H*W, 128)

    # convx input = s + r, written into the third haloed slab (VMEM only).
    xpf[1:H + 1, 1:W + 1, :] = (s + r).reshape(H, W, -1)

    f = _conv3x3_bn_relu(xpf, w_cx_ref, s_cx_ref, b_cx_ref)   # (H*W, Cout)

    # 2x bilinear (align_corners=True) upsample as one lane-dense matmul
    # with the kron(Ah, Aw) operator; +x3 residual fused into the store.
    up = jnp.dot(a_ref[...], f, preferred_element_type=jnp.float32)
    o_ref[0] = (up.reshape(Ho, Wo, cout) + x3_ref[0]).astype(o_ref.dtype)


# ----------------------------------------------------------------------------
# Wrapper (pallas_call plumbing)
# ----------------------------------------------------------------------------
def _bilinear_matrix(n_in, n_out):
    """1-D interpolation matrix matching F.interpolate(align_corners=True)."""
    if n_in == 1:
        return jnp.ones((n_out, 1), jnp.float32)
    src = jnp.arange(n_out, dtype=jnp.float32) * (n_in - 1) / (n_out - 1)
    i0 = jnp.clip(jnp.floor(src).astype(jnp.int32), 0, n_in - 2)
    frac = src - i0.astype(jnp.float32)
    rows = jnp.arange(n_out)
    a = jnp.zeros((n_out, n_in), jnp.float32)
    a = a.at[rows, i0].add(1.0 - frac)
    a = a.at[rows, i0 + 1].add(frac)
    return a


def dbga_fused(params, x1, x2, x3):
    """x1:(N,H,W,256) bf16, x2:(N,H,W,128) bf16, x3:(N,2H,2W,Cout) f32."""
    N, H, W, c1 = x1.shape
    c2 = x2.shape[-1]
    _, Ho, Wo, cout = x3.shape
    w_sp, s_sp, b_sp = params["spatial"]
    w_rf, s_rf, b_rf = params["refine"]
    w_cx, s_cx, b_cx = params["convx"]
    cmid = w_cx.shape[1] // 3

    # Full 2x bilinear operator acting on row-major (H*W, C) feature rows.
    a_up = jnp.kron(_bilinear_matrix(H, Ho), _bilinear_matrix(W, Wo))

    conv_flops = 2 * H * W * 9 * (c1 * 128 + c2 * 128 + cmid * cout)
    up_flops = 2 * Ho * Wo * H * W * cout
    weight_bytes = sum(int(p.size) * p.dtype.itemsize
                       for trio in params.values() for p in trio)
    bytes_accessed = (x1.size * x1.dtype.itemsize
                      + x2.size * x2.dtype.itemsize
                      + x3.size * x3.dtype.itemsize
                      + N * Ho * Wo * cout * 4
                      + weight_bytes + int(a_up.size) * 4)

    def full(shape):
        return pl.BlockSpec(shape, lambda n: (0,) * len(shape))

    return pl.pallas_call(
        dbga_fused_kernel,
        out_shape=jax.ShapeDtypeStruct((N, Ho, Wo, cout), jnp.float32),
        grid=(N,),
        in_specs=[
            pl.BlockSpec((1, H, W, c1), lambda n: (n, 0, 0, 0)),
            pl.BlockSpec((1, H, W, c2), lambda n: (n, 0, 0, 0)),
            pl.BlockSpec((1, Ho, Wo, cout), lambda n: (n, 0, 0, 0)),
            full(w_sp.shape), full(s_sp.shape), full(b_sp.shape),
            full(w_rf.shape), full(s_rf.shape), full(b_rf.shape),
            full(w_cx.shape), full(s_cx.shape), full(b_cx.shape),
            full(a_up.shape),
        ],
        out_specs=pl.BlockSpec((1, Ho, Wo, cout), lambda n: (n, 0, 0, 0)),
        scratch_shapes=[
            pltpu.VMEM((H + 2, W + 2, c1), jnp.float32),
            pltpu.VMEM((H + 2, W + 2, c2), jnp.float32),
            pltpu.VMEM((H + 2, W + 2, cmid), jnp.float32),
        ],
        compiler_params=pltpu.CompilerParams(
            dimension_semantics=("parallel",)),
        cost_estimate=pl.CostEstimate(
            flops=int(N * (conv_flops + up_flops)),
            transcendentals=0,
            bytes_accessed=int(bytes_accessed)),
    )(x1, x2, x3, w_sp, s_sp, b_sp, w_rf, s_rf, b_rf, w_cx, s_cx, b_cx, a_up)


# ----------------------------------------------------------------------------
# Parameter construction (deterministic, synthetic)
# ----------------------------------------------------------------------------
def make_conv_bn_params(key, cin, cout):
    kw_, kg, kb, km, kv = jax.random.split(key, 5)
    fan_in = cin * 9
    std = (2.0 / ((1.0 + 1.0 ** 2) * fan_in)) ** 0.5     # kaiming_normal_(a=1)
    w = jax.random.normal(kw_, (cout, cin, 3, 3), jnp.float32) * std  # OIHW
    # (Cout,Cin,kh,kw) -> (kh, kw*Cin, Cout): kw-major K, matching the
    # kernel's lane-axis patch concatenation; bf16 for the MXU.
    w3 = jnp.transpose(w, (2, 3, 1, 0)).reshape(3, 3 * cin, cout)
    w3 = w3.astype(jnp.bfloat16)
    gamma = 1.0 + 0.1 * jax.random.normal(kg, (cout,), jnp.float32)
    beta = 0.1 * jax.random.normal(kb, (cout,), jnp.float32)
    mean = 0.1 * jax.random.normal(km, (cout,), jnp.float32)
    var = jnp.abs(jax.random.normal(kv, (cout,), jnp.float32)) + 0.5
    scale = gamma / jnp.sqrt(var + _BN_EPS)
    bias = beta - mean * scale
    return w3, scale.reshape(1, cout), bias.reshape(1, cout)


# ----------------------------------------------------------------------------
# DBGAMoudle.forward
# ----------------------------------------------------------------------------
def dbga_forward(params, x1, x2, x3):
    # PyTorch-style NCHW inputs -> NHWC (channels in lanes) for the kernel.
    x1 = jnp.transpose(x1, (0, 2, 3, 1)).astype(jnp.bfloat16)
    x2 = jnp.transpose(x2, (0, 2, 3, 1)).astype(jnp.bfloat16)
    x3 = jnp.transpose(x3, (0, 2, 3, 1))
    out = dbga_fused(params, x1, x2, x3)
    return jnp.transpose(out, (0, 3, 1, 2))              # back to NCHW


if __name__ == "__main__":
    key = jax.random.PRNGKey(0)
    k1, k2, k3, kp1, kp2, kp3 = jax.random.split(key, 6)

    N, H, W = 2, 8, 8
    in_chan, out_chan = 128, 128                          # convx channels

    x1 = jax.random.normal(k1, (N, 256, H, W), jnp.float32)
    x2 = jax.random.normal(k2, (N, 128, H, W), jnp.float32)
    x3 = jax.random.normal(k3, (N, out_chan, 2 * H, 2 * W), jnp.float32)

    params = {
        "spatial": make_conv_bn_params(kp1, 256, 128),
        "refine": make_conv_bn_params(kp2, 128, 128),
        "convx": make_conv_bn_params(kp3, in_chan, out_chan),
    }

    out = jax.jit(functools.partial(dbga_forward, params))(x1, x2, x3)
    out = jax.block_until_ready(out)

    assert out.shape == (N, out_chan, 2 * H, 2 * W), out.shape
    assert bool(jnp.all(jnp.isfinite(out)))
    print("KERNEL_OK")
</pallas_src>

<mosaic_0001>
module attributes {stable_mosaic.version = 11 : i64} {
  func.func @dbga_fused_kernel(%arg0: i32, %arg1: memref<1x8x8x256xbf16, #tpu.memory_space<vmem>>, %arg2: memref<1x8x8x128xbf16, #tpu.memory_space<vmem>>, %arg3: memref<1x16x16x128xf32, #tpu.memory_space<vmem>>, %arg4: memref<3x768x128xbf16, #tpu.memory_space<vmem>>, %arg5: memref<1x128xf32, #tpu.memory_space<vmem>>, %arg6: memref<1x128xf32, #tpu.memory_space<vmem>>, %arg7: memref<3x384x128xbf16, #tpu.memory_space<vmem>>, %arg8: memref<1x128xf32, #tpu.memory_space<vmem>>, %arg9: memref<1x128xf32, #tpu.memory_space<vmem>>, %arg10: memref<3x384x128xbf16, #tpu.memory_space<vmem>>, %arg11: memref<1x128xf32, #tpu.memory_space<vmem>>, %arg12: memref<1x128xf32, #tpu.memory_space<vmem>>, %arg13: memref<256x64xf32, #tpu.memory_space<vmem>>, %arg14: memref<1x16x16x128xf32, #tpu.memory_space<vmem>>, %arg15: memref<10x10x256xf32, #tpu.memory_space<vmem>>, %arg16: memref<10x10x128xf32, #tpu.memory_space<vmem>>, %arg17: memref<10x10x128xf32, #tpu.memory_space<vmem>>) attributes {dimension_semantics = [#tpu.dimension_semantics<parallel>], iteration_bounds = array<i64: 2>, scalar_prefetch = 0 : i64, scratch_operands = 3 : i64, tpu.core_type = #tpu.core_type<tc>, window_params = [{transform_indices = @transform_0, window_bounds = array<i64: 1, 8, 8, 256>}, {transform_indices = @transform_1, window_bounds = array<i64: 1, 8, 8, 128>}, {transform_indices = @transform_2, window_bounds = array<i64: 1, 16, 16, 128>}, {pipeline_mode = #tpu.pipeline_mode<synchronous>, transform_indices = @transform_3, window_bounds = array<i64: 3, 768, 128>}, {pipeline_mode = #tpu.pipeline_mode<synchronous>, transform_indices = @transform_4, window_bounds = array<i64: 1, 128>}, {pipeline_mode = #tpu.pipeline_mode<synchronous>, transform_indices = @transform_5, window_bounds = array<i64: 1, 128>}, {pipeline_mode = #tpu.pipeline_mode<synchronous>, transform_indices = @transform_6, window_bounds = array<i64: 3, 384, 128>}, {pipeline_mode = #tpu.pipeline_mode<synchronous>, transform_indices = @transform_7, window_bounds = array<i64: 1, 128>}, {pipeline_mode = #tpu.pipeline_mode<synchronous>, transform_indices = @transform_8, window_bounds = array<i64: 1, 128>}, {pipeline_mode = #tpu.pipeline_mode<synchronous>, transform_indices = @transform_9, window_bounds = array<i64: 3, 384, 128>}, {pipeline_mode = #tpu.pipeline_mode<synchronous>, transform_indices = @transform_10, window_bounds = array<i64: 1, 128>}, {pipeline_mode = #tpu.pipeline_mode<synchronous>, transform_indices = @transform_11, window_bounds = array<i64: 1, 128>}, {pipeline_mode = #tpu.pipeline_mode<synchronous>, transform_indices = @transform_12, window_bounds = array<i64: 256, 64>}, {transform_indices = @transform_13, window_bounds = array<i64: 1, 16, 16, 128>}]} {
    %cst = arith.constant 0.000000e+00 : f32
    %0 = vector.broadcast %cst : f32 to vector<10x10x256xf32>
    %c0 = arith.constant 0 : index
    %c0_0 = arith.constant 0 : index
    %c0_1 = arith.constant 0 : index
    %1 = vector.load %arg15[%c0, %c0_0, %c0_1] : memref<10x10x256xf32, #tpu.memory_space<vmem>>, vector<10x10x256xf32>
    tpu.vector_store %arg15[%c0, %c0_0, %c0_1], %0 {strides = array<i32>} : memref<10x10x256xf32, #tpu.memory_space<vmem>>, vector<10x10x256xf32>,
    %cst_2 = arith.constant 0.000000e+00 : f32
    %2 = vector.broadcast %cst_2 : f32 to vector<10x10x128xf32>
    %c0_3 = arith.constant 0 : index
    %c0_4 = arith.constant 0 : index
    %c0_5 = arith.constant 0 : index
    %3 = vector.load %arg16[%c0_3, %c0_4, %c0_5] : memref<10x10x128xf32, #tpu.memory_space<vmem>>, vector<10x10x128xf32>
    tpu.vector_store %arg16[%c0_3, %c0_4, %c0_5], %2 {strides = array<i32>} : memref<10x10x128xf32, #tpu.memory_space<vmem>>, vector<10x10x128xf32>,
    %cst_6 = arith.constant 0.000000e+00 : f32
    %4 = vector.broadcast %cst_6 : f32 to vector<10x10x128xf32>
    %c0_7 = arith.constant 0 : index
    %c0_8 = arith.constant 0 : index
    %c0_9 = arith.constant 0 : index
    %5 = vector.load %arg17[%c0_7, %c0_8, %c0_9] : memref<10x10x128xf32, #tpu.memory_space<vmem>>, vector<10x10x128xf32>
    tpu.vector_store %arg17[%c0_7, %c0_8, %c0_9], %4 {strides = array<i32>} : memref<10x10x128xf32, #tpu.memory_space<vmem>>, vector<10x10x128xf32>,
    %c0_10 = arith.constant 0 : index
    %c0_11 = arith.constant 0 : index
    %c0_12 = arith.constant 0 : index
    %c0_13 = arith.constant 0 : index
    %6 = vector.load %arg1[%c0_10, %c0_11, %c0_12, %c0_13] : memref<1x8x8x256xbf16, #tpu.memory_space<vmem>>, vector<1x8x8x256xbf16>
    %7 = vector.shape_cast %6 : vector<1x8x8x256xbf16> to vector<8x8x256xbf16>
    %8 = arith.extf %7 : vector<8x8x256xbf16> to vector<8x8x256xf32>
    %c1 = arith.constant 1 : index
    %c1_14 = arith.constant 1 : index
    %c0_15 = arith.constant 0 : index
    %9 = vector.load %arg15[%c1, %c1_14, %c0_15] : memref<10x10x256xf32, #tpu.memory_space<vmem>>, vector<8x8x256xf32>
    tpu.vector_store %arg15[%c1, %c1_14, %c0_15], %8 {strides = array<i32>} : memref<10x10x256xf32, #tpu.memory_space<vmem>>, vector<8x8x256xf32>,
    %c0_16 = arith.constant 0 : index
    %c0_17 = arith.constant 0 : index
    %c0_18 = arith.constant 0 : index
    %c0_19 = arith.constant 0 : index
    %10 = vector.load %arg2[%c0_16, %c0_17, %c0_18, %c0_19] : memref<1x8x8x128xbf16, #tpu.memory_space<vmem>>, vector<1x8x8x128xbf16>
    %11 = vector.shape_cast %10 : vector<1x8x8x128xbf16> to vector<8x8x128xbf16>
    %12 = arith.extf %11 : vector<8x8x128xbf16> to vector<8x8x128xf32>
    %c1_20 = arith.constant 1 : index
    %c1_21 = arith.constant 1 : index
    %c0_22 = arith.constant 0 : index
    %13 = vector.load %arg16[%c1_20, %c1_21, %c0_22] : memref<10x10x128xf32, #tpu.memory_space<vmem>>, vector<8x8x128xf32>
    tpu.vector_store %arg16[%c1_20, %c1_21, %c0_22], %12 {strides = array<i32>} : memref<10x10x128xf32, #tpu.memory_space<vmem>>, vector<8x8x128xf32>,
    %cst_23 = arith.constant 0.000000e+00 : f32
    %14 = vector.broadcast %cst_23 : f32 to vector<64x128xf32>
    %c0_24 = arith.constant 0 : index
    %c0_25 = arith.constant 0 : index
    %c0_26 = arith.constant 0 : index
    %15 = vector.load %arg15[%c0_24, %c0_25, %c0_26] : memref<10x10x256xf32, #tpu.memory_space<vmem>>, vector<8x10x256xf32>
    %16 = vector.extract_strided_slice %15 {offsets = [0, 0, 0], sizes = [8, 8, 256], strides = [1, 1, 1]} : vector<8x10x256xf32> to vector<8x8x256xf32>
    %17 = vector.extract_strided_slice %15 {offsets = [0, 1, 0], sizes = [8, 8, 256], strides = [1, 1, 1]} : vector<8x10x256xf32> to vector<8x8x256xf32>
    %18 = vector.extract_strided_slice %15 {offsets = [0, 2, 0], sizes = [8, 8, 256], strides = [1, 1, 1]} : vector<8x10x256xf32> to vector<8x8x256xf32>
    %19 = tpu.concatenate %16, %17, %18 in 2 : vector<8x8x256xf32>, vector<8x8x256xf32>, vector<8x8x256xf32> -> vector<8x8x768xf32>
    %20 = vector.shape_cast %19 : vector<8x8x768xf32> to vector<64x768xf32>
    %21 = arith.truncf %20 : vector<64x768xf32> to vector<64x768xbf16>
    %c0_27 = arith.constant 0 : index
    %c0_28 = arith.constant 0 : index
    %c0_29 = arith.constant 0 : index
    %22 = vector.load %arg4[%c0_27, %c0_28, %c0_29] : memref<3x768x128xbf16, #tpu.memory_space<vmem>>, vector<1x768x128xbf16>
    %23 = vector.shape_cast %22 : vector<1x768x128xbf16> to vector<768x128xbf16>
    %cst_30 = arith.constant dense<0.000000e+00> : vector<64x128xf32>
    %24 = tpu.matmul %21, %23, %cst_30 {dimension_numbers = #tpu.dot_dimension_numbers<[1], [0], [0], [1], [0, 0, 1, 1], [], []>} : vector<64x768xbf16>, vector<768x128xbf16>, vector<64x128xf32> -> vector<64x128xf32>
    %25 = arith.addf %14, %24 : vector<64x128xf32>
    %c1_31 = arith.constant 1 : index
    %c0_32 = arith.constant 0 : index
    %c0_33 = arith.constant 0 : index
    %26 = vector.load %arg15[%c1_31, %c0_32, %c0_33] : memref<10x10x256xf32, #tpu.memory_space<vmem>>, vector<8x10x256xf32>
    %27 = vector.extract_strided_slice %26 {offsets = [0, 0, 0], sizes = [8, 8, 256], strides = [1, 1, 1]} : vector<8x10x256xf32> to vector<8x8x256xf32>
    %28 = vector.extract_strided_slice %26 {offsets = [0, 1, 0], sizes = [8, 8, 256], strides = [1, 1, 1]} : vector<8x10x256xf32> to vector<8x8x256xf32>
    %29 = vector.extract_strided_slice %26 {offsets = [0, 2, 0], sizes = [8, 8, 256], strides = [1, 1, 1]} : vector<8x10x256xf32> to vector<8x8x256xf32>
    %30 = tpu.concatenate %27, %28, %29 in 2 : vector<8x8x256xf32>, vector<8x8x256xf32>, vector<8x8x256xf32> -> vector<8x8x768xf32>
    %31 = vector.shape_cast %30 : vector<8x8x768xf32> to vector<64x768xf32>
    %32 = arith.truncf %31 : vector<64x768xf32> to vector<64x768xbf16>
    %c1_34 = arith.constant 1 : index
    %c0_35 = arith.constant 0 : index
    %c0_36 = arith.constant 0 : index
    %33 = vector.load %arg4[%c1_34, %c0_35, %c0_36] : memref<3x768x128xbf16, #tpu.memory_space<vmem>>, vector<1x768x128xbf16>
    %34 = vector.shape_cast %33 : vector<1x768x128xbf16> to vector<768x128xbf16>
    %cst_37 = arith.constant dense<0.000000e+00> : vector<64x128xf32>
    %35 = tpu.matmul %32, %34, %cst_37 {dimension_numbers = #tpu.dot_dimension_numbers<[1], [0], [0], [1], [0, 0, 1, 1], [], []>} : vector<64x768xbf16>, vector<768x128xbf16>, vector<64x128xf32> -> vector<64x128xf32>
    %36 = arith.addf %25, %35 : vector<64x128xf32>
    %c2 = arith.constant 2 : index
    %c0_38 = arith.constant 0 : index
    %c0_39 = arith.constant 0 : index
    %37 = vector.load %arg15[%c2, %c0_38, %c0_39] : memref<10x10x256xf32, #tpu.memory_space<vmem>>, vector<8x10x256xf32>
    %38 = vector.extract_strided_slice %37 {offsets = [0, 0, 0], sizes = [8, 8, 256], strides = [1, 1, 1]} : vector<8x10x256xf32> to vector<8x8x256xf32>
    %39 = vector.extract_strided_slice %37 {offsets = [0, 1, 0], sizes = [8, 8, 256], strides = [1, 1, 1]} : vector<8x10x256xf32> to vector<8x8x256xf32>
    %40 = vector.extract_strided_slice %37 {offsets = [0, 2, 0], sizes = [8, 8, 256], strides = [1, 1, 1]} : vector<8x10x256xf32> to vector<8x8x256xf32>
    %41 = tpu.concatenate %38, %39, %40 in 2 : vector<8x8x256xf32>, vector<8x8x256xf32>, vector<8x8x256xf32> -> vector<8x8x768xf32>
    %42 = vector.shape_cast %41 : vector<8x8x768xf32> to vector<64x768xf32>
    %43 = arith.truncf %42 : vector<64x768xf32> to vector<64x768xbf16>
    %c2_40 = arith.constant 2 : index
    %c0_41 = arith.constant 0 : index
    %c0_42 = arith.constant 0 : index
    %44 = vector.load %arg4[%c2_40, %c0_41, %c0_42] : memref<3x768x128xbf16, #tpu.memory_space<vmem>>, vector<1x768x128xbf16>
    %45 = vector.shape_cast %44 : vector<1x768x128xbf16> to vector<768x128xbf16>
    %cst_43 = arith.constant dense<0.000000e+00> : vector<64x128xf32>
    %46 = tpu.matmul %43, %45, %cst_43 {dimension_numbers = #tpu.dot_dimension_numbers<[1], [0], [0], [1], [0, 0, 1, 1], [], []>} : vector<64x768xbf16>, vector<768x128xbf16>, vector<64x128xf32> -> vector<64x128xf32>
    %47 = arith.addf %36, %46 : vector<64x128xf32>
    %c0_44 = arith.constant 0 : index
    %c0_45 = arith.constant 0 : index
    %48 = vector.load %arg5[%c0_44, %c0_45] : memref<1x128xf32, #tpu.memory_space<vmem>>, vector<1x128xf32>
    %49 = vector.broadcast %48 : vector<1x128xf32> to vector<64x128xf32>
    %50 = arith.mulf %47, %49 : vector<64x128xf32>
    %c0_46 = arith.constant 0 : index
    %c0_47 = arith.constant 0 : index
    %51 = vector.load %arg6[%c0_46, %c0_47] : memref<1x128xf32, #tpu.memory_space<vmem>>, vector<1x128xf32>
    %52 = vector.broadcast %51 : vector<1x128xf32> to vector<64x128xf32>
    %53 = arith.addf %50, %52 : vector<64x128xf32>
    %cst_48 = arith.constant 0.000000e+00 : f32
    %54 = vector.broadcast %cst_48 : f32 to vector<64x128xf32>
    %55 = arith.maximumf %53, %54 : vector<64x128xf32>
    %cst_49 = arith.constant 0.000000e+00 : f32
    %56 = vector.broadcast %cst_49 : f32 to vector<64x128xf32>
    %c0_50 = arith.constant 0 : index
    %c0_51 = arith.constant 0 : index
    %c0_52 = arith.constant 0 : index
    %57 = vector.load %arg16[%c0_50, %c0_51, %c0_52] : memref<10x10x128xf32, #tpu.memory_space<vmem>>, vector<8x10x128xf32>
    %58 = vector.extract_strided_slice %57 {offsets = [0, 0, 0], sizes = [8, 8, 128], strides = [1, 1, 1]} : vector<8x10x128xf32> to vector<8x8x128xf32>
    %59 = vector.extract_strided_slice %57 {offsets = [0, 1, 0], sizes = [8, 8, 128], strides = [1, 1, 1]} : vector<8x10x128xf32> to vector<8x8x128xf32>
    %60 = vector.extract_strided_slice %57 {offsets = [0, 2, 0], sizes = [8, 8, 128], strides = [1, 1, 1]} : vector<8x10x128xf32> to vector<8x8x128xf32>
    %61 = tpu.concatenate %58, %59, %60 in 2 : vector<8x8x128xf32>, vector<8x8x128xf32>, vector<8x8x128xf32> -> vector<8x8x384xf32>
    %62 = vector.shape_cast %61 : vector<8x8x384xf32> to vector<64x384xf32>
    %63 = arith.truncf %62 : vector<64x384xf32> to vector<64x384xbf16>
    %c0_53 = arith.constant 0 : index
    %c0_54 = arith.constant 0 : index
    %c0_55 = arith.constant 0 : index
    %64 = vector.load %arg7[%c0_53, %c0_54, %c0_55] : memref<3x384x128xbf16, #tpu.memory_space<vmem>>, vector<1x384x128xbf16>
    %65 = vector.shape_cast %64 : vector<1x384x128xbf16> to vector<384x128xbf16>
    %cst_56 = arith.constant dense<0.000000e+00> : vector<64x128xf32>
    %66 = tpu.matmul %63, %65, %cst_56 {dimension_numbers = #tpu.dot_dimension_numbers<[1], [0], [0], [1], [0, 0, 1, 1], [], []>} : vector<64x384xbf16>, vector<384x128xbf16>, vector<64x128xf32> -> vector<64x128xf32>
    %67 = arith.addf %56, %66 : vector<64x128xf32>
    %c1_57 = arith.constant 1 : index
    %c0_58 = arith.constant 0 : index
    %c0_59 = arith.constant 0 : index
    %68 = vector.load %arg16[%c1_57, %c0_58, %c0_59] : memref<10x10x128xf32, #tpu.memory_space<vmem>>, vector<8x10x128xf32>
    %69 = vector.extract_strided_slice %68 {offsets = [0, 0, 0], sizes = [8, 8, 128], strides = [1, 1, 1]} : vector<8x10x128xf32> to vector<8x8x128xf32>
    %70 = vector.extract_strided_slice %68 {offsets = [0, 1, 0], sizes = [8, 8, 128], strides = [1, 1, 1]} : vector<8x10x128xf32> to vector<8x8x128xf32>
    %71 = vector.extract_strided_slice %68 {offsets = [0, 2, 0], sizes = [8, 8, 128], strides = [1, 1, 1]} : vector<8x10x128xf32> to vector<8x8x128xf32>
    %72 = tpu.concatenate %69, %70, %71 in 2 : vector<8x8x128xf32>, vector<8x8x128xf32>, vector<8x8x128xf32> -> vector<8x8x384xf32>
    %73 = vector.shape_cast %72 : vector<8x8x384xf32> to vector<64x384xf32>
    %74 = arith.truncf %73 : vector<64x384xf32> to vector<64x384xbf16>
    %c1_60 = arith.constant 1 : index
    %c0_61 = arith.constant 0 : index
    %c0_62 = arith.constant 0 : index
    %75 = vector.load %arg7[%c1_60, %c0_61, %c0_62] : memref<3x384x128xbf16, #tpu.memory_space<vmem>>, vector<1x384x128xbf16>
    %76 = vector.shape_cast %75 : vector<1x384x128xbf16> to vector<384x128xbf16>
    %cst_63 = arith.constant dense<0.000000e+00> : vector<64x128xf32>
    %77 = tpu.matmul %74, %76, %cst_63 {dimension_numbers = #tpu.dot_dimension_numbers<[1], [0], [0], [1], [0, 0, 1, 1], [], []>} : vector<64x384xbf16>, vector<384x128xbf16>, vector<64x128xf32> -> vector<64x128xf32>
    %78 = arith.addf %67, %77 : vector<64x128xf32>
    %c2_64 = arith.constant 2 : index
    %c0_65 = arith.constant 0 : index
    %c0_66 = arith.constant 0 : index
    %79 = vector.load %arg16[%c2_64, %c0_65, %c0_66] : memref<10x10x128xf32, #tpu.memory_space<vmem>>, vector<8x10x128xf32>
    %80 = vector.extract_strided_slice %79 {offsets = [0, 0, 0], sizes = [8, 8, 128], strides = [1, 1, 1]} : vector<8x10x128xf32> to vector<8x8x128xf32>
    %81 = vector.extract_strided_slice %79 {offsets = [0, 1, 0], sizes = [8, 8, 128], strides = [1, 1, 1]} : vector<8x10x128xf32> to vector<8x8x128xf32>
    %82 = vector.extract_strided_slice %79 {offsets = [0, 2, 0], sizes = [8, 8, 128], strides = [1, 1, 1]} : vector<8x10x128xf32> to vector<8x8x128xf32>
    %83 = tpu.concatenate %80, %81, %82 in 2 : vector<8x8x128xf32>, vector<8x8x128xf32>, vector<8x8x128xf32> -> vector<8x8x384xf32>
    %84 = vector.shape_cast %83 : vector<8x8x384xf32> to vector<64x384xf32>
    %85 = arith.truncf %84 : vector<64x384xf32> to vector<64x384xbf16>
    %c2_67 = arith.constant 2 : index
    %c0_68 = arith.constant 0 : index
    %c0_69 = arith.constant 0 : index
    %86 = vector.load %arg7[%c2_67, %c0_68, %c0_69] : memref<3x384x128xbf16, #tpu.memory_space<vmem>>, vector<1x384x128xbf16>
    %87 = vector.shape_cast %86 : vector<1x384x128xbf16> to vector<384x128xbf16>
    %cst_70 = arith.constant dense<0.000000e+00> : vector<64x128xf32>
    %88 = tpu.matmul %85, %87, %cst_70 {dimension_numbers = #tpu.dot_dimension_numbers<[1], [0], [0], [1], [0, 0, 1, 1], [], []>} : vector<64x384xbf16>, vector<384x128xbf16>, vector<64x128xf32> -> vector<64x128xf32>
    %89 = arith.addf %78, %88 : vector<64x128xf32>
    %c0_71 = arith.constant 0 : index
    %c0_72 = arith.constant 0 : index
    %90 = vector.load %arg8[%c0_71, %c0_72] : memref<1x128xf32, #tpu.memory_space<vmem>>, vector<1x128xf32>
    %91 = vector.broadcast %90 : vector<1x128xf32> to vector<64x128xf32>
    %92 = arith.mulf %89, %91 : vector<64x128xf32>
    %c0_73 = arith.constant 0 : index
    %c0_74 = arith.constant 0 : index
    %93 = vector.load %arg9[%c0_73, %c0_74] : memref<1x128xf32, #tpu.memory_space<vmem>>, vector<1x128xf32>
    %94 = vector.broadcast %93 : vector<1x128xf32> to vector<64x128xf32>
    %95 = arith.addf %92, %94 : vector<64x128xf32>
    %cst_75 = arith.constant 0.000000e+00 : f32
    %96 = vector.broadcast %cst_75 : f32 to vector<64x128xf32>
    %97 = arith.maximumf %95, %96 : vector<64x128xf32>
    %98 = arith.addf %55, %97 : vector<64x128xf32>
    %99 = vector.shape_cast %98 : vector<64x128xf32> to vector<8x8x128xf32>
    %c1_76 = arith.constant 1 : index
    %c1_77 = arith.constant 1 : index
    %c0_78 = arith.constant 0 : index
    %100 = vector.load %arg17[%c1_76, %c1_77, %c0_78] : memref<10x10x128xf32, #tpu.memory_space<vmem>>, vector<8x8x128xf32>
    tpu.vector_store %arg17[%c1_76, %c1_77, %c0_78], %99 {strides = array<i32>} : memref<10x10x128xf32, #tpu.memory_space<vmem>>, vector<8x8x128xf32>,
    %cst_79 = arith.constant 0.000000e+00 : f32
    %101 = vector.broadcast %cst_79 : f32 to vector<64x128xf32>
    %c0_80 = arith.constant 0 : index
    %c0_81 = arith.constant 0 : index
    %c0_82 = arith.constant 0 : index
    %102 = vector.load %arg17[%c0_80, %c0_81, %c0_82] : memref<10x10x128xf32, #tpu.memory_space<vmem>>, vector<8x10x128xf32>
    %103 = vector.extract_strided_slice %102 {offsets = [0, 0, 0], sizes = [8, 8, 128], strides = [1, 1, 1]} : vector<8x10x128xf32> to vector<8x8x128xf32>
    %104 = vector.extract_strided_slice %102 {offsets = [0, 1, 0], sizes = [8, 8, 128], strides = [1, 1, 1]} : vector<8x10x128xf32> to vector<8x8x128xf32>
    %105 = vector.extract_strided_slice %102 {offsets = [0, 2, 0], sizes = [8, 8, 128], strides = [1, 1, 1]} : vector<8x10x128xf32> to vector<8x8x128xf32>
    %106 = tpu.concatenate %103, %104, %105 in 2 : vector<8x8x128xf32>, vector<8x8x128xf32>, vector<8x8x128xf32> -> vector<8x8x384xf32>
    %107 = vector.shape_cast %106 : vector<8x8x384xf32> to vector<64x384xf32>
    %108 = arith.truncf %107 : vector<64x384xf32> to vector<64x384xbf16>
    %c0_83 = arith.constant 0 : index
    %c0_84 = arith.constant 0 : index
    %c0_85 = arith.constant 0 : index
    %109 = vector.load %arg10[%c0_83, %c0_84, %c0_85] : memref<3x384x128xbf16, #tpu.memory_space<vmem>>, vector<1x384x128xbf16>
    %110 = vector.shape_cast %109 : vector<1x384x128xbf16> to vector<384x128xbf16>
    %cst_86 = arith.constant dense<0.000000e+00> : vector<64x128xf32>
    %111 = tpu.matmul %108, %110, %cst_86 {dimension_numbers = #tpu.dot_dimension_numbers<[1], [0], [0], [1], [0, 0, 1, 1], [], []>} : vector<64x384xbf16>, vector<384x128xbf16>, vector<64x128xf32> -> vector<64x128xf32>
    %112 = arith.addf %101, %111 : vector<64x128xf32>
    %c1_87 = arith.constant 1 : index
    %c0_88 = arith.constant 0 : index
    %c0_89 = arith.constant 0 : index
    %113 = vector.load %arg17[%c1_87, %c0_88, %c0_89] : memref<10x10x128xf32, #tpu.memory_space<vmem>>, vector<8x10x128xf32>
    %114 = vector.extract_strided_slice %113 {offsets = [0, 0, 0], sizes = [8, 8, 128], strides = [1, 1, 1]} : vector<8x10x128xf32> to vector<8x8x128xf32>
    %115 = vector.extract_strided_slice %113 {offsets = [0, 1, 0], sizes = [8, 8, 128], strides = [1, 1, 1]} : vector<8x10x128xf32> to vector<8x8x128xf32>
    %116 = vector.extract_strided_slice %113 {offsets = [0, 2, 0], sizes = [8, 8, 128], strides = [1, 1, 1]} : vector<8x10x128xf32> to vector<8x8x128xf32>
    %117 = tpu.concatenate %114, %115, %116 in 2 : vector<8x8x128xf32>, vector<8x8x128xf32>, vector<8x8x128xf32> -> vector<8x8x384xf32>
    %118 = vector.shape_cast %117 : vector<8x8x384xf32> to vector<64x384xf32>
    %119 = arith.truncf %118 : vector<64x384xf32> to vector<64x384xbf16>
    %c1_90 = arith.constant 1 : index
    %c0_91 = arith.constant 0 : index
    %c0_92 = arith.constant 0 : index
    %120 = vector.load %arg10[%c1_90, %c0_91, %c0_92] : memref<3x384x128xbf16, #tpu.memory_space<vmem>>, vector<1x384x128xbf16>
    %121 = vector.shape_cast %120 : vector<1x384x128xbf16> to vector<384x128xbf16>
    %cst_93 = arith.constant dense<0.000000e+00> : vector<64x128xf32>
    %122 = tpu.matmul %119, %121, %cst_93 {dimension_numbers = #tpu.dot_dimension_numbers<[1], [0], [0], [1], [0, 0, 1, 1], [], []>} : vector<64x384xbf16>, vector<384x128xbf16>, vector<64x128xf32> -> vector<64x128xf32>
    %123 = arith.addf %112, %122 : vector<64x128xf32>
    %c2_94 = arith.constant 2 : index
    %c0_95 = arith.constant 0 : index
    %c0_96 = arith.constant 0 : index
    %124 = vector.load %arg17[%c2_94, %c0_95, %c0_96] : memref<10x10x128xf32, #tpu.memory_space<vmem>>, vector<8x10x128xf32>
    %125 = vector.extract_strided_slice %124 {offsets = [0, 0, 0], sizes = [8, 8, 128], strides = [1, 1, 1]} : vector<8x10x128xf32> to vector<8x8x128xf32>
    %126 = vector.extract_strided_slice %124 {offsets = [0, 1, 0], sizes = [8, 8, 128], strides = [1, 1, 1]} : vector<8x10x128xf32> to vector<8x8x128xf32>
    %127 = vector.extract_strided_slice %124 {offsets = [0, 2, 0], sizes = [8, 8, 128], strides = [1, 1, 1]} : vector<8x10x128xf32> to vector<8x8x128xf32>
    %128 = tpu.concatenate %125, %126, %127 in 2 : vector<8x8x128xf32>, vector<8x8x128xf32>, vector<8x8x128xf32> -> vector<8x8x384xf32>
    %129 = vector.shape_cast %128 : vector<8x8x384xf32> to vector<64x384xf32>
    %130 = arith.truncf %129 : vector<64x384xf32> to vector<64x384xbf16>
    %c2_97 = arith.constant 2 : index
    %c0_98 = arith.constant 0 : index
    %c0_99 = arith.constant 0 : index
    %131 = vector.load %arg10[%c2_97, %c0_98, %c0_99] : memref<3x384x128xbf16, #tpu.memory_space<vmem>>, vector<1x384x128xbf16>
    %132 = vector.shape_cast %131 : vector<1x384x128xbf16> to vector<384x128xbf16>
    %cst_100 = arith.constant dense<0.000000e+00> : vector<64x128xf32>
    %133 = tpu.matmul %130, %132, %cst_100 {dimension_numbers = #tpu.dot_dimension_numbers<[1], [0], [0], [1], [0, 0, 1, 1], [], []>} : vector<64x384xbf16>, vector<384x128xbf16>, vector<64x128xf32> -> vector<64x128xf32>
    %134 = arith.addf %123, %133 : vector<64x128xf32>
    %c0_101 = arith.constant 0 : index
    %c0_102 = arith.constant 0 : index
    %135 = vector.load %arg11[%c0_101, %c0_102] : memref<1x128xf32, #tpu.memory_space<vmem>>, vector<1x128xf32>
    %136 = vector.broadcast %135 : vector<1x128xf32> to vector<64x128xf32>
    %137 = arith.mulf %134, %136 : vector<64x128xf32>
    %c0_103 = arith.constant 0 : index
    %c0_104 = arith.constant 0 : index
    %138 = vector.load %arg12[%c0_103, %c0_104] : memref<1x128xf32, #tpu.memory_space<vmem>>, vector<1x128xf32>
    %139 = vector.broadcast %138 : vector<1x128xf32> to vector<64x128xf32>
    %140 = arith.addf %137, %139 : vector<64x128xf32>
    %cst_105 = arith.constant 0.000000e+00 : f32
    %141 = vector.broadcast %cst_105 : f32 to vector<64x128xf32>
    %142 = arith.maximumf %140, %141 : vector<64x128xf32>
    %c0_106 = arith.constant 0 : index
    %c0_107 = arith.constant 0 : index
    %143 = vector.load %arg13[%c0_106, %c0_107] : memref<256x64xf32, #tpu.memory_space<vmem>>, vector<256x64xf32>
    %cst_108 = arith.constant dense<0.000000e+00> : vector<256x128xf32>
    %144 = tpu.matmul %143, %142, %cst_108 {dimension_numbers = #tpu.dot_dimension_numbers<[1], [0], [0], [1], [0, 0, 1, 1], [], []>} : vector<256x64xf32>, vector<64x128xf32>, vector<256x128xf32> -> vector<256x128xf32>
    %145 = vector.shape_cast %144 : vector<256x128xf32> to vector<16x16x128xf32>
    %c0_109 = arith.constant 0 : index
    %c0_110 = arith.constant 0 : index
    %c0_111 = arith.constant 0 : index
    %c0_112 = arith.constant 0 : index
    %146 = vector.load %arg3[%c0_109, %c0_110, %c0_111, %c0_112] : memref<1x16x16x128xf32, #tpu.memory_space<vmem>>, vector<1x16x16x128xf32>
    %147 = vector.shape_cast %146 : vector<1x16x16x128xf32> to vector<16x16x128xf32>
    %148 = arith.addf %145, %147 : vector<16x16x128xf32>
    %c0_113 = arith.constant 0 : index
    %c0_114 = arith.constant 0 : index
    %c0_115 = arith.constant 0 : index
    %c0_116 = arith.constant 0 : index
    %149 = vector.load %arg14[%c0_113, %c0_114, %c0_115, %c0_116] : memref<1x16x16x128xf32, #tpu.memory_space<vmem>>, vector<1x16x16x128xf32>
    %150 = vector.shape_cast %149 : vector<1x16x16x128xf32> to vector<16x16x128xf32>
    %151 = vector.shape_cast %148 : vector<16x16x128xf32> to vector<1x16x16x128xf32>
    tpu.vector_store %arg14[%c0_113, %c0_114, %c0_115, %c0_116], %151 {strides = array<i32>} : memref<1x16x16x128xf32, #tpu.memory_space<vmem>>, vector<1x16x16x128xf32>,
    return
  }
  func.func @transform_0(%arg0: i32) -> (i32, i32, i32, i32) {
    %c0_i32 = arith.constant 0 : i32
    %c0_i32_0 = arith.constant 0 : i32
    %c0_i32_1 = arith.constant 0 : i32
    %c0_i32_2 = arith.constant 0 : i32
    return %arg0, %c0_i32, %c0_i32_0, %c0_i32_1 : i32, i32, i32, i32
  }
  func.func @transform_1(%arg0: i32) -> (i32, i32, i32, i32) {
    %c0_i32 = arith.constant 0 : i32
    %c0_i32_0 = arith.constant 0 : i32
    %c0_i32_1 = arith.constant 0 : i32
    %c0_i32_2 = arith.constant 0 : i32
    return %arg0, %c0_i32, %c0_i32_0, %c0_i32_1 : i32, i32, i32, i32
  }
  func.func @transform_2(%arg0: i32) -> (i32, i32, i32, i32) {
    %c0_i32 = arith.constant 0 : i32
    %c0_i32_0 = arith.constant 0 : i32
    %c0_i32_1 = arith.constant 0 : i32
    %c0_i32_2 = arith.constant 0 : i32
    return %arg0, %c0_i32, %c0_i32_0, %c0_i32_1 : i32, i32, i32, i32
  }
  func.func @transform_3(%arg0: i32) -> (i32, i32, i32) {
    %c0_i32 = arith.constant 0 : i32
    %c0_i32_0 = arith.constant 0 : i32
    %c0_i32_1 = arith.constant 0 : i32
    %c0_i32_2 = arith.constant 0 : i32
    return %c0_i32, %c0_i32_0, %c0_i32_1 : i32, i32, i32
  }
  func.func @transform_4(%arg0: i32) -> (i32, i32) {
    %c0_i32 = arith.constant 0 : i32
    %c0_i32_0 = arith.constant 0 : i32
    %c0_i32_1 = arith.constant 0 : i32
    return %c0_i32, %c0_i32_0 : i32, i32
  }
  func.func @transform_5(%arg0: i32) -> (i32, i32) {
    %c0_i32 = arith.constant 0 : i32
    %c0_i32_0 = arith.constant 0 : i32
    %c0_i32_1 = arith.constant 0 : i32
    return %c0_i32, %c0_i32_0 : i32, i32
  }
  func.func @transform_6(%arg0: i32) -> (i32, i32, i32) {
    %c0_i32 = arith.constant 0 : i32
    %c0_i32_0 = arith.constant 0 : i32
    %c0_i32_1 = arith.constant 0 : i32
    %c0_i32_2 = arith.constant 0 : i32
    return %c0_i32, %c0_i32_0, %c0_i32_1 : i32, i32, i32
  }
  func.func @transform_7(%arg0: i32) -> (i32, i32) {
    %c0_i32 = arith.constant 0 : i32
    %c0_i32_0 = arith.constant 0 : i32
    %c0_i32_1 = arith.constant 0 : i32
    return %c0_i32, %c0_i32_0 : i32, i32
  }
  func.func @transform_8(%arg0: i32) -> (i32, i32) {
    %c0_i32 = arith.constant 0 : i32
    %c0_i32_0 = arith.constant 0 : i32
    %c0_i32_1 = arith.constant 0 : i32
    return %c0_i32, %c0_i32_0 : i32, i32
  }
  func.func @transform_9(%arg0: i32) -> (i32, i32, i32) {
    %c0_i32 = arith.constant 0 : i32
    %c0_i32_0 = arith.constant 0 : i32
    %c0_i32_1 = arith.constant 0 : i32
    %c0_i32_2 = arith.constant 0 : i32
    return %c0_i32, %c0_i32_0, %c0_i32_1 : i32, i32, i32
  }
  func.func @transform_10(%arg0: i32) -> (i32, i32) {
    %c0_i32 = arith.constant 0 : i32
    %c0_i32_0 = arith.constant 0 : i32
    %c0_i32_1 = arith.constant 0 : i32
    return %c0_i32, %c0_i32_0 : i32, i32
  }
  func.func @transform_11(%arg0: i32) -> (i32, i32) {
    %c0_i32 = arith.constant 0 : i32
    %c0_i32_0 = arith.constant 0 : i32
    %c0_i32_1 = arith.constant 0 : i32
    return %c0_i32, %c0_i32_0 : i32, i32
  }
  func.func @transform_12(%arg0: i32) -> (i32, i32) {
    %c0_i32 = arith.constant 0 : i32
    %c0_i32_0 = arith.constant 0 : i32
    %c0_i32_1 = arith.constant 0 : i32
    return %c0_i32, %c0_i32_0 : i32, i32
  }
  func.func @transform_13(%arg0: i32) -> (i32, i32, i32, i32) {
    %c0_i32 = arith.constant 0 : i32
    %c0_i32_0 = arith.constant 0 : i32
    %c0_i32_1 = arith.constant 0 : i32
    %c0_i32_2 = arith.constant 0 : i32
    return %arg0, %c0_i32, %c0_i32_0, %c0_i32_1 : i32, i32, i32, i32
  }
}

</mosaic_0001>

<llo_original>
// kernel: dbga_forward.1
$region0: #{dbga_forward.1}
  #allocation0 [shape = 'u32[]', space=smem, size = 0x4, offset = 0x4, fixed_abs, tag = 'smem constant byte address 0x4 - core index']
  #allocation1 [shape = 'u32[72,128]{1,0:T(1,128)}', space=vmem, size = 0x9000, scoped, tag = 'internal scratch']
  #allocation2 [shape = 'f32[10,10,256]{2,1,0:T(8,128)}', space=vmem, size = 0x28000, scoped, tag = 'scratch operand']
  #allocation3 [shape = 'f32[10,10,128]{2,1,0:T(8,128)}', space=vmem, size = 0x14000, scoped, tag = 'scratch operand']
  #allocation4 [shape = 'f32[10,10,128]{2,1,0:T(8,128)}', space=vmem, size = 0x14000, scoped, tag = 'scratch operand']
  %s0 = inlined_call_operand.vmem [shape: bf16[2,8,8,256], index: 0, kind: input, shape index: {}]
  %s1 = inlined_call_operand.vmem [shape: bf16[2,8,8,128], index: 1, kind: input, shape index: {}]
  %s2 = inlined_call_operand.vmem [shape: f32[2,16,16,128], index: 2, kind: input, shape index: {}]
  %s3 = inlined_call_operand.vmem [shape: bf16[3,768,128], index: 3, kind: input, shape index: {}]
  %s4 = inlined_call_operand.vmem [shape: f32[1,128], index: 4, kind: input, shape index: {}]
  %s5 = inlined_call_operand.vmem [shape: f32[1,128], index: 5, kind: input, shape index: {}]
  %s6 = inlined_call_operand.vmem [shape: bf16[3,384,128], index: 6, kind: input, shape index: {}]
  %s7 = inlined_call_operand.vmem [shape: f32[1,128], index: 7, kind: input, shape index: {}]
  %s8 = inlined_call_operand.vmem [shape: f32[1,128], index: 8, kind: input, shape index: {}]
  %s9 = inlined_call_operand.vmem [shape: bf16[3,384,128], index: 9, kind: input, shape index: {}]
  %s10 = inlined_call_operand.vmem [shape: f32[1,128], index: 10, kind: input, shape index: {}]
  %s11 = inlined_call_operand.vmem [shape: f32[1,128], index: 11, kind: input, shape index: {}]
  %s12 = inlined_call_operand.vmem [shape: f32[256,64], index: 12, kind: input, shape index: {}]
  %s13 = inlined_call_operand.hbm [shape: f32[2,16,16,128], index: 13, kind: output, shape index: {}]
  %s14 = sld [smem:[#allocation0]]
  $region85: #{dbga_forward.1} parent=0
    _
  %s16 = ssub.s32 1, %s14
  %s17 = scalar_select 0, %s16, %s14
  $region1: #{dbga_forward.1} parent=0
    #allocation5 [shape = 'u8[262144]{0}', space=vmem, size = 0x40000, scoped, tag = 'output window, operand 0']
    #allocation6 [shape = 's32[2]{0}', space=sflag, size = 0x8, scoped, tag = 'scoped memory for dbga_forward.1']
    %18 = vsyncpa [#allocation6], 0
    %s19 = scalar_lea.sflag [#allocation6], 1
    %20 = vsyncpa %s19, 0
    loop: start=0, step=1, limit=4
    $region2: #{dbga_forward.1} parent=1 // loop_pre_header
      _
    $region3: #{dbga_forward.1} parent=1 // loop_header
      %s22 = sphi 0, %s26
      %p23 = scmp.ge.s32.totalorder %s22, 4
      %s32 = sphi 0, %s34
      %s35 = sphi 0, %s32
      %s36 = sphi 0, %s35
      %s52 = sphi 0, %s36
      %s58 = sphi 0, %s60
      %s61 = sphi 0, %s58
      %s62 = sphi 0, %s61
      %s78 = sphi 0, %s62
      %s84 = sphi 0, %s86
      %s87 = sphi 0, %s84
      %s88 = sphi 0, %s87
      %s104 = sphi 0, %s88
      %s108 = sphi 0, %s108
      %s110 = sphi 0, %s108
      %s111 = sphi 0, %s110
      %s125 = sphi 0, %s111
      %s129 = sphi 0, %s129
      %s131 = sphi 0, %s129
      %s132 = sphi 0, %s131
      %s146 = sphi 0, %s132
      %s150 = sphi 0, %s150
      %s152 = sphi 0, %s150
      %s153 = sphi 0, %s152
      %s167 = sphi 0, %s153
      %s171 = sphi 0, %s171
      %s173 = sphi 0, %s171
      %s174 = sphi 0, %s173
      %s188 = sphi 0, %s174
      %s192 = sphi 0, %s192
      %s194 = sphi 0, %s192
      %s195 = sphi 0, %s194
      %s209 = sphi 0, %s195
      %s213 = sphi 0, %s213
      %s215 = sphi 0, %s213
      %s216 = sphi 0, %s215
      %s230 = sphi 0, %s216
      %s234 = sphi 0, %s234
      %s236 = sphi 0, %s234
      %s237 = sphi 0, %s236
      %s251 = sphi 0, %s237
      %s255 = sphi 0, %s255
      %s257 = sphi 0, %s255
      %s258 = sphi 0, %s257
      %s272 = sphi 0, %s258
      %s276 = sphi 0, %s276
      %s278 = sphi 0, %s276
      %s279 = sphi 0, %s278
      %s293 = sphi 0, %s279
      %s297 = sphi 0, %s297
      %s299 = sphi 0, %s297
      %s300 = sphi 0, %s299
      %s314 = sphi 0, %s300
      %s320 = sphi 0, %s322
      %s323 = sphi 0, %s320
      %s324 = sphi 0, %s323
      %s340 = sphi 0, %s324
    $region4: #{dbga_forward.1} parent=1 // loop_header_branch
      %25 = sbr.rel (%p23) target = $region8
    $region5: #{dbga_forward.1} parent=1 // loop_body
      %s27 = ssub.s32 %s22, 1
      %s28 = ssub.s32 %s22, 2
      %s29 = sadd.s32 %s22, 1
      %s30 = ssub.s32 %s22, %s29
      %p31 = scmp.eq.s32.totalorder %s30, 0
      %s33 = sadd.s32 %s32, 1
      %s34 = scalar_select %p31, %s32, %s33
      %p37 = pneg %p31
      %p38 = scmp.eq.s32.totalorder %s22, 1
      %p39 = por %p37, %p38
      %p40 = scmp.ne.s32.totalorder %s32, %s35
      %p41 = scmp.eq.s32.totalorder %s22, 0
      %p42 = por %p40, %p41
      %p43 = scmp.ne.s32.totalorder %s32, %s35
      %p44 = scmp.eq.s32.totalorder %s27, 1
      %p45 = por %p43, %p44
      %p46 = scmp.ne.s32.totalorder %s35, %s36
      %p47 = scmp.eq.s32.totalorder %s27, 0
      %p48 = por %p46, %p47
      %p49 = scmp.ne.s32.totalorder %s35, %s36
      %p50 = scmp.eq.s32.totalorder %s28, 1
      %p51 = por %p49, %p50
      %p53 = scmp.ne.s32.totalorder %s36, %s52
      %p54 = scmp.eq.s32.totalorder %s28, 0
      %p55 = por %p53, %p54
      %s56 = ssub.s32 %s22, %s29
      %p57 = scmp.eq.s32.totalorder %s56, 0
      %s59 = sadd.s32 %s58, 1
      %s60 = scalar_select %p57, %s58, %s59
      %p63 = pneg %p57
      %p64 = scmp.eq.s32.totalorder %s22, 1
      %p65 = por %p63, %p64
      %p66 = scmp.ne.s32.totalorder %s58, %s61
      %p67 = scmp.eq.s32.totalorder %s22, 0
      %p68 = por %p66, %p67
      %p69 = scmp.ne.s32.totalorder %s58, %s61
      %p70 = scmp.eq.s32.totalorder %s27, 1
      %p71 = por %p69, %p70
      %p72 = scmp.ne.s32.totalorder %s61, %s62
      %p73 = scmp.eq.s32.totalorder %s27, 0
      %p74 = por %p72, %p73
      %p75 = scmp.ne.s32.totalorder %s61, %s62
      %p76 = scmp.eq.s32.totalorder %s28, 1
      %p77 = por %p75, %p76
      %p79 = scmp.ne.s32.totalorder %s62, %s78
      %p80 = scmp.eq.s32.totalorder %s28, 0
      %p81 = por %p79, %p80
      %s82 = ssub.s32 %s22, %s29
      %p83 = scmp.eq.s32.totalorder %s82, 0
      %s85 = sadd.s32 %s84, 1
      %s86 = scalar_select %p83, %s84, %s85
      %p89 = pneg %p83
      %p90 = scmp.eq.s32.totalorder %s22, 1
      %p91 = por %p89, %p90
      %p92 = scmp.ne.s32.totalorder %s84, %s87
      %p93 = scmp.eq.s32.totalorder %s22, 0
      %p94 = por %p92, %p93
      %p95 = scmp.ne.s32.totalorder %s84, %s87
      %p96 = scmp.eq.s32.totalorder %s27, 1
      %p97 = por %p95, %p96
      %p98 = scmp.ne.s32.totalorder %s87, %s88
      %p99 = scmp.eq.s32.totalorder %s27, 0
      %p100 = por %p98, %p99
      %p101 = scmp.ne.s32.totalorder %s87, %s88
      %p102 = scmp.eq.s32.totalorder %s28, 1
      %p103 = por %p101, %p102
      %p105 = scmp.ne.s32.totalorder %s88, %s104
      %p106 = scmp.eq.s32.totalorder %s28, 0
      %p107 = por %p105, %p106
      %s109 = sadd.s32 %s108, 1
      %p112 = scmp.eq.s32.totalorder %s22, 1
      %p113 = scmp.ne.s32.totalorder %s108, %s110
      %p114 = scmp.eq.s32.totalorder %s22, 0
      %p115 = por %p113, %p114
      %p116 = scmp.ne.s32.totalorder %s108, %s110
      %p117 = scmp.eq.s32.totalorder %s27, 1
      %p118 = por %p116, %p117
      %p119 = scmp.ne.s32.totalorder %s110, %s111
      %p120 = scmp.eq.s32.totalorder %s27, 0
      %p121 = por %p119, %p120
      %p122 = scmp.ne.s32.totalorder %s110, %s111
      %p123 = scmp.eq.s32.totalorder %s28, 1
      %p124 = por %p122, %p123
      %p126 = scmp.ne.s32.totalorder %s111, %s125
      %p127 = scmp.eq.s32.totalorder %s28, 0
      %p128 = por %p126, %p127
      %s130 = sadd.s32 %s129, 1
      %p133 = scmp.eq.s32.totalorder %s22, 1
      %p134 = scmp.ne.s32.totalorder %s129, %s131
      %p135 = scmp.eq.s32.totalorder %s22, 0
      %p136 = por %p134, %p135
      %p137 = scmp.ne.s32.totalorder %s129, %s131
      %p138 = scmp.eq.s32.totalorder %s27, 1
      %p139 = por %p137, %p138
      %p140 = scmp.ne.s32.totalorder %s131, %s132
      %p141 = scmp.eq.s32.totalorder %s27, 0
      %p142 = por %p140, %p141
      %p143 = scmp.ne.s32.totalorder %s131, %s132
      %p144 = scmp.eq.s32.totalorder %s28, 1
      %p145 = por %p143, %p144
      %p147 = scmp.ne.s32.totalorder %s132, %s146
      %p148 = scmp.eq.s32.totalorder %s28, 0
      %p149 = por %p147, %p148
      %s151 = sadd.s32 %s150, 1
      %p154 = scmp.eq.s32.totalorder %s22, 1
      %p155 = scmp.ne.s32.totalorder %s150, %s152
      %p156 = scmp.eq.s32.totalorder %s22, 0
      %p157 = por %p155, %p156
      %p158 = scmp.ne.s32.totalorder %s150, %s152
      %p159 = scmp.eq.s32.totalorder %s27, 1
      %p160 = por %p158, %p159
      %p161 = scmp.ne.s32.totalorder %s152, %s153
      %p162 = scmp.eq.s32.totalorder %s27, 0
      %p163 = por %p161, %p162
      %p164 = scmp.ne.s32.totalorder %s152, %s153
      %p165 = scmp.eq.s32.totalorder %s28, 1
      %p166 = por %p164, %p165
      %p168 = scmp.ne.s32.totalorder %s153, %s167
      %p169 = scmp.eq.s32.totalorder %s28, 0
      %p170 = por %p168, %p169
      %s172 = sadd.s32 %s171, 1
      %p175 = scmp.eq.s32.totalorder %s22, 1
      %p176 = scmp.ne.s32.totalorder %s171, %s173
      %p177 = scmp.eq.s32.totalorder %s22, 0
      %p178 = por %p176, %p177
      %p179 = scmp.ne.s32.totalorder %s171, %s173
      %p180 = scmp.eq.s32.totalorder %s27, 1
      %p181 = por %p179, %p180
      %p182 = scmp.ne.s32.totalorder %s173, %s174
      %p183 = scmp.eq.s32.totalorder %s27, 0
      %p184 = por %p182, %p183
      %p185 = scmp.ne.s32.totalorder %s173, %s174
      %p186 = scmp.eq.s32.totalorder %s28, 1
      %p187 = por %p185, %p186
      %p189 = scmp.ne.s32.totalorder %s174, %s188
      %p190 = scmp.eq.s32.totalorder %s28, 0
      %p191 = por %p189, %p190
      %s193 = sadd.s32 %s192, 1
      %p196 = scmp.eq.s32.totalorder %s22, 1
      %p197 = scmp.ne.s32.totalorder %s192, %s194
      %p198 = scmp.eq.s32.totalorder %s22, 0
      %p199 = por %p197, %p198
      %p200 = scmp.ne.s32.totalorder %s192, %s194
      %p201 = scmp.eq.s32.totalorder %s27, 1
      %p202 = por %p200, %p201
      %p203 = scmp.ne.s32.totalorder %s194, %s195
      %p204 = scmp.eq.s32.totalorder %s27, 0
      %p205 = por %p203, %p204
      %p206 = scmp.ne.s32.totalorder %s194, %s195
      %p207 = scmp.eq.s32.totalorder %s28, 1
      %p208 = por %p206, %p207
      %p210 = scmp.ne.s32.totalorder %s195, %s209
      %p211 = scmp.eq.s32.totalorder %s28, 0
      %p212 = por %p210, %p211
      %s214 = sadd.s32 %s213, 1
      %p217 = scmp.eq.s32.totalorder %s22, 1
      %p218 = scmp.ne.s32.totalorder %s213, %s215
      %p219 = scmp.eq.s32.totalorder %s22, 0
      %p220 = por %p218, %p219
      %p221 = scmp.ne.s32.totalorder %s213, %s215
      %p222 = scmp.eq.s32.totalorder %s27, 1
      %p223 = por %p221, %p222
      %p224 = scmp.ne.s32.totalorder %s215, %s216
      %p225 = scmp.eq.s32.totalorder %s27, 0
      %p226 = por %p224, %p225
      %p227 = scmp.ne.s32.totalorder %s215, %s216
      %p228 = scmp.eq.s32.totalorder %s28, 1
      %p229 = por %p227, %p228
      %p231 = scmp.ne.s32.totalorder %s216, %s230
      %p232 = scmp.eq.s32.totalorder %s28, 0
      %p233 = por %p231, %p232
      %s235 = sadd.s32 %s234, 1
      %p238 = scmp.eq.s32.totalorder %s22, 1
      %p239 = scmp.ne.s32.totalorder %s234, %s236
      %p240 = scmp.eq.s32.totalorder %s22, 0
      %p241 = por %p239, %p240
      %p242 = scmp.ne.s32.totalorder %s234, %s236
      %p243 = scmp.eq.s32.totalorder %s27, 1
      %p244 = por %p242, %p243
      %p245 = scmp.ne.s32.totalorder %s236, %s237
      %p246 = scmp.eq.s32.totalorder %s27, 0
      %p247 = por %p245, %p246
      %p248 = scmp.ne.s32.totalorder %s236, %s237
      %p249 = scmp.eq.s32.totalorder %s28, 1
      %p250 = por %p248, %p249
      %p252 = scmp.ne.s32.totalorder %s237, %s251
      %p253 = scmp.eq.s32.totalorder %s28, 0
      %p254 = por %p252, %p253
      %s256 = sadd.s32 %s255, 1
      %p259 = scmp.eq.s32.totalorder %s22, 1
      %p260 = scmp.ne.s32.totalorder %s255, %s257
      %p261 = scmp.eq.s32.totalorder %s22, 0
      %p262 = por %p260, %p261
      %p263 = scmp.ne.s32.totalorder %s255, %s257
      %p264 = scmp.eq.s32.totalorder %s27, 1
      %p265 = por %p263, %p264
      %p266 = scmp.ne.s32.totalorder %s257, %s258
      %p267 = scmp.eq.s32.totalorder %s27, 0
      %p268 = por %p266, %p267
      %p269 = scmp.ne.s32.totalorder %s257, %s258
      %p270 = scmp.eq.s32.totalorder %s28, 1
      %p271 = por %p269, %p270
      %p273 = scmp.ne.s32.totalorder %s258, %s272
      %p274 = scmp.eq.s32.totalorder %s28, 0
      %p275 = por %p273, %p274
      %s277 = sadd.s32 %s276, 1
      %p280 = scmp.eq.s32.totalorder %s22, 1
      %p281 = scmp.ne.s32.totalorder %s276, %s278
      %p282 = scmp.eq.s32.totalorder %s22, 0
      %p283 = por %p281, %p282
      %p284 = scmp.ne.s32.totalorder %s276, %s278
      %p285 = scmp.eq.s32.totalorder %s27, 1
      %p286 = por %p284, %p285
      %p287 = scmp.ne.s32.totalorder %s278, %s279
      %p288 = scmp.eq.s32.totalorder %s27, 0
      %p289 = por %p287, %p288
      %p290 = scmp.ne.s32.totalorder %s278, %s279
      %p291 = scmp.eq.s32.totalorder %s28, 1
      %p292 = por %p290, %p291
      %p294 = scmp.ne.s32.totalorder %s279, %s293
      %p295 = scmp.eq.s32.totalorder %s28, 0
      %p296 = por %p294, %p295
      %s298 = sadd.s32 %s297, 1
      %p301 = scmp.eq.s32.totalorder %s22, 1
      %p302 = scmp.ne.s32.totalorder %s297, %s299
      %p303 = scmp.eq.s32.totalorder %s22, 0
      %p304 = por %p302, %p303
      %p305 = scmp.ne.s32.totalorder %s297, %s299
      %p306 = scmp.eq.s32.totalorder %s27, 1
      %p307 = por %p305, %p306
      %p308 = scmp.ne.s32.totalorder %s299, %s300
      %p309 = scmp.eq.s32.totalorder %s27, 0
      %p310 = por %p308, %p309
      %p311 = scmp.ne.s32.totalorder %s299, %s300
      %p312 = scmp.eq.s32.totalorder %s28, 1
      %p313 = por %p311, %p312
      %p315 = scmp.ne.s32.totalorder %s300, %s314
      %p316 = scmp.eq.s32.totalorder %s28, 0
      %p317 = por %p315, %p316
      %s318 = ssub.s32 %s22, %s29
      %p319 = scmp.eq.s32.totalorder %s318, 0
      %s321 = sadd.s32 %s320, 1
      %s322 = scalar_select %p319, %s320, %s321
      %p325 = pneg %p319
      %p326 = scmp.eq.s32.totalorder %s22, 1
      %p327 = por %p325, %p326
      %p328 = scmp.ne.s32.totalorder %s320, %s323
      %p329 = scmp.eq.s32.totalorder %s22, 0
      %p330 = por %p328, %p329
      %p331 = scmp.ne.s32.totalorder %s320, %s323
      %p332 = scmp.eq.s32.totalorder %s27, 1
      %p333 = por %p331, %p332
      %p334 = scmp.ne.s32.totalorder %s323, %s324
      %p335 = scmp.eq.s32.totalorder %s27, 0
      %p336 = por %p334, %p335
      %p337 = scmp.ne.s32.totalorder %s323, %s324
      %p338 = scmp.eq.s32.totalorder %s28, 1
      %p339 = por %p337, %p338
      %p341 = scmp.ne.s32.totalorder %s324, %s340
      %p342 = scmp.eq.s32.totalorder %s28, 0
      %p343 = por %p341, %p342
      %p344 = scmp.le.s32.totalorder 1, %s22
      %p345 = scmp.lt.s32.totalorder %s22, 3
      %p346 = pnand %p344, %p345
      %p347 = pneg %p346
      // Predicated region
      $region9: #{dbga_forward.1} parent=5 // pred_check
        _
      $region10: #{dbga_forward.1} parent=5 // pred_check_branch
        %349 = sbr.rel (%p346) target = $region12
      $region11: #{dbga_forward.1} parent=5 // pred_region
        %s350 = ssub.s32 %s22, 1
        // Predicated region
        $region13: #{dbga_forward.1} parent=11 // pred_check
          %p351 = pneg %p121
        $region14: #{dbga_forward.1} parent=11 // pred_check_branch
          %353 = sbr.rel (%p351) target = $region16
        $region15: #{dbga_forward.1} parent=11 // pred_region
          _
        $region16: #{dbga_forward.1} parent=11 // pred_fallthru
          _
        // Predicated region
        $region17: #{dbga_forward.1} parent=11 // pred_check
          %p354 = pneg %p142
        $region18: #{dbga_forward.1} parent=11 // pred_check_branch
          %356 = sbr.rel (%p354) target = $region20
        $region19: #{dbga_forward.1} parent=11 // pred_region
          _
        $region20: #{dbga_forward.1} parent=11 // pred_fallthru
          _
        // Predicated region
        $region21: #{dbga_forward.1} parent=11 // pred_check
          %p357 = pneg %p163
        $region22: #{dbga_forward.1} parent=11 // pred_check_branch
          %359 = sbr.rel (%p357) target = $region24
        $region23: #{dbga_forward.1} parent=11 // pred_region
          _
        $region24: #{dbga_forward.1} parent=11 // pred_fallthru
          _
        // Predicated region
        $region25: #{dbga_forward.1} parent=11 // pred_check
          %p360 = pneg %p184
        $region26: #{dbga_forward.1} parent=11 // pred_check_branch
          %362 = sbr.rel (%p360) target = $region28
        $region27: #{dbga_forward.1} parent=11 // pred_region
          _
        $region28: #{dbga_forward.1} parent=11 // pred_fallthru
          _
        // Predicated region
        $region29: #{dbga_forward.1} parent=11 // pred_check
          %p363 = pneg %p205
        $region30: #{dbga_forward.1} parent=11 // pred_check_branch
          %365 = sbr.rel (%p363) target = $region32
        $region31: #{dbga_forward.1} parent=11 // pred_region
          _
        $region32: #{dbga_forward.1} parent=11 // pred_fallthru
          _
        // Predicated region
        $region33: #{dbga_forward.1} parent=11 // pred_check
          %p366 = pneg %p226
        $region34: #{dbga_forward.1} parent=11 // pred_check_branch
          %368 = sbr.rel (%p366) target = $region36
        $region35: #{dbga_forward.1} parent=11 // pred_region
          _
        $region36: #{dbga_forward.1} parent=11 // pred_fallthru
          _
        // Predicated region
        $region37: #{dbga_forward.1} parent=11 // pred_check
          %p369 = pneg %p247
        $region38: #{dbga_forward.1} parent=11 // pred_check_branch
          %371 = sbr.rel (%p369) target = $region40
        $region39: #{dbga_forward.1} parent=11 // pred_region
          _
        $region40: #{dbga_forward.1} parent=11 // pred_fallthru
          _
        // Predicated region
        $region41: #{dbga_forward.1} parent=11 // pred_check
          %p372 = pneg %p268
        $region42: #{dbga_forward.1} parent=11 // pred_check_branch
          %374 = sbr.rel (%p372) target = $region44
        $region43: #{dbga_forward.1} parent=11 // pred_region
          _
        $region44: #{dbga_forward.1} parent=11 // pred_fallthru
          _
        // Predicated region
        $region45: #{dbga_forward.1} parent=11 // pred_check
          %p375 = pneg %p289
        $region46: #{dbga_forward.1} parent=11 // pred_check_branch
          %377 = sbr.rel (%p375) target = $region48
        $region47: #{dbga_forward.1} parent=11 // pred_region
          _
        $region48: #{dbga_forward.1} parent=11 // pred_fallthru
          _
        // Predicated region
        $region49: #{dbga_forward.1} parent=11 // pred_check
          %p378 = pneg %p310
        $region50: #{dbga_forward.1} parent=11 // pred_check_branch
          %380 = sbr.rel (%p378) target = $region52
        $region51: #{dbga_forward.1} parent=11 // pred_region
          _
        $region52: #{dbga_forward.1} parent=11 // pred_fallthru
          _
      $region12: #{dbga_forward.1} parent=5 // pred_fallthru
        _
      %p381 = scmp.lt.s32.totalorder %s22, 2
      // Predicated region
      $region53: #{dbga_forward.1} parent=5 // pred_check
        %p382 = pneg %p381
      $region54: #{dbga_forward.1} parent=5 // pred_check_branch
        %384 = sbr.rel (%p382) target = $region56
      $region55: #{dbga_forward.1} parent=5 // pred_region
        // Predicated region
        $region57: #{dbga_forward.1} parent=55 // pred_check
          %p385 = pneg %p42
        $region58: #{dbga_forward.1} parent=55 // pred_check_branch
          %387 = sbr.rel (%p385) target = $region60
        $region59: #{dbga_forward.1} parent=55 // pred_region
          %p388 = scmp.lt.s32.totalorder %s22, 1
          %s389 = scalar_select %p388, %s22, 1
          %s390 = smul.addr %s389, 16
          %s391 = smul.addr %s390, 4
          %s392 = scalar_lea.vmem %s0, %s391
        $region60: #{dbga_forward.1} parent=55 // pred_fallthru
          _
        // Predicated region
        $region61: #{dbga_forward.1} parent=55 // pred_check
          %p393 = pneg %p68
        $region62: #{dbga_forward.1} parent=55 // pred_check_branch
          %395 = sbr.rel (%p393) target = $region64
        $region63: #{dbga_forward.1} parent=55 // pred_region
          %p396 = scmp.lt.s32.totalorder %s22, 1
          %s397 = scalar_select %p396, %s22, 1
          %s398 = smul.addr %s397, 8
          %s399 = smul.addr %s398, 4
          %s400 = scalar_lea.vmem %s1, %s399
        $region64: #{dbga_forward.1} parent=55 // pred_fallthru
          _
        // Predicated region
        $region65: #{dbga_forward.1} parent=55 // pred_check
          %p401 = pneg %p94
        $region66: #{dbga_forward.1} parent=55 // pred_check_branch
          %403 = sbr.rel (%p401) target = $region68
        $region67: #{dbga_forward.1} parent=55 // pred_region
          %p404 = scmp.lt.s32.totalorder %s22, 1
          %s405 = scalar_select %p404, %s22, 1
          %s406 = smul.addr %s405, 32
          %s407 = smul.addr %s406, 8
          %s408 = scalar_lea.vmem %s2, %s407
        $region68: #{dbga_forward.1} parent=55 // pred_fallthru
          _
      $region56: #{dbga_forward.1} parent=5 // pred_fallthru
        _
      %p409 = scmp.le.s32.totalorder 1, %s22
      %p410 = scmp.lt.s32.totalorder %s22, 3
      %p411 = pnand %p409, %p410
      %p412 = pneg %p411
      // Predicated region
      $region69: #{dbga_forward.1} parent=5 // pred_check
        _
      $region70: #{dbga_forward.1} parent=5 // pred_check_branch
        %414 = sbr.rel (%p411) target = $region72
      $region71: #{dbga_forward.1} parent=5 // pred_region
        %s415 = ssub.s32 %s22, 1
        %p416 = scmp.lt.s32.totalorder %s27, 1
        %s417 = scalar_select %p416, %s27, 1
        %s418 = smul.addr %s417, 16
        %s419 = smul.addr %s418, 4
        %s420 = scalar_lea.vmem %s0, %s419
        %p421 = pneg %p48
        %p422 = pneg %p45
        %p423 = scmp.lt.s32.totalorder %s27, 1
        %s424 = scalar_select %p423, %s27, 1
        %s425 = smul.addr %s424, 8
        %s426 = smul.addr %s425, 4
        %s427 = scalar_lea.vmem %s1, %s426
        %p428 = pneg %p74
        %p429 = pneg %p71
        %p430 = scmp.lt.s32.totalorder %s27, 1
        %s431 = scalar_select %p430, %s27, 1
        %s432 = smul.addr %s431, 32
        %s433 = smul.addr %s432, 8
        %s434 = scalar_lea.vmem %s2, %s433
        %p435 = pneg %p100
        %p436 = pneg %p97
        %p437 = pneg %p121
        %p438 = pneg %p118
        %p439 = pneg %p142
        %p440 = pneg %p139
        %p441 = pneg %p163
        %p442 = pneg %p160
        %p443 = pneg %p184
        %p444 = pneg %p181
        %p445 = pneg %p205
        %p446 = pneg %p202
        %p447 = pneg %p226
        %p448 = pneg %p223
        %p449 = pneg %p247
        %p450 = pneg %p244
        %p451 = pneg %p268
        %p452 = pneg %p265
        %p453 = pneg %p289
        %p454 = pneg %p286
        %p455 = pneg %p310
        %p456 = pneg %p307
        %p457 = pneg %p336
        %p458 = pneg %p333
        %s459 = sand.u32 %s323, 1
        %s460 = scalar_lea.sflag [#allocation6], %s459
        %s461 = sand.u32 %s323, 1
        %s462 = smul.addr %s461, 256
        %s463 = scalar_lea.vmem [#allocation5], %s462
        %p464 = scmp.lt.s32.totalorder %s27, 1
        %s465 = scalar_select %p464, %s27, 1
        %s466 = smul.addr %s465, 16
        %s467 = smul.addr %s466, 4
        %s468 = scalar_lea.vmem %s0, %s467
        %p469 = scmp.lt.s32.totalorder %s27, 1
        %s470 = scalar_select %p469, %s27, 1
        %s471 = smul.addr %s470, 8
        %s472 = smul.addr %s471, 4
        %s473 = scalar_lea.vmem %s1, %s472
        %p474 = scmp.lt.s32.totalorder %s27, 1
        %s475 = scalar_select %p474, %s27, 1
        %s476 = smul.addr %s475, 32
        %s477 = smul.addr %s476, 8
        %s478 = scalar_lea.vmem %s2, %s477
        %479 = vst [vmem:[#allocation2] sm:$0xff] 0.0
        %480 = vst [vmem:[#allocation2 + $0x8] sm:$0xff] 0.0
        %481 = vst [vmem:[#allocation2 + $0x10] sm:$0x3] 0.0
        %482 = vst [vmem:[#allocation2 + $0x18] sm:$0x3] 0.0
        %483 = vst [vmem:[#allocation2 + $0x20] sm:$0xff] 0.0
        %484 = vst [vmem:[#allocation2 + $0x28] sm:$0xff] 0.0
        %485 = vst [vmem:[#allocation2 + $0x30] sm:$0x3] 0.0
        %486 = vst [vmem:[#allocation2 + $0x38] sm:$0x3] 0.0
        %487 = vst [vmem:[#allocation2 + $0x40] sm:$0xff] 0.0
        %488 = vst [vmem:[#allocation2 + $0x48] sm:$0xff] 0.0
        %489 = vst [vmem:[#allocation2 + $0x50] sm:$0x3] 0.0
        %490 = vst [vmem:[#allocation2 + $0x58] sm:$0x3] 0.0
        %491 = vst [vmem:[#allocation2 + $0x60] sm:$0xff] 0.0
        %492 = vst [vmem:[#allocation2 + $0x68] sm:$0xff] 0.0
        %493 = vst [vmem:[#allocation2 + $0x70] sm:$0x3] 0.0
        %494 = vst [vmem:[#allocation2 + $0x78] sm:$0x3] 0.0
        %495 = vst [vmem:[#allocation2 + $0x80] sm:$0xff] 0.0
        %496 = vst [vmem:[#allocation2 + $0x88] sm:$0xff] 0.0
        %497 = vst [vmem:[#allocation2 + $0x90] sm:$0x3] 0.0
        %498 = vst [vmem:[#allocation2 + $0x98] sm:$0x3] 0.0
        %499 = vst [vmem:[#allocation2 + $0xa0] sm:$0xff] 0.0
        %500 = vst [vmem:[#allocation2 + $0xa8] sm:$0xff] 0.0
        %501 = vst [vmem:[#allocation2 + $0xb0] sm:$0x3] 0.0
        %502 = vst [vmem:[#allocation2 + $0xb8] sm:$0x3] 0.0
        %503 = vst [vmem:[#allocation2 + $0xc0] sm:$0xff] 0.0
        %504 = vst [vmem:[#allocation2 + $0xc8] sm:$0xff] 0.0
        %505 = vst [vmem:[#allocation2 + $0xd0] sm:$0x3] 0.0
        %506 = vst [vmem:[#allocation2 + $0xd8] sm:$0x3] 0.0
        %507 = vst [vmem:[#allocation2 + $0xe0] sm:$0xff] 0.0
        %508 = vst [vmem:[#allocation2 + $0xe8] sm:$0xff] 0.0
        %509 = vst [vmem:[#allocation2 + $0xf0] sm:$0x3] 0.0
        %510 = vst [vmem:[#allocation2 + $0xf8] sm:$0x3] 0.0
        %511 = vst [vmem:[#allocation2 + $0x100] sm:$0xff] 0.0
        %512 = vst [vmem:[#allocation2 + $0x108] sm:$0xff] 0.0
        %513 = vst [vmem:[#allocation2 + $0x110] sm:$0x3] 0.0
        %514 = vst [vmem:[#allocation2 + $0x118] sm:$0x3] 0.0
        %515 = vst [vmem:[#allocation2 + $0x120] sm:$0xff] 0.0
        %516 = vst [vmem:[#allocation2 + $0x128] sm:$0xff] 0.0
        %517 = vst [vmem:[#allocation2 + $0x130] sm:$0x3] 0.0
        %518 = vst [vmem:[#allocation2 + $0x138] sm:$0x3] 0.0
        %519 = vst [vmem:[#allocation3] sm:$0xff] 0.0
        %520 = vst [vmem:[#allocation3 + $0x8] sm:$0x3] 0.0
        %521 = vst [vmem:[#allocation3 + $0x10] sm:$0xff] 0.0
        %522 = vst [vmem:[#allocation3 + $0x18] sm:$0x3] 0.0
        %523 = vst [vmem:[#allocation3 + $0x20] sm:$0xff] 0.0
        %524 = vst [vmem:[#allocation3 + $0x28] sm:$0x3] 0.0
        %525 = vst [vmem:[#allocation3 + $0x30] sm:$0xff] 0.0
        %526 = vst [vmem:[#allocation3 + $0x38] sm:$0x3] 0.0
        %527 = vst [vmem:[#allocation3 + $0x40] sm:$0xff] 0.0
        %528 = vst [vmem:[#allocation3 + $0x48] sm:$0x3] 0.0
        %529 = vst [vmem:[#allocation3 + $0x50] sm:$0xff] 0.0
        %530 = vst [vmem:[#allocation3 + $0x58] sm:$0x3] 0.0
        %531 = vst [vmem:[#allocation3 + $0x60] sm:$0xff] 0.0
        %532 = vst [vmem:[#allocation3 + $0x68] sm:$0x3] 0.0
        %533 = vst [vmem:[#allocation3 + $0x70] sm:$0xff] 0.0
        %534 = vst [vmem:[#allocation3 + $0x78] sm:$0x3] 0.0
        %535 = vst [vmem:[#allocation3 + $0x80] sm:$0xff] 0.0
        %536 = vst [vmem:[#allocation3 + $0x88] sm:$0x3] 0.0
        %537 = vst [vmem:[#allocation3 + $0x90] sm:$0xff] 0.0
        %538 = vst [vmem:[#allocation3 + $0x98] sm:$0x3] 0.0
        %539 = vst [vmem:[#allocation4] sm:$0xff] 0.0
        %540 = vst [vmem:[#allocation4 + $0x8] sm:$0x3] 0.0
        %541 = vst [vmem:[#allocation4 + $0x10] sm:$0xff] 0.0
        %542 = vst [vmem:[#allocation4 + $0x18] sm:$0x3] 0.0
        %543 = vst [vmem:[#allocation4 + $0x20] sm:$0xff] 0.0
        %544 = vst [vmem:[#allocation4 + $0x28] sm:$0x3] 0.0
        %545 = vst [vmem:[#allocation4 + $0x30] sm:$0xff] 0.0
        %546 = vst [vmem:[#allocation4 + $0x38] sm:$0x3] 0.0
        %547 = vst [vmem:[#allocation4 + $0x40] sm:$0xff] 0.0
        %548 = vst [vmem:[#allocation4 + $0x48] sm:$0x3] 0.0
        %549 = vst [vmem:[#allocation4 + $0x50] sm:$0xff] 0.0
        %550 = vst [vmem:[#allocation4 + $0x58] sm:$0x3] 0.0
        %551 = vst [vmem:[#allocation4 + $0x60] sm:$0xff] 0.0
        %552 = vst [vmem:[#allocation4 + $0x68] sm:$0x3] 0.0
        %553 = vst [vmem:[#allocation4 + $0x70] sm:$0xff] 0.0
        %554 = vst [vmem:[#allocation4 + $0x78] sm:$0x3] 0.0
        %555 = vst [vmem:[#allocation4 + $0x80] sm:$0xff] 0.0
        %556 = vst [vmem:[#allocation4 + $0x88] sm:$0x3] 0.0
        %557 = vst [vmem:[#allocation4 + $0x90] sm:$0xff] 0.0
        %558 = vst [vmem:[#allocation4 + $0x98] sm:$0x3] 0.0
        %v559 = vld [vmem:[%s468] sm:$0xff]
        %v560 = vld [vmem:[%s468 + $0x8] sm:$0xff]
        %v561 = vld [vmem:[%s468 + $0x10] sm:$0xff]
        %v562 = vld [vmem:[%s468 + $0x18] sm:$0xff]
        %v563 = vld [vmem:[%s468 + $0x20] sm:$0xff]
        %v564 = vld [vmem:[%s468 + $0x28] sm:$0xff]
        %v565 = vld [vmem:[%s468 + $0x30] sm:$0xff]
        %v566 = vld [vmem:[%s468 + $0x38] sm:$0xff]
        %v567 = vunpack.c.l.bf16 %v559
        %v568 = vunpack.c.h.bf16 %v559
        %v569 = vunpack.c.l.bf16 %v560
        %v570 = vunpack.c.h.bf16 %v560
        %v571 = vunpack.c.l.bf16 %v561
        %v572 = vunpack.c.h.bf16 %v561
        %v573 = vunpack.c.l.bf16 %v562
        %v574 = vunpack.c.h.bf16 %v562
        %v575 = vunpack.c.l.bf16 %v563
        %v576 = vunpack.c.h.bf16 %v563
        %v577 = vunpack.c.l.bf16 %v564
        %v578 = vunpack.c.h.bf16 %v564
        %v579 = vunpack.c.l.bf16 %v565
        %v580 = vunpack.c.h.bf16 %v565
        %v581 = vunpack.c.l.bf16 %v566
        %v582 = vunpack.c.h.bf16 %v566
        %v599 = vrot.slane %v567, 7
        %v600 = vrot.slane %v568, 7
        %v601 = vrot.slane %v569, 7
        %v602 = vrot.slane %v570, 7
        %v603 = vrot.slane %v571, 7
        %v604 = vrot.slane %v572, 7
        %v605 = vrot.slane %v573, 7
        %v606 = vrot.slane %v574, 7
        %v607 = vrot.slane %v575, 7
        %v608 = vrot.slane %v576, 7
        %v609 = vrot.slane %v577, 7
        %v610 = vrot.slane %v578, 7
        %v611 = vrot.slane %v579, 7
        %v612 = vrot.slane %v580, 7
        %v613 = vrot.slane %v581, 7
        %v614 = vrot.slane %v582, 7
        %s631 = scalar_lea.vmem [#allocation2], 32
        %632 = vst [vmem:[%s631] sm:$0xfe] %v599
        %633 = vst [vmem:[%s631 + $0x8] sm:$0xfe] %v600
        %634 = vst [vmem:[%s631 + $0x10] sm:$0x1] %v599
        %635 = vst [vmem:[%s631 + $0x18] sm:$0x1] %v600
        %636 = vst [vmem:[%s631 + $0x20] sm:$0xfe] %v601
        %637 = vst [vmem:[%s631 + $0x28] sm:$0xfe] %v602
        %638 = vst [vmem:[%s631 + $0x30] sm:$0x1] %v601
        %639 = vst [vmem:[%s631 + $0x38] sm:$0x1] %v602
        %640 = vst [vmem:[%s631 + $0x40] sm:$0xfe] %v603
        %641 = vst [vmem:[%s631 + $0x48] sm:$0xfe] %v604
        %642 = vst [vmem:[%s631 + $0x50] sm:$0x1] %v603
        %643 = vst [vmem:[%s631 + $0x58] sm:$0x1] %v604
        %644 = vst [vmem:[%s631 + $0x60] sm:$0xfe] %v605
        %645 = vst [vmem:[%s631 + $0x68] sm:$0xfe] %v606
        %646 = vst [vmem:[%s631 + $0x70] sm:$0x1] %v605
        %647 = vst [vmem:[%s631 + $0x78] sm:$0x1] %v606
        %648 = vst [vmem:[%s631 + $0x80] sm:$0xfe] %v607
        %649 = vst [vmem:[%s631 + $0x88] sm:$0xfe] %v608
        %650 = vst [vmem:[%s631 + $0x90] sm:$0x1] %v607
        %651 = vst [vmem:[%s631 + $0x98] sm:$0x1] %v608
        %652 = vst [vmem:[%s631 + $0xa0] sm:$0xfe] %v609
        %653 = vst [vmem:[%s631 + $0xa8] sm:$0xfe] %v610
        %654 = vst [vmem:[%s631 + $0xb0] sm:$0x1] %v609
        %655 = vst [vmem:[%s631 + $0xb8] sm:$0x1] %v610
        %656 = vst [vmem:[%s631 + $0xc0] sm:$0xfe] %v611
        %657 = vst [vmem:[%s631 + $0xc8] sm:$0xfe] %v612
        %658 = vst [vmem:[%s631 + $0xd0] sm:$0x1] %v611
        %659 = vst [vmem:[%s631 + $0xd8] sm:$0x1] %v612
        %660 = vst [vmem:[%s631 + $0xe0] sm:$0xfe] %v613
        %661 = vst [vmem:[%s631 + $0xe8] sm:$0xfe] %v614
        %662 = vst [vmem:[%s631 + $0xf0] sm:$0x1] %v613
        %663 = vst [vmem:[%s631 + $0xf8] sm:$0x1] %v614
        %v664 = vld [vmem:[%s473] sm:$0xf]
        %v665 = vld [vmem:[%s473 + $0x4] sm:$0xf]
        %v666 = vld [vmem:[%s473 + $0x8] sm:$0xf]
        %v667 = vld [vmem:[%s473 + $0xc] sm:$0xf]
        %v668 = vld [vmem:[%s473 + $0x10] sm:$0xf]
        %v669 = vld [vmem:[%s473 + $0x14] sm:$0xf]
        %v670 = vld [vmem:[%s473 + $0x18] sm:$0xf]
        %v671 = vld [vmem:[%s473 + $0x1c] sm:$0xf]
        %v672 = vunpack.c.l.bf16 %v664
        %v673 = vunpack.c.l.bf16 %v665
        %v674 = vunpack.c.l.bf16 %v666
        %v675 = vunpack.c.l.bf16 %v667
        %v676 = vunpack.c.l.bf16 %v668
        %v677 = vunpack.c.l.bf16 %v669
        %v678 = vunpack.c.l.bf16 %v670
        %v679 = vunpack.c.l.bf16 %v671
        %s680 = scalar_lea.vmem [#allocation3], 16
        %681 = vst [vmem:[%s680 + $0x1] sm:$0xff] %v672
        %682 = vst [vmem:[%s680 + $0x11] sm:$0xff] %v673
        %683 = vst [vmem:[%s680 + $0x21] sm:$0xff] %v674
        %684 = vst [vmem:[%s680 + $0x31] sm:$0xff] %v675
        %685 = vst [vmem:[%s680 + $0x41] sm:$0xff] %v676
        %686 = vst [vmem:[%s680 + $0x51] sm:$0xff] %v677
        %687 = vst [vmem:[%s680 + $0x61] sm:$0xff] %v678
        %688 = vst [vmem:[%s680 + $0x71] sm:$0xff] %v679
        %v689 = vld [vmem:[#allocation2] sm:$0xff]
        %v690 = vld [vmem:[#allocation2 + $0x8] sm:$0xff]
        %v691 = vld [vmem:[#allocation2 + $0x10] sm:$0x3]
        %v692 = vld [vmem:[#allocation2 + $0x18] sm:$0x3]
        %v693 = vld [vmem:[#allocation2 + $0x20] sm:$0xff]
        %v694 = vld [vmem:[#allocation2 + $0x28] sm:$0xff]
        %v695 = vld [vmem:[#allocation2 + $0x30] sm:$0x3]
        %v696 = vld [vmem:[#allocation2 + $0x38] sm:$0x3]
        %v697 = vld [vmem:[#allocation2 + $0x40] sm:$0xff]
        %v698 = vld [vmem:[#allocation2 + $0x48] sm:$0xff]
        %v699 = vld [vmem:[#allocation2 + $0x50] sm:$0x3]
        %v700 = vld [vmem:[#allocation2 + $0x58] sm:$0x3]
        %v701 = vld [vmem:[#allocation2 + $0x60] sm:$0xff]
        %v702 = vld [vmem:[#allocation2 + $0x68] sm:$0xff]
        %v703 = vld [vmem:[#allocation2 + $0x70] sm:$0x3]
        %v704 = vld [vmem:[#allocation2 + $0x78] sm:$0x3]
        %v705 = vld [vmem:[#allocation2 + $0x80] sm:$0xff]
        %v706 = vld [vmem:[#allocation2 + $0x88] sm:$0xff]
        %v707 = vld [vmem:[#allocation2 + $0x90] sm:$0x3]
        %v708 = vld [vmem:[#allocation2 + $0x98] sm:$0x3]
        %v709 = vld [vmem:[#allocation2 + $0xa0] sm:$0xff]
        %v710 = vld [vmem:[#allocation2 + $0xa8] sm:$0xff]
        %v711 = vld [vmem:[#allocation2 + $0xb0] sm:$0x3]
        %v712 = vld [vmem:[#allocation2 + $0xb8] sm:$0x3]
        %v713 = vld [vmem:[#allocation2 + $0xc0] sm:$0xff]
        %v714 = vld [vmem:[#allocation2 + $0xc8] sm:$0xff]
        %v715 = vld [vmem:[#allocation2 + $0xd0] sm:$0x3]
        %v716 = vld [vmem:[#allocation2 + $0xd8] sm:$0x3]
        %v717 = vld [vmem:[#allocation2 + $0xe0] sm:$0xff]
        %v718 = vld [vmem:[#allocation2 + $0xe8] sm:$0xff]
        %v719 = vld [vmem:[#allocation2 + $0xf0] sm:$0x3]
        %v720 = vld [vmem:[#allocation2 + $0xf8] sm:$0x3]
        %vm753 = vcmask 1046528
        %v754 = vrot.slane %v689, 1
        %v755 = vrot.slane %v691, 1
        %v756 = vsel %vm753, %v754, %v755
        %v757 = vrot.slane %v690, 1
        %v758 = vrot.slane %v692, 1
        %v759 = vsel %vm753, %v757, %v758
        %v760 = vrot.slane %v693, 1
        %v761 = vrot.slane %v695, 1
        %v762 = vsel %vm753, %v760, %v761
        %v763 = vrot.slane %v694, 1
        %v764 = vrot.slane %v696, 1
        %v765 = vsel %vm753, %v763, %v764
        %v766 = vrot.slane %v697, 1
        %v767 = vrot.slane %v699, 1
        %v768 = vsel %vm753, %v766, %v767
        %v769 = vrot.slane %v698, 1
        %v770 = vrot.slane %v700, 1
        %v771 = vsel %vm753, %v769, %v770
        %v772 = vrot.slane %v701, 1
        %v773 = vrot.slane %v703, 1
        %v774 = vsel %vm753, %v772, %v773
        %v775 = vrot.slane %v702, 1
        %v776 = vrot.slane %v704, 1
        %v777 = vsel %vm753, %v775, %v776
        %v778 = vrot.slane %v705, 1
        %v779 = vrot.slane %v707, 1
        %v780 = vsel %vm753, %v778, %v779
        %v781 = vrot.slane %v706, 1
        %v782 = vrot.slane %v708, 1
        %v783 = vsel %vm753, %v781, %v782
        %v784 = vrot.slane %v709, 1
        %v785 = vrot.slane %v711, 1
        %v786 = vsel %vm753, %v784, %v785
        %v787 = vrot.slane %v710, 1
        %v788 = vrot.slane %v712, 1
        %v789 = vsel %vm753, %v787, %v788
        %v790 = vrot.slane %v713, 1
        %v791 = vrot.slane %v715, 1
        %v792 = vsel %vm753, %v790, %v791
        %v793 = vrot.slane %v714, 1
        %v794 = vrot.slane %v716, 1
        %v795 = vsel %vm753, %v793, %v794
        %v796 = vrot.slane %v717, 1
        %v797 = vrot.slane %v719, 1
        %v798 = vsel %vm753, %v796, %v797
        %v799 = vrot.slane %v718, 1
        %v800 = vrot.slane %v720, 1
        %v801 = vsel %vm753, %v799, %v800
        %vm818 = vcmask 1045504
        %v819 = vrot.slane %v689, 2
        %v820 = vrot.slane %v691, 2
        %v821 = vsel %vm818, %v819, %v820
        %v822 = vrot.slane %v690, 2
        %v823 = vrot.slane %v692, 2
        %v824 = vsel %vm818, %v822, %v823
        %v825 = vrot.slane %v693, 2
        %v826 = vrot.slane %v695, 2
        %v827 = vsel %vm818, %v825, %v826
        %v828 = vrot.slane %v694, 2
        %v829 = vrot.slane %v696, 2
        %v830 = vsel %vm818, %v828, %v829
        %v831 = vrot.slane %v697, 2
        %v832 = vrot.slane %v699, 2
        %v833 = vsel %vm818, %v831, %v832
        %v834 = vrot.slane %v698, 2
        %v835 = vrot.slane %v700, 2
        %v836 = vsel %vm818, %v834, %v835
        %v837 = vrot.slane %v701, 2
        %v838 = vrot.slane %v703, 2
        %v839 = vsel %vm818, %v837, %v838
        %v840 = vrot.slane %v702, 2
        %v841 = vrot.slane %v704, 2
        %v842 = vsel %vm818, %v840, %v841
        %v843 = vrot.slane %v705, 2
        %v844 = vrot.slane %v707, 2
        %v845 = vsel %vm818, %v843, %v844
        %v846 = vrot.slane %v706, 2
        %v847 = vrot.slane %v708, 2
        %v848 = vsel %vm818, %v846, %v847
        %v849 = vrot.slane %v709, 2
        %v850 = vrot.slane %v711, 2
        %v851 = vsel %vm818, %v849, %v850
        %v852 = vrot.slane %v710, 2
        %v853 = vrot.slane %v712, 2
        %v854 = vsel %vm818, %v852, %v853
        %v855 = vrot.slane %v713, 2
        %v856 = vrot.slane %v715, 2
        %v857 = vsel %vm818, %v855, %v856
        %v858 = vrot.slane %v714, 2
        %v859 = vrot.slane %v716, 2
        %v860 = vsel %vm818, %v858, %v859
        %v861 = vrot.slane %v717, 2
        %v862 = vrot.slane %v719, 2
        %v863 = vsel %vm818, %v861, %v862
        %v864 = vrot.slane %v718, 2
        %v865 = vrot.slane %v720, 2
        %v866 = vsel %vm818, %v864, %v865
        %v883 = vpack.c.bf16 %v693, %v689
        %v884 = vpack.c.bf16 %v694, %v690
        %v885 = vpack.c.bf16 %v762, %v756
        %v886 = vpack.c.bf16 %v765, %v759
        %v887 = vpack.c.bf16 %v827, %v821
        %v888 = vpack.c.bf16 %v830, %v824
        %v889 = vpack.c.bf16 %v701, %v697
        %v890 = vpack.c.bf16 %v702, %v698
        %v891 = vpack.c.bf16 %v774, %v768
        %v892 = vpack.c.bf16 %v777, %v771
        %v893 = vpack.c.bf16 %v839, %v833
        %v894 = vpack.c.bf16 %v842, %v836
        %v895 = vpack.c.bf16 %v709, %v705
        %v896 = vpack.c.bf16 %v710, %v706
        %v897 = vpack.c.bf16 %v786, %v780
        %v898 = vpack.c.bf16 %v789, %v783
        %v899 = vpack.c.bf16 %v851, %v845
        %v900 = vpack.c.bf16 %v854, %v848
        %v901 = vpack.c.bf16 %v717, %v713
        %v902 = vpack.c.bf16 %v718, %v714
        %v903 = vpack.c.bf16 %v798, %v792
        %v904 = vpack.c.bf16 %v801, %v795
        %v905 = vpack.c.bf16 %v863, %v857
        %v906 = vpack.c.bf16 %v866, %v860
        %v907 = vld [vmem:[%s3] sm:$0xf]
        %v908 = vld [vmem:[%s3 + $0x4] sm:$0xf]
        %v909 = vld [vmem:[%s3 + $0x8] sm:$0xf]
        %v910 = vld [vmem:[%s3 + $0xc] sm:$0xf]
        %v911 = vld [vmem:[%s3 + $0x10] sm:$0xf]
        %v912 = vld [vmem:[%s3 + $0x14] sm:$0xf]
        %v913 = vld [vmem:[%s3 + $0x18] sm:$0xf]
        %v914 = vld [vmem:[%s3 + $0x1c] sm:$0xf]
        %v915 = vld [vmem:[%s3 + $0x20] sm:$0xf]
        %v916 = vld [vmem:[%s3 + $0x24] sm:$0xf]
        %v917 = vld [vmem:[%s3 + $0x28] sm:$0xf]
        %v918 = vld [vmem:[%s3 + $0x2c] sm:$0xf]
        %v919 = vld [vmem:[%s3 + $0x30] sm:$0xf]
        %v920 = vld [vmem:[%s3 + $0x34] sm:$0xf]
        %v921 = vld [vmem:[%s3 + $0x38] sm:$0xf]
        %v922 = vld [vmem:[%s3 + $0x3c] sm:$0xf]
        %v923 = vld [vmem:[%s3 + $0x40] sm:$0xf]
        %v924 = vld [vmem:[%s3 + $0x44] sm:$0xf]
        %v925 = vld [vmem:[%s3 + $0x48] sm:$0xf]
        %v926 = vld [vmem:[%s3 + $0x4c] sm:$0xf]
        %v927 = vld [vmem:[%s3 + $0x50] sm:$0xf]
        %v928 = vld [vmem:[%s3 + $0x54] sm:$0xf]
        %v929 = vld [vmem:[%s3 + $0x58] sm:$0xf]
        %v930 = vld [vmem:[%s3 + $0x5c] sm:$0xf]
        %v931 = vld [vmem:[%s3 + $0x60] sm:$0xf]
        %v932 = vld [vmem:[%s3 + $0x64] sm:$0xf]
        %v933 = vld [vmem:[%s3 + $0x68] sm:$0xf]
        %v934 = vld [vmem:[%s3 + $0x6c] sm:$0xf]
        %v935 = vld [vmem:[%s3 + $0x70] sm:$0xf]
        %v936 = vld [vmem:[%s3 + $0x74] sm:$0xf]
        %v937 = vld [vmem:[%s3 + $0x78] sm:$0xf]
        %v938 = vld [vmem:[%s3 + $0x7c] sm:$0xf]
        %v939 = vld [vmem:[%s3 + $0x80] sm:$0xf]
        %v940 = vld [vmem:[%s3 + $0x84] sm:$0xf]
        %v941 = vld [vmem:[%s3 + $0x88] sm:$0xf]
        %v942 = vld [vmem:[%s3 + $0x8c] sm:$0xf]
        %v943 = vld [vmem:[%s3 + $0x90] sm:$0xf]
        %v944 = vld [vmem:[%s3 + $0x94] sm:$0xf]
        %v945 = vld [vmem:[%s3 + $0x98] sm:$0xf]
        %v946 = vld [vmem:[%s3 + $0x9c] sm:$0xf]
        %v947 = vld [vmem:[%s3 + $0xa0] sm:$0xf]
        %v948 = vld [vmem:[%s3 + $0xa4] sm:$0xf]
        %v949 = vld [vmem:[%s3 + $0xa8] sm:$0xf]
        %v950 = vld [vmem:[%s3 + $0xac] sm:$0xf]
        %v951 = vld [vmem:[%s3 + $0xb0] sm:$0xf]
        %v952 = vld [vmem:[%s3 + $0xb4] sm:$0xf]
        %v953 = vld [vmem:[%s3 + $0xb8] sm:$0xf]
        %v954 = vld [vmem:[%s3 + $0xbc] sm:$0xf]
        %v955 = vld [vmem:[%s3 + $0xc0] sm:$0xf]
        %v956 = vld [vmem:[%s3 + $0xc4] sm:$0xf]
        %v957 = vld [vmem:[%s3 + $0xc8] sm:$0xf]
        %v958 = vld [vmem:[%s3 + $0xcc] sm:$0xf]
        %v959 = vld [vmem:[%s3 + $0xd0] sm:$0xf]
        %v960 = vld [vmem:[%s3 + $0xd4] sm:$0xf]
        %v961 = vld [vmem:[%s3 + $0xd8] sm:$0xf]
        %v962 = vld [vmem:[%s3 + $0xdc] sm:$0xf]
        %v963 = vld [vmem:[%s3 + $0xe0] sm:$0xf]
        %v964 = vld [vmem:[%s3 + $0xe4] sm:$0xf]
        %v965 = vld [vmem:[%s3 + $0xe8] sm:$0xf]
        %v966 = vld [vmem:[%s3 + $0xec] sm:$0xf]
        %v967 = vld [vmem:[%s3 + $0xf0] sm:$0xf]
        %v968 = vld [vmem:[%s3 + $0xf4] sm:$0xf]
        %v969 = vld [vmem:[%s3 + $0xf8] sm:$0xf]
        %v970 = vld [vmem:[%s3 + $0xfc] sm:$0xf]
        %v971 = vld [vmem:[%s3 + $0x100] sm:$0xf]
        %v972 = vld [vmem:[%s3 + $0x104] sm:$0xf]
        %v973 = vld [vmem:[%s3 + $0x108] sm:$0xf]
        %v974 = vld [vmem:[%s3 + $0x10c] sm:$0xf]
        %v975 = vld [vmem:[%s3 + $0x110] sm:$0xf]
        %v976 = vld [vmem:[%s3 + $0x114] sm:$0xf]
        %v977 = vld [vmem:[%s3 + $0x118] sm:$0xf]
        %v978 = vld [vmem:[%s3 + $0x11c] sm:$0xf]
        %v979 = vld [vmem:[%s3 + $0x120] sm:$0xf]
        %v980 = vld [vmem:[%s3 + $0x124] sm:$0xf]
        %v981 = vld [vmem:[%s3 + $0x128] sm:$0xf]
        %v982 = vld [vmem:[%s3 + $0x12c] sm:$0xf]
        %v983 = vld [vmem:[%s3 + $0x130] sm:$0xf]
        %v984 = vld [vmem:[%s3 + $0x134] sm:$0xf]
        %v985 = vld [vmem:[%s3 + $0x138] sm:$0xf]
        %v986 = vld [vmem:[%s3 + $0x13c] sm:$0xf]
        %v987 = vld [vmem:[%s3 + $0x140] sm:$0xf]
        %v988 = vld [vmem:[%s3 + $0x144] sm:$0xf]
        %v989 = vld [vmem:[%s3 + $0x148] sm:$0xf]
        %v990 = vld [vmem:[%s3 + $0x14c] sm:$0xf]
        %v991 = vld [vmem:[%s3 + $0x150] sm:$0xf]
        %v992 = vld [vmem:[%s3 + $0x154] sm:$0xf]
        %v993 = vld [vmem:[%s3 + $0x158] sm:$0xf]
        %v994 = vld [vmem:[%s3 + $0x15c] sm:$0xf]
        %v995 = vld [vmem:[%s3 + $0x160] sm:$0xf]
        %v996 = vld [vmem:[%s3 + $0x164] sm:$0xf]
        %v997 = vld [vmem:[%s3 + $0x168] sm:$0xf]
        %v998 = vld [vmem:[%s3 + $0x16c] sm:$0xf]
        %v999 = vld [vmem:[%s3 + $0x170] sm:$0xf]
        %v1000 = vld [vmem:[%s3 + $0x174] sm:$0xf]
        %v1001 = vld [vmem:[%s3 + $0x178] sm:$0xf]
        %v1002 = vld [vmem:[%s3 + $0x17c] sm:$0xf]
        %v1003 = vld [vmem:[%s631] sm:$0xff]
        %v1004 = vld [vmem:[%s631 + $0x8] sm:$0xff]
        %v1005 = vld [vmem:[%s631 + $0x10] sm:$0x3]
        %v1006 = vld [vmem:[%s631 + $0x18] sm:$0x3]
        %v1007 = vld [vmem:[%s631 + $0x20] sm:$0xff]
        %v1008 = vld [vmem:[%s631 + $0x28] sm:$0xff]
        %v1009 = vld [vmem:[%s631 + $0x30] sm:$0x3]
        %v1010 = vld [vmem:[%s631 + $0x38] sm:$0x3]
        %v1011 = vld [vmem:[%s631 + $0x40] sm:$0xff]
        %v1012 = vld [vmem:[%s631 + $0x48] sm:$0xff]
        %v1013 = vld [vmem:[%s631 + $0x50] sm:$0x3]
        %v1014 = vld [vmem:[%s631 + $0x58] sm:$0x3]
        %v1015 = vld [vmem:[%s631 + $0x60] sm:$0xff]
        %v1016 = vld [vmem:[%s631 + $0x68] sm:$0xff]
        %v1017 = vld [vmem:[%s631 + $0x70] sm:$0x3]
        %v1018 = vld [vmem:[%s631 + $0x78] sm:$0x3]
        %v1019 = vld [vmem:[%s631 + $0x80] sm:$0xff]
        %v1020 = vld [vmem:[%s631 + $0x88] sm:$0xff]
        %v1021 = vld [vmem:[%s631 + $0x90] sm:$0x3]
        %v1022 = vld [vmem:[%s631 + $0x98] sm:$0x3]
        %v1023 = vld [vmem:[%s631 + $0xa0] sm:$0xff]
        %v1024 = vld [vmem:[%s631 + $0xa8] sm:$0xff]
        %v1025 = vld [vmem:[%s631 + $0xb0] sm:$0x3]
        %v1026 = vld [vmem:[%s631 + $0xb8] sm:$0x3]
        %v1027 = vld [vmem:[%s631 + $0xc0] sm:$0xff]
        %v1028 = vld [vmem:[%s631 + $0xc8] sm:$0xff]
        %v1029 = vld [vmem:[%s631 + $0xd0] sm:$0x3]
        %v1030 = vld [vmem:[%s631 + $0xd8] sm:$0x3]
        %v1031 = vld [vmem:[%s631 + $0xe0] sm:$0xff]
        %v1032 = vld [vmem:[%s631 + $0xe8] sm:$0xff]
        %v1033 = vld [vmem:[%s631 + $0xf0] sm:$0x3]
        %v1034 = vld [vmem:[%s631 + $0xf8] sm:$0x3]
        %v1067 = vrot.slane %v1003, 1
        %v1068 = vrot.slane %v1005, 1
        %v1069 = vsel %vm753, %v1067, %v1068
        %v1070 = vrot.slane %v1004, 1
        %v1071 = vrot.slane %v1006, 1
        %v1072 = vsel %vm753, %v1070, %v1071
        %v1073 = vrot.slane %v1007, 1
        %v1074 = vrot.slane %v1009, 1
        %v1075 = vsel %vm753, %v1073, %v1074
        %v1076 = vrot.slane %v1008, 1
        %v1077 = vrot.slane %v1010, 1
        %v1078 = vsel %vm753, %v1076, %v1077
        %v1079 = vrot.slane %v1011, 1
        %v1080 = vrot.slane %v1013, 1
        %v1081 = vsel %vm753, %v1079, %v1080
        %v1082 = vrot.slane %v1012, 1
        %v1083 = vrot.slane %v1014, 1
        %v1084 = vsel %vm753, %v1082, %v1083
        %v1085 = vrot.slane %v1015, 1
        %v1086 = vrot.slane %v1017, 1
        %v1087 = vsel %vm753, %v1085, %v1086
        %v1088 = vrot.slane %v1016, 1
        %v1089 = vrot.slane %v1018, 1
        %v1090 = vsel %vm753, %v1088, %v1089
        %v1091 = vrot.slane %v1019, 1
        %v1092 = vrot.slane %v1021, 1
        %v1093 = vsel %vm753, %v1091, %v1092
        %v1094 = vrot.slane %v1020, 1
        %v1095 = vrot.slane %v1022, 1
        %v1096 = vsel %vm753, %v1094, %v1095
        %v1097 = vrot.slane %v1023, 1
        %v1098 = vrot.slane %v1025, 1
        %v1099 = vsel %vm753, %v1097, %v1098
        %v1100 = vrot.slane %v1024, 1
        %v1101 = vrot.slane %v1026, 1
        %v1102 = vsel %vm753, %v1100, %v1101
        %v1103 = vrot.slane %v1027, 1
        %v1104 = vrot.slane %v1029, 1
        %v1105 = vsel %vm753, %v1103, %v1104
        %v1106 = vrot.slane %v1028, 1
        %v1107 = vrot.slane %v1030, 1
        %v1108 = vsel %vm753, %v1106, %v1107
        %v1109 = vrot.slane %v1031, 1
        %v1110 = vrot.slane %v1033, 1
        %v1111 = vsel %vm753, %v1109, %v1110
        %v1112 = vrot.slane %v1032, 1
        %v1113 = vrot.slane %v1034, 1
        %v1114 = vsel %vm753, %v1112, %v1113
        %v1131 = vrot.slane %v1003, 2
        %v1132 = vrot.slane %v1005, 2
        %v1133 = vsel %vm818, %v1131, %v1132
        %v1134 = vrot.slane %v1004, 2
        %v1135 = vrot.slane %v1006, 2
        %v1136 = vsel %vm818, %v1134, %v1135
        %v1137 = vrot.slane %v1007, 2
        %v1138 = vrot.slane %v1009, 2
        %v1139 = vsel %vm818, %v1137, %v1138
        %v1140 = vrot.slane %v1008, 2
        %v1141 = vrot.slane %v1010, 2
        %v1142 = vsel %vm818, %v1140, %v1141
        %v1143 = vrot.slane %v1011, 2
        %v1144 = vrot.slane %v1013, 2
        %v1145 = vsel %vm818, %v1143, %v1144
        %v1146 = vrot.slane %v1012, 2
        %v1147 = vrot.slane %v1014, 2
        %v1148 = vsel %vm818, %v1146, %v1147
        %v1149 = vrot.slane %v1015, 2
        %v1150 = vrot.slane %v1017, 2
        %v1151 = vsel %vm818, %v1149, %v1150
        %v1152 = vrot.slane %v1016, 2
        %v1153 = vrot.slane %v1018, 2
        %v1154 = vsel %vm818, %v1152, %v1153
        %v1155 = vrot.slane %v1019, 2
        %v1156 = vrot.slane %v1021, 2
        %v1157 = vsel %vm818, %v1155, %v1156
        %v1158 = vrot.slane %v1020, 2
        %v1159 = vrot.slane %v1022, 2
        %v1160 = vsel %vm818, %v1158, %v1159
        %v1161 = vrot.slane %v1023, 2
        %v1162 = vrot.slane %v1025, 2
        %v1163 = vsel %vm818, %v1161, %v1162
        %v1164 = vrot.slane %v1024, 2
        %v1165 = vrot.slane %v1026, 2
        %v1166 = vsel %vm818, %v1164, %v1165
        %v1167 = vrot.slane %v1027, 2
        %v1168 = vrot.slane %v1029, 2
        %v1169 = vsel %vm818, %v1167, %v1168
        %v1170 = vrot.slane %v1028, 2
        %v1171 = vrot.slane %v1030, 2
        %v1172 = vsel %vm818, %v1170, %v1171
        %v1173 = vrot.slane %v1031, 2
        %v1174 = vrot.slane %v1033, 2
        %v1175 = vsel %vm818, %v1173, %v1174
        %v1176 = vrot.slane %v1032, 2
        %v1177 = vrot.slane %v1034, 2
        %v1178 = vsel %vm818, %v1176, %v1177
        %v1195 = vpack.c.bf16 %v1007, %v1003
        %v1196 = vpack.c.bf16 %v1008, %v1004
        %v1197 = vpack.c.bf16 %v1075, %v1069
        %v1198 = vpack.c.bf16 %v1078, %v1072
        %v1199 = vpack.c.bf16 %v1139, %v1133
        %v1200 = vpack.c.bf16 %v1142, %v1136
        %v1201 = vpack.c.bf16 %v1015, %v1011
        %v1202 = vpack.c.bf16 %v1016, %v1012
        %v1203 = vpack.c.bf16 %v1087, %v1081
        %v1204 = vpack.c.bf16 %v1090, %v1084
        %v1205 = vpack.c.bf16 %v1151, %v1145
        %v1206 = vpack.c.bf16 %v1154, %v1148
        %v1207 = vpack.c.bf16 %v1023, %v1019
        %v1208 = vpack.c.bf16 %v1024, %v1020
        %v1209 = vpack.c.bf16 %v1099, %v1093
        %v1210 = vpack.c.bf16 %v1102, %v1096
        %v1211 = vpack.c.bf16 %v1163, %v1157
        %v1212 = vpack.c.bf16 %v1166, %v1160
        %v1213 = vpack.c.bf16 %v1031, %v1027
        %v1214 = vpack.c.bf16 %v1032, %v1028
        %v1215 = vpack.c.bf16 %v1111, %v1105
        %v1216 = vpack.c.bf16 %v1114, %v1108
        %v1217 = vpack.c.bf16 %v1175, %v1169
        %v1218 = vpack.c.bf16 %v1178, %v1172
        %s1219 = scalar_lea.vmem %s3, 384
        %v1220 = vld [vmem:[%s1219] sm:$0xf]
        %v1221 = vld [vmem:[%s1219 + $0x4] sm:$0xf]
        %v1222 = vld [vmem:[%s1219 + $0x8] sm:$0xf]
        %v1223 = vld [vmem:[%s1219 + $0xc] sm:$0xf]
        %v1224 = vld [vmem:[%s1219 + $0x10] sm:$0xf]
        %v1225 = vld [vmem:[%s1219 + $0x14] sm:$0xf]
        %v1226 = vld [vmem:[%s1219 + $0x18] sm:$0xf]
        %v1227 = vld [vmem:[%s1219 + $0x1c] sm:$0xf]
        %v1228 = vld [vmem:[%s1219 + $0x20] sm:$0xf]
        %v1229 = vld [vmem:[%s1219 + $0x24] sm:$0xf]
        %v1230 = vld [vmem:[%s1219 + $0x28] sm:$0xf]
        %v1231 = vld [vmem:[%s1219 + $0x2c] sm:$0xf]
        %v1232 = vld [vmem:[%s1219 + $0x30] sm:$0xf]
        %v1233 = vld [vmem:[%s1219 + $0x34] sm:$0xf]
        %v1234 = vld [vmem:[%s1219 + $0x38] sm:$0xf]
        %v1235 = vld [vmem:[%s1219 + $0x3c] sm:$0xf]
        %v1236 = vld [vmem:[%s1219 + $0x40] sm:$0xf]
        %v1237 = vld [vmem:[%s1219 + $0x44] sm:$0xf]
        %v1238 = vld [vmem:[%s1219 + $0x48] sm:$0xf]
        %v1239 = vld [vmem:[%s1219 + $0x4c] sm:$0xf]
        %v1240 = vld [vmem:[%s1219 + $0x50] sm:$0xf]
        %v1241 = vld [vmem:[%s1219 + $0x54] sm:$0xf]
        %v1242 = vld [vmem:[%s1219 + $0x58] sm:$0xf]
        %v1243 = vld [vmem:[%s1219 + $0x5c] sm:$0xf]
        %v1244 = vld [vmem:[%s1219 + $0x60] sm:$0xf]
        %v1245 = vld [vmem:[%s1219 + $0x64] sm:$0xf]
        %v1246 = vld [vmem:[%s1219 + $0x68] sm:$0xf]
        %v1247 = vld [vmem:[%s1219 + $0x6c] sm:$0xf]
        %v1248 = vld [vmem:[%s1219 + $0x70] sm:$0xf]
        %v1249 = vld [vmem:[%s1219 + $0x74] sm:$0xf]
        %v1250 = vld [vmem:[%s1219 + $0x78] sm:$0xf]
        %v1251 = vld [vmem:[%s1219 + $0x7c] sm:$0xf]
        %v1252 = vld [vmem:[%s1219 + $0x80] sm:$0xf]
        %v1253 = vld [vmem:[%s1219 + $0x84] sm:$0xf]
        %v1254 = vld [vmem:[%s1219 + $0x88] sm:$0xf]
        %v1255 = vld [vmem:[%s1219 + $0x8c] sm:$0xf]
        %v1256 = vld [vmem:[%s1219 + $0x90] sm:$0xf]
        %v1257 = vld [vmem:[%s1219 + $0x94] sm:$0xf]
        %v1258 = vld [vmem:[%s1219 + $0x98] sm:$0xf]
        %v1259 = vld [vmem:[%s1219 + $0x9c] sm:$0xf]
        %v1260 = vld [vmem:[%s1219 + $0xa0] sm:$0xf]
        %v1261 = vld [vmem:[%s1219 + $0xa4] sm:$0xf]
        %v1262 = vld [vmem:[%s1219 + $0xa8] sm:$0xf]
        %v1263 = vld [vmem:[%s1219 + $0xac] sm:$0xf]
        %v1264 = vld [vmem:[%s1219 + $0xb0] sm:$0xf]
        %v1265 = vld [vmem:[%s1219 + $0xb4] sm:$0xf]
        %v1266 = vld [vmem:[%s1219 + $0xb8] sm:$0xf]
        %v1267 = vld [vmem:[%s1219 + $0xbc] sm:$0xf]
        %v1268 = vld [vmem:[%s1219 + $0xc0] sm:$0xf]
        %v1269 = vld [vmem:[%s1219 + $0xc4] sm:$0xf]
        %v1270 = vld [vmem:[%s1219 + $0xc8] sm:$0xf]
        %v1271 = vld [vmem:[%s1219 + $0xcc] sm:$0xf]
        %v1272 = vld [vmem:[%s1219 + $0xd0] sm:$0xf]
        %v1273 = vld [vmem:[%s1219 + $0xd4] sm:$0xf]
        %v1274 = vld [vmem:[%s1219 + $0xd8] sm:$0xf]
        %v1275 = vld [vmem:[%s1219 + $0xdc] sm:$0xf]
        %v1276 = vld [vmem:[%s1219 + $0xe0] sm:$0xf]
        %v1277 = vld [vmem:[%s1219 + $0xe4] sm:$0xf]
        %v1278 = vld [vmem:[%s1219 + $0xe8] sm:$0xf]
        %v1279 = vld [vmem:[%s1219 + $0xec] sm:$0xf]
        %v1280 = vld [vmem:[%s1219 + $0xf0] sm:$0xf]
        %v1281 = vld [vmem:[%s1219 + $0xf4] sm:$0xf]
        %v1282 = vld [vmem:[%s1219 + $0xf8] sm:$0xf]
        %v1283 = vld [vmem:[%s1219 + $0xfc] sm:$0xf]
        %v1284 = vld [vmem:[%s1219 + $0x100] sm:$0xf]
        %v1285 = vld [vmem:[%s1219 + $0x104] sm:$0xf]
        %v1286 = vld [vmem:[%s1219 + $0x108] sm:$0xf]
        %v1287 = vld [vmem:[%s1219 + $0x10c] sm:$0xf]
        %v1288 = vld [vmem:[%s1219 + $0x110] sm:$0xf]
        %v1289 = vld [vmem:[%s1219 + $0x114] sm:$0xf]
        %v1290 = vld [vmem:[%s1219 + $0x118] sm:$0xf]
        %v1291 = vld [vmem:[%s1219 + $0x11c] sm:$0xf]
        %v1292 = vld [vmem:[%s1219 + $0x120] sm:$0xf]
        %v1293 = vld [vmem:[%s1219 + $0x124] sm:$0xf]
        %v1294 = vld [vmem:[%s1219 + $0x128] sm:$0xf]
        %v1295 = vld [vmem:[%s1219 + $0x12c] sm:$0xf]
        %v1296 = vld [vmem:[%s1219 + $0x130] sm:$0xf]
        %v1297 = vld [vmem:[%s1219 + $0x134] sm:$0xf]
        %v1298 = vld [vmem:[%s1219 + $0x138] sm:$0xf]
        %v1299 = vld [vmem:[%s1219 + $0x13c] sm:$0xf]
        %v1300 = vld [vmem:[%s1219 + $0x140] sm:$0xf]
        %v1301 = vld [vmem:[%s1219 + $0x144] sm:$0xf]
        %v1302 = vld [vmem:[%s1219 + $0x148] sm:$0xf]
        %v1303 = vld [vmem:[%s1219 + $0x14c] sm:$0xf]
        %v1304 = vld [vmem:[%s1219 + $0x150] sm:$0xf]
        %v1305 = vld [vmem:[%s1219 + $0x154] sm:$0xf]
        %v1306 = vld [vmem:[%s1219 + $0x158] sm:$0xf]
        %v1307 = vld [vmem:[%s1219 + $0x15c] sm:$0xf]
        %v1308 = vld [vmem:[%s1219 + $0x160] sm:$0xf]
        %v1309 = vld [vmem:[%s1219 + $0x164] sm:$0xf]
        %v1310 = vld [vmem:[%s1219 + $0x168] sm:$0xf]
        %v1311 = vld [vmem:[%s1219 + $0x16c] sm:$0xf]
        %v1312 = vld [vmem:[%s1219 + $0x170] sm:$0xf]
        %v1313 = vld [vmem:[%s1219 + $0x174] sm:$0xf]
        %v1314 = vld [vmem:[%s1219 + $0x178] sm:$0xf]
        %v1315 = vld [vmem:[%s1219 + $0x17c] sm:$0xf]
        %v1412 = vunpack.c.l.b16 %v1220
        %v1413 = vunpack.c.l.b16 %v1221
        %v1414 = vunpack.c.l.b16 %v1222
        %v1415 = vunpack.c.l.b16 %v1223
        %v1416 = vunpack.c.l.b16 %v1224
        %v1417 = vunpack.c.l.b16 %v1225
        %v1418 = vunpack.c.l.b16 %v1226
        %v1419 = vunpack.c.l.b16 %v1227
        %v1420 = vunpack.c.l.b16 %v1228
        %v1421 = vunpack.c.l.b16 %v1229
        %v1422 = vunpack.c.l.b16 %v1230
        %v1423 = vunpack.c.l.b16 %v1231
        %v1424 = vunpack.c.l.b16 %v1232
        %v1425 = vunpack.c.l.b16 %v1233
        %v1426 = vunpack.c.l.b16 %v1234
        %v1427 = vunpack.c.l.b16 %v1235
        %v1428 = vunpack.c.l.b16 %v1236
        %v1429 = vunpack.c.l.b16 %v1237
        %v1430 = vunpack.c.l.b16 %v1238
        %v1431 = vunpack.c.l.b16 %v1239
        %v1432 = vunpack.c.l.b16 %v1240
        %v1433 = vunpack.c.l.b16 %v1241
        %v1434 = vunpack.c.l.b16 %v1242
        %v1435 = vunpack.c.l.b16 %v1243
        %v1436 = vunpack.c.l.b16 %v1244
        %v1437 = vunpack.c.l.b16 %v1245
        %v1438 = vunpack.c.l.b16 %v1246
        %v1439 = vunpack.c.l.b16 %v1247
        %v1440 = vunpack.c.l.b16 %v1248
        %v1441 = vunpack.c.l.b16 %v1249
        %v1442 = vunpack.c.l.b16 %v1250
        %v1443 = vunpack.c.l.b16 %v1251
        %v1444 = vunpack.c.l.b16 %v1252
        %v1445 = vunpack.c.l.b16 %v1253
        %v1446 = vunpack.c.l.b16 %v1254
        %v1447 = vunpack.c.l.b16 %v1255
        %v1448 = vunpack.c.l.b16 %v1256
        %v1449 = vunpack.c.l.b16 %v1257
        %v1450 = vunpack.c.l.b16 %v1258
        %v1451 = vunpack.c.l.b16 %v1259
        %v1452 = vunpack.c.l.b16 %v1260
        %v1453 = vunpack.c.l.b16 %v1261
        %v1454 = vunpack.c.l.b16 %v1262
        %v1455 = vunpack.c.l.b16 %v1263
        %v1456 = vunpack.c.l.b16 %v1264
        %v1457 = vunpack.c.l.b16 %v1265
        %v1458 = vunpack.c.l.b16 %v1266
        %v1459 = vunpack.c.l.b16 %v1267
        %v1460 = vunpack.c.l.b16 %v1268
        %v1461 = vunpack.c.l.b16 %v1269
        %v1462 = vunpack.c.l.b16 %v1270
        %v1463 = vunpack.c.l.b16 %v1271
        %v1464 = vunpack.c.l.b16 %v1272
        %v1465 = vunpack.c.l.b16 %v1273
        %v1466 = vunpack.c.l.b16 %v1274
        %v1467 = vunpack.c.l.b16 %v1275
        %v1468 = vunpack.c.l.b16 %v1276
        %v1469 = vunpack.c.l.b16 %v1277
        %v1470 = vunpack.c.l.b16 %v1278
        %v1471 = vunpack.c.l.b16 %v1279
        %v1472 = vunpack.c.l.b16 %v1280
        %v1473 = vunpack.c.l.b16 %v1281
        %v1474 = vunpack.c.l.b16 %v1282
        %v1475 = vunpack.c.l.b16 %v1283
        %v1476 = vunpack.c.l.b16 %v1284
        %v1477 = vunpack.c.l.b16 %v1285
        %v1478 = vunpack.c.l.b16 %v1286
        %v1479 = vunpack.c.l.b16 %v1287
        %v1480 = vunpack.c.l.b16 %v1288
        %v1481 = vunpack.c.l.b16 %v1289
        %v1482 = vunpack.c.l.b16 %v1290
        %v1483 = vunpack.c.l.b16 %v1291
        %v1484 = vunpack.c.l.b16 %v1292
        %v1485 = vunpack.c.l.b16 %v1293
        %v1486 = vunpack.c.l.b16 %v1294
        %v1487 = vunpack.c.l.b16 %v1295
        %v1488 = vunpack.c.l.b16 %v1296
        %v1489 = vunpack.c.l.b16 %v1297
        %v1490 = vunpack.c.l.b16 %v1298
        %v1491 = vunpack.c.l.b16 %v1299
        %v1492 = vunpack.c.l.b16 %v1300
        %v1493 = vunpack.c.l.b16 %v1301
        %v1494 = vunpack.c.l.b16 %v1302
        %v1495 = vunpack.c.l.b16 %v1303
        %v1496 = vunpack.c.l.b16 %v1304
        %v1497 = vunpack.c.l.b16 %v1305
        %v1498 = vunpack.c.l.b16 %v1306
        %v1499 = vunpack.c.l.b16 %v1307
        %v1500 = vunpack.c.l.b16 %v1308
        %v1501 = vunpack.c.l.b16 %v1309
        %v1502 = vunpack.c.l.b16 %v1310
        %v1503 = vunpack.c.l.b16 %v1311
        %v1504 = vunpack.c.l.b16 %v1312
        %v1505 = vunpack.c.l.b16 %v1313
        %v1506 = vunpack.c.l.b16 %v1314
        %v1507 = vunpack.c.l.b16 %v1315
        %v1508 = vpack.c.b16 %v1413, %v1412
        %v1509 = vpack.c.b16 %v1415, %v1414
        %v1510 = vpack.c.b16 %v1417, %v1416
        %v1511 = vpack.c.b16 %v1419, %v1418
        %v1512 = vpack.c.b16 %v1421, %v1420
        %v1513 = vpack.c.b16 %v1423, %v1422
        %v1514 = vpack.c.b16 %v1425, %v1424
        %v1515 = vpack.c.b16 %v1427, %v1426
        %v1516 = vpack.c.b16 %v1429, %v1428
        %v1517 = vpack.c.b16 %v1431, %v1430
        %v1518 = vpack.c.b16 %v1433, %v1432
        %v1519 = vpack.c.b16 %v1435, %v1434
        %v1520 = vpack.c.b16 %v1437, %v1436
        %v1521 = vpack.c.b16 %v1439, %v1438
        %v1522 = vpack.c.b16 %v1441, %v1440
        %v1523 = vpack.c.b16 %v1443, %v1442
        %v1524 = vpack.c.b16 %v1445, %v1444
        %v1525 = vpack.c.b16 %v1447, %v1446
        %v1526 = vpack.c.b16 %v1449, %v1448
        %v1527 = vpack.c.b16 %v1451, %v1450
        %v1528 = vpack.c.b16 %v1453, %v1452
        %v1529 = vpack.c.b16 %v1455, %v1454
        %v1530 = vpack.c.b16 %v1457, %v1456
        %v1531 = vpack.c.b16 %v1459, %v1458
        %v1532 = vpack.c.b16 %v1461, %v1460
        %v1533 = vpack.c.b16 %v1463, %v1462
        %v1534 = vpack.c.b16 %v1465, %v1464
        %v1535 = vpack.c.b16 %v1467, %v1466
        %v1536 = vpack.c.b16 %v1469, %v1468
        %v1537 = vpack.c.b16 %v1471, %v1470
        %v1538 = vpack.c.b16 %v1473, %v1472
        %v1539 = vpack.c.b16 %v1475, %v1474
        %v1540 = vpack.c.b16 %v1477, %v1476
        %v1541 = vpack.c.b16 %v1479, %v1478
        %v1542 = vpack.c.b16 %v1481, %v1480
        %v1543 = vpack.c.b16 %v1483, %v1482
        %v1544 = vpack.c.b16 %v1485, %v1484
        %v1545 = vpack.c.b16 %v1487, %v1486
        %v1546 = vpack.c.b16 %v1489, %v1488
        %v1547 = vpack.c.b16 %v1491, %v1490
        %v1548 = vpack.c.b16 %v1493, %v1492
        %v1549 = vpack.c.b16 %v1495, %v1494
        %v1550 = vpack.c.b16 %v1497, %v1496
        %v1551 = vpack.c.b16 %v1499, %v1498
        %v1552 = vpack.c.b16 %v1501, %v1500
        %v1553 = vpack.c.b16 %v1503, %v1502
        %v1554 = vpack.c.b16 %v1505, %v1504
        %v1555 = vpack.c.b16 %v1507, %v1506
        %1604 = vmatpush.bf16.msra.mxu0 %v1515
        %1605 = vmatpush.bf16.msra.mxu0 %v1514
        %1606 = vmatpush.bf16.msra.mxu0 %v1513
        %1607 = vmatpush.bf16.msra.mxu0 %v1512
        %1608 = vmatpush.bf16.msra.mxu0 %v1511
        %1609 = vmatpush.bf16.msra.mxu0 %v1510
        %1610 = vmatpush.bf16.msra.mxu0 %v1509
        %1611 = vmatpush.bf16.msra.mxu0 %v1508
        %1612 = vmatmul.bf16.gmra.mxu0 %v1195
        %v1613 = vpop.f32.mrf.mxu0
        %v1614 = vadd.f32 0.0, %v1613
        %v1615 = vpop.f32.mrf.mxu0
        %v1616 = vadd.f32 0.0, %v1615
        %1617 = vmatmul.bf16.gmra.mxu0 %v1201
        %v1618 = vpop.f32.mrf.mxu0
        %v1619 = vadd.f32 0.0, %v1618
        %v1620 = vpop.f32.mrf.mxu0
        %v1621 = vadd.f32 0.0, %v1620
        %1622 = vmatmul.bf16.gmra.mxu0 %v1207
        %v1623 = vpop.f32.mrf.mxu0
        %v1624 = vadd.f32 0.0, %v1623
        %v1625 = vpop.f32.mrf.mxu0
        %v1626 = vadd.f32 0.0, %v1625
        %1627 = vmatmul.bf16.gmra.mxu0 %v1213
        %v1628 = vpop.f32.mrf.mxu0
        %v1629 = vadd.f32 0.0, %v1628
        %v1630 = vpop.f32.mrf.mxu0
        %v1631 = vadd.f32 0.0, %v1630
        %1632 = vdwg.mxu0
        %1633 = vmatpush.bf16.msra.mxu0 %v1523
        %1634 = vmatpush.bf16.msra.mxu0 %v1522
        %1635 = vmatpush.bf16.msra.mxu0 %v1521
        %1636 = vmatpush.bf16.msra.mxu0 %v1520
        %1637 = vmatpush.bf16.msra.mxu0 %v1519
        %1638 = vmatpush.bf16.msra.mxu0 %v1518
        %1639 = vmatpush.bf16.msra.mxu0 %v1517
        %1640 = vmatpush.bf16.msra.mxu0 %v1516
        %1641 = vmatmul.bf16.gmra.mxu0 %v1196
        %v1642 = vpop.f32.mrf.mxu0
        %v1643 = vadd.f32 %v1614, %v1642
        %v1644 = vpop.f32.mrf.mxu0
        %v1645 = vadd.f32 %v1616, %v1644
        %1646 = vmatmul.bf16.gmra.mxu0 %v1202
        %v1647 = vpop.f32.mrf.mxu0
        %v1648 = vadd.f32 %v1619, %v1647
        %v1649 = vpop.f32.mrf.mxu0
        %v1650 = vadd.f32 %v1621, %v1649
        %1651 = vmatmul.bf16.gmra.mxu0 %v1208
        %v1652 = vpop.f32.mrf.mxu0
        %v1653 = vadd.f32 %v1624, %v1652
        %v1654 = vpop.f32.mrf.mxu0
        %v1655 = vadd.f32 %v1626, %v1654
        %1656 = vmatmul.bf16.gmra.mxu0 %v1214
        %v1657 = vpop.f32.mrf.mxu0
        %v1658 = vadd.f32 %v1629, %v1657
        %v1659 = vpop.f32.mrf.mxu0
        %v1660 = vadd.f32 %v1631, %v1659
        %1661 = vdwg.mxu0
        %1662 = vmatpush.bf16.msra.mxu0 %v1531
        %1663 = vmatpush.bf16.msra.mxu0 %v1530
        %1664 = vmatpush.bf16.msra.mxu0 %v1529
        %1665 = vmatpush.bf16.msra.mxu0 %v1528
        %1666 = vmatpush.bf16.msra.mxu0 %v1527
        %1667 = vmatpush.bf16.msra.mxu0 %v1526
        %1668 = vmatpush.bf16.msra.mxu0 %v1525
        %1669 = vmatpush.bf16.msra.mxu0 %v1524
        %1670 = vmatmul.bf16.gmra.mxu0 %v1197
        %v1671 = vpop.f32.mrf.mxu0
        %v1672 = vadd.f32 %v1643, %v1671
        %v1673 = vpop.f32.mrf.mxu0
        %v1674 = vadd.f32 %v1645, %v1673
        %1675 = vmatmul.bf16.gmra.mxu0 %v1203
        %v1676 = vpop.f32.mrf.mxu0
        %v1677 = vadd.f32 %v1648, %v1676
        %v1678 = vpop.f32.mrf.mxu0
        %v1679 = vadd.f32 %v1650, %v1678
        %1680 = vmatmul.bf16.gmra.mxu0 %v1209
        %v1681 = vpop.f32.mrf.mxu0
        %v1682 = vadd.f32 %v1653, %v1681
        %v1683 = vpop.f32.mrf.mxu0
        %v1684 = vadd.f32 %v1655, %v1683
        %1685 = vmatmul.bf16.gmra.mxu0 %v1215
        %v1686 = vpop.f32.mrf.mxu0
        %v1687 = vadd.f32 %v1658, %v1686
        %v1688 = vpop.f32.mrf.mxu0
        %v1689 = vadd.f32 %v1660, %v1688
        %1690 = vdwg.mxu0
        %1691 = vmatpush.bf16.msra.mxu0 %v1539
        %1692 = vmatpush.bf16.msra.mxu0 %v1538
        %1693 = vmatpush.bf16.msra.mxu0 %v1537
        %1694 = vmatpush.bf16.msra.mxu0 %v1536
        %1695 = vmatpush.bf16.msra.mxu0 %v1535
        %1696 = vmatpush.bf16.msra.mxu0 %v1534
        %1697 = vmatpush.bf16.msra.mxu0 %v1533
        %1698 = vmatpush.bf16.msra.mxu0 %v1532
        %1699 = vmatmul.bf16.gmra.mxu0 %v1198
        %v1700 = vpop.f32.mrf.mxu0
        %v1701 = vadd.f32 %v1672, %v1700
        %v1702 = vpop.f32.mrf.mxu0
        %v1703 = vadd.f32 %v1674, %v1702
        %1704 = vmatmul.bf16.gmra.mxu0 %v1204
        %v1705 = vpop.f32.mrf.mxu0
        %v1706 = vadd.f32 %v1677, %v1705
        %v1707 = vpop.f32.mrf.mxu0
        %v1708 = vadd.f32 %v1679, %v1707
        %1709 = vmatmul.bf16.gmra.mxu0 %v1210
        %v1710 = vpop.f32.mrf.mxu0
        %v1711 = vadd.f32 %v1682, %v1710
        %v1712 = vpop.f32.mrf.mxu0
        %v1713 = vadd.f32 %v1684, %v1712
        %1714 = vmatmul.bf16.gmra.mxu0 %v1216
        %v1715 = vpop.f32.mrf.mxu0
        %v1716 = vadd.f32 %v1687, %v1715
        %v1717 = vpop.f32.mrf.mxu0
        %v1718 = vadd.f32 %v1689, %v1717
        %1719 = vdwg.mxu0
        %1720 = vmatpush.bf16.msra.mxu0 %v1547
        %1721 = vmatpush.bf16.msra.mxu0 %v1546
        %1722 = vmatpush.bf16.msra.mxu0 %v1545
        %1723 = vmatpush.bf16.msra.mxu0 %v1544
        %1724 = vmatpush.bf16.msra.mxu0 %v1543
        %1725 = vmatpush.bf16.msra.mxu0 %v1542
        %1726 = vmatpush.bf16.msra.mxu0 %v1541
        %1727 = vmatpush.bf16.msra.mxu0 %v1540
        %1728 = vmatmul.bf16.gmra.mxu0 %v1199
        %v1729 = vpop.f32.mrf.mxu0
        %v1730 = vadd.f32 %v1701, %v1729
        %v1731 = vpop.f32.mrf.mxu0
        %v1732 = vadd.f32 %v1703, %v1731
        %1733 = vmatmul.bf16.gmra.mxu0 %v1205
        %v1734 = vpop.f32.mrf.mxu0
        %v1735 = vadd.f32 %v1706, %v1734
        %v1736 = vpop.f32.mrf.mxu0
        %v1737 = vadd.f32 %v1708, %v1736
        %1738 = vmatmul.bf16.gmra.mxu0 %v1211
        %v1739 = vpop.f32.mrf.mxu0
        %v1740 = vadd.f32 %v1711, %v1739
        %v1741 = vpop.f32.mrf.mxu0
        %v1742 = vadd.f32 %v1713, %v1741
        %1743 = vmatmul.bf16.gmra.mxu0 %v1217
        %v1744 = vpop.f32.mrf.mxu0
        %v1745 = vadd.f32 %v1716, %v1744
        %v1746 = vpop.f32.mrf.mxu0
        %v1747 = vadd.f32 %v1718, %v1746
        %1748 = vdwg.mxu0
        %1749 = vmatpush.bf16.msra.mxu0 %v1555
        %1750 = vmatpush.bf16.msra.mxu0 %v1554
        %1751 = vmatpush.bf16.msra.mxu0 %v1553
        %1752 = vmatpush.bf16.msra.mxu0 %v1552
        %1753 = vmatpush.bf16.msra.mxu0 %v1551
        %1754 = vmatpush.bf16.msra.mxu0 %v1550
        %1755 = vmatpush.bf16.msra.mxu0 %v1549
        %1756 = vmatpush.bf16.msra.mxu0 %v1548
        %1757 = vmatmul.bf16.gmra.mxu0 %v1200
        %v1758 = vpop.f32.mrf.mxu0
        %v1759 = vadd.f32 %v1730, %v1758
        %v1760 = vpop.f32.mrf.mxu0
        %v1761 = vadd.f32 %v1732, %v1760
        %1762 = vmatmul.bf16.gmra.mxu0 %v1206
        %v1763 = vpop.f32.mrf.mxu0
        %v1764 = vadd.f32 %v1735, %v1763
        %v1765 = vpop.f32.mrf.mxu0
        %v1766 = vadd.f32 %v1737, %v1765
        %1767 = vmatmul.bf16.gmra.mxu0 %v1212
        %v1768 = vpop.f32.mrf.mxu0
        %v1769 = vadd.f32 %v1740, %v1768
        %v1770 = vpop.f32.mrf.mxu0
        %v1771 = vadd.f32 %v1742, %v1770
        %1772 = vmatmul.bf16.gmra.mxu0 %v1218
        %v1773 = vpop.f32.mrf.mxu0
        %v1774 = vadd.f32 %v1745, %v1773
        %v1775 = vpop.f32.mrf.mxu0
        %v1776 = vadd.f32 %v1747, %v1775
        %1777 = vdwg.mxu0
        %v1874 = vunpack.c.l.b16 %v907
        %v1875 = vunpack.c.l.b16 %v908
        %v1876 = vunpack.c.l.b16 %v909
        %v1877 = vunpack.c.l.b16 %v910
        %v1878 = vunpack.c.l.b16 %v911
        %v1879 = vunpack.c.l.b16 %v912
        %v1880 = vunpack.c.l.b16 %v913
        %v1881 = vunpack.c.l.b16 %v914
        %v1882 = vunpack.c.l.b16 %v915
        %v1883 = vunpack.c.l.b16 %v916
        %v1884 = vunpack.c.l.b16 %v917
        %v1885 = vunpack.c.l.b16 %v918
        %v1886 = vunpack.c.l.b16 %v919
        %v1887 = vunpack.c.l.b16 %v920
        %v1888 = vunpack.c.l.b16 %v921
        %v1889 = vunpack.c.l.b16 %v922
        %v1890 = vunpack.c.l.b16 %v923
        %v1891 = vunpack.c.l.b16 %v924
        %v1892 = vunpack.c.l.b16 %v925
        %v1893 = vunpack.c.l.b16 %v926
        %v1894 = vunpack.c.l.b16 %v927
        %v1895 = vunpack.c.l.b16 %v928
        %v1896 = vunpack.c.l.b16 %v929
        %v1897 = vunpack.c.l.b16 %v930
        %v1898 = vunpack.c.l.b16 %v931
        %v1899 = vunpack.c.l.b16 %v932
        %v1900 = vunpack.c.l.b16 %v933
        %v1901 = vunpack.c.l.b16 %v934
        %v1902 = vunpack.c.l.b16 %v935
        %v1903 = vunpack.c.l.b16 %v936
        %v1904 = vunpack.c.l.b16 %v937
        %v1905 = vunpack.c.l.b16 %v938
        %v1906 = vunpack.c.l.b16 %v939
        %v1907 = vunpack.c.l.b16 %v940
        %v1908 = vunpack.c.l.b16 %v941
        %v1909 = vunpack.c.l.b16 %v942
        %v1910 = vunpack.c.l.b16 %v943
        %v1911 = vunpack.c.l.b16 %v944
        %v1912 = vunpack.c.l.b16 %v945
        %v1913 = vunpack.c.l.b16 %v946
        %v1914 = vunpack.c.l.b16 %v947
        %v1915 = vunpack.c.l.b16 %v948
        %v1916 = vunpack.c.l.b16 %v949
        %v1917 = vunpack.c.l.b16 %v950
        %v1918 = vunpack.c.l.b16 %v951
        %v1919 = vunpack.c.l.b16 %v952
        %v1920 = vunpack.c.l.b16 %v953
        %v1921 = vunpack.c.l.b16 %v954
        %v1922 = vunpack.c.l.b16 %v955
        %v1923 = vunpack.c.l.b16 %v956
        %v1924 = vunpack.c.l.b16 %v957
        %v1925 = vunpack.c.l.b16 %v958
        %v1926 = vunpack.c.l.b16 %v959
        %v1927 = vunpack.c.l.b16 %v960
        %v1928 = vunpack.c.l.b16 %v961
        %v1929 = vunpack.c.l.b16 %v962
        %v1930 = vunpack.c.l.b16 %v963
        %v1931 = vunpack.c.l.b16 %v964
        %v1932 = vunpack.c.l.b16 %v965
        %v1933 = vunpack.c.l.b16 %v966
        %v1934 = vunpack.c.l.b16 %v967
        %v1935 = vunpack.c.l.b16 %v968
        %v1936 = vunpack.c.l.b16 %v969
        %v1937 = vunpack.c.l.b16 %v970
        %v1938 = vunpack.c.l.b16 %v971
        %v1939 = vunpack.c.l.b16 %v972
        %v1940 = vunpack.c.l.b16 %v973
        %v1941 = vunpack.c.l.b16 %v974
        %v1942 = vunpack.c.l.b16 %v975
        %v1943 = vunpack.c.l.b16 %v976
        %v1944 = vunpack.c.l.b16 %v977
        %v1945 = vunpack.c.l.b16 %v978
        %v1946 = vunpack.c.l.b16 %v979
        %v1947 = vunpack.c.l.b16 %v980
        %v1948 = vunpack.c.l.b16 %v981
        %v1949 = vunpack.c.l.b16 %v982
        %v1950 = vunpack.c.l.b16 %v983
        %v1951 = vunpack.c.l.b16 %v984
        %v1952 = vunpack.c.l.b16 %v985
        %v1953 = vunpack.c.l.b16 %v986
        %v1954 = vunpack.c.l.b16 %v987
        %v1955 = vunpack.c.l.b16 %v988
        %v1956 = vunpack.c.l.b16 %v989
        %v1957 = vunpack.c.l.b16 %v990
        %v1958 = vunpack.c.l.b16 %v991
        %v1959 = vunpack.c.l.b16 %v992
        %v1960 = vunpack.c.l.b16 %v993
        %v1961 = vunpack.c.l.b16 %v994
        %v1962 = vunpack.c.l.b16 %v995
        %v1963 = vunpack.c.l.b16 %v996
        %v1964 = vunpack.c.l.b16 %v997
        %v1965 = vunpack.c.l.b16 %v998
        %v1966 = vunpack.c.l.b16 %v999
        %v1967 = vunpack.c.l.b16 %v1000
        %v1968 = vunpack.c.l.b16 %v1001
        %v1969 = vunpack.c.l.b16 %v1002
        %v1970 = vpack.c.b16 %v1875, %v1874
        %v1971 = vpack.c.b16 %v1877, %v1876
        %v1972 = vpack.c.b16 %v1879, %v1878
        %v1973 = vpack.c.b16 %v1881, %v1880
        %v1974 = vpack.c.b16 %v1883, %v1882
        %v1975 = vpack.c.b16 %v1885, %v1884
        %v1976 = vpack.c.b16 %v1887, %v1886
        %v1977 = vpack.c.b16 %v1889, %v1888
        %v1978 = vpack.c.b16 %v1891, %v1890
        %v1979 = vpack.c.b16 %v1893, %v1892
        %v1980 = vpack.c.b16 %v1895, %v1894
        %v1981 = vpack.c.b16 %v1897, %v1896
        %v1982 = vpack.c.b16 %v1899, %v1898
        %v1983 = vpack.c.b16 %v1901, %v1900
        %v1984 = vpack.c.b16 %v1903, %v1902
        %v1985 = vpack.c.b16 %v1905, %v1904
        %v1986 = vpack.c.b16 %v1907, %v1906
        %v1987 = vpack.c.b16 %v1909, %v1908
        %v1988 = vpack.c.b16 %v1911, %v1910
        %v1989 = vpack.c.b16 %v1913, %v1912
        %v1990 = vpack.c.b16 %v1915, %v1914
        %v1991 = vpack.c.b16 %v1917, %v1916
        %v1992 = vpack.c.b16 %v1919, %v1918
        %v1993 = vpack.c.b16 %v1921, %v1920
        %v1994 = vpack.c.b16 %v1923, %v1922
        %v1995 = vpack.c.b16 %v1925, %v1924
        %v1996 = vpack.c.b16 %v1927, %v1926
        %v1997 = vpack.c.b16 %v1929, %v1928
        %v1998 = vpack.c.b16 %v1931, %v1930
        %v1999 = vpack.c.b16 %v1933, %v1932
        %v2000 = vpack.c.b16 %v1935, %v1934
        %v2001 = vpack.c.b16 %v1937, %v1936
        %v2002 = vpack.c.b16 %v1939, %v1938
        %v2003 = vpack.c.b16 %v1941, %v1940
        %v2004 = vpack.c.b16 %v1943, %v1942
        %v2005 = vpack.c.b16 %v1945, %v1944
        %v2006 = vpack.c.b16 %v1947, %v1946
        %v2007 = vpack.c.b16 %v1949, %v1948
        %v2008 = vpack.c.b16 %v1951, %v1950
        %v2009 = vpack.c.b16 %v1953, %v1952
        %v2010 = vpack.c.b16 %v1955, %v1954
        %v2011 = vpack.c.b16 %v1957, %v1956
        %v2012 = vpack.c.b16 %v1959, %v1958
        %v2013 = vpack.c.b16 %v1961, %v1960
        %v2014 = vpack.c.b16 %v1963, %v1962
        %v2015 = vpack.c.b16 %v1965, %v1964
        %v2016 = vpack.c.b16 %v1967, %v1966
        %v2017 = vpack.c.b16 %v1969, %v1968
        %2066 = vmatpush.bf16.msra.mxu0 %v1977
        %2067 = vmatpush.bf16.msra.mxu0 %v1976
        %2068 = vmatpush.bf16.msra.mxu0 %v1975
        %2069 = vmatpush.bf16.msra.mxu0 %v1974
        %2070 = vmatpush.bf16.msra.mxu0 %v1973
        %2071 = vmatpush.bf16.msra.mxu0 %v1972
        %2072 = vmatpush.bf16.msra.mxu0 %v1971
        %2073 = vmatpush.bf16.msra.mxu0 %v1970
        %2074 = vmatmul.bf16.gmra.mxu0 %v883
        %v2075 = vpop.f32.mrf.mxu0
        %v2076 = vadd.f32 %v1759, %v2075
        %v2077 = vpop.f32.mrf.mxu0
        %v2078 = vadd.f32 %v1761, %v2077
        %2079 = vmatmul.bf16.gmra.mxu0 %v889
        %v2080 = vpop.f32.mrf.mxu0
        %v2081 = vadd.f32 %v1764, %v2080
        %v2082 = vpop.f32.mrf.mxu0
        %v2083 = vadd.f32 %v1766, %v2082
        %2084 = vmatmul.bf16.gmra.mxu0 %v895
        %v2085 = vpop.f32.mrf.mxu0
        %v2086 = vadd.f32 %v1769, %v2085
        %v2087 = vpop.f32.mrf.mxu0
        %v2088 = vadd.f32 %v1771, %v2087
        %2089 = vmatmul.bf16.gmra.mxu0 %v901
        %v2090 = vpop.f32.mrf.mxu0
        %v2091 = vadd.f32 %v1774, %v2090
        %v2092 = vpop.f32.mrf.mxu0
        %v2093 = vadd.f32 %v1776, %v2092
        %2094 = vdwg.mxu0
        %2095 = vmatpush.bf16.msra.mxu0 %v1985
        %2096 = vmatpush.bf16.msra.mxu0 %v1984
        %2097 = vmatpush.bf16.msra.mxu0 %v1983
        %2098 = vmatpush.bf16.msra.mxu0 %v1982
        %2099 = vmatpush.bf16.msra.mxu0 %v1981
        %2100 = vmatpush.bf16.msra.mxu0 %v1980
        %2101 = vmatpush.bf16.msra.mxu0 %v1979
        %2102 = vmatpush.bf16.msra.mxu0 %v1978
        %2103 = vmatmul.bf16.gmra.mxu0 %v884
        %v2104 = vpop.f32.mrf.mxu0
        %v2105 = vadd.f32 %v2076, %v2104
        %v2106 = vpop.f32.mrf.mxu0
        %v2107 = vadd.f32 %v2078, %v2106
        %2108 = vmatmul.bf16.gmra.mxu0 %v890
        %v2109 = vpop.f32.mrf.mxu0
        %v2110 = vadd.f32 %v2081, %v2109
        %v2111 = vpop.f32.mrf.mxu0
        %v2112 = vadd.f32 %v2083, %v2111
        %2113 = vmatmul.bf16.gmra.mxu0 %v896
        %v2114 = vpop.f32.mrf.mxu0
        %v2115 = vadd.f32 %v2086, %v2114
        %v2116 = vpop.f32.mrf.mxu0
        %v2117 = vadd.f32 %v2088, %v2116
        %2118 = vmatmul.bf16.gmra.mxu0 %v902
        %v2119 = vpop.f32.mrf.mxu0
        %v2120 = vadd.f32 %v2091, %v2119
        %v2121 = vpop.f32.mrf.mxu0
        %v2122 = vadd.f32 %v2093, %v2121
        %2123 = vdwg.mxu0
        %2124 = vmatpush.bf16.msra.mxu0 %v1993
        %2125 = vmatpush.bf16.msra.mxu0 %v1992
        %2126 = vmatpush.bf16.msra.mxu0 %v1991
        %2127 = vmatpush.bf16.msra.mxu0 %v1990
        %2128 = vmatpush.bf16.msra.mxu0 %v1989
        %2129 = vmatpush.bf16.msra.mxu0 %v1988
        %2130 = vmatpush.bf16.msra.mxu0 %v1987
        %2131 = vmatpush.bf16.msra.mxu0 %v1986
        %2132 = vmatmul.bf16.gmra.mxu0 %v885
        %v2133 = vpop.f32.mrf.mxu0
        %v2134 = vadd.f32 %v2105, %v2133
        %v2135 = vpop.f32.mrf.mxu0
        %v2136 = vadd.f32 %v2107, %v2135
        %2137 = vmatmul.bf16.gmra.mxu0 %v891
        %v2138 = vpop.f32.mrf.mxu0
        %v2139 = vadd.f32 %v2110, %v2138
        %v2140 = vpop.f32.mrf.mxu0
        %v2141 = vadd.f32 %v2112, %v2140
        %2142 = vmatmul.bf16.gmra.mxu0 %v897
        %v2143 = vpop.f32.mrf.mxu0
        %v2144 = vadd.f32 %v2115, %v2143
        %v2145 = vpop.f32.mrf.mxu0
        %v2146 = vadd.f32 %v2117, %v2145
        %2147 = vmatmul.bf16.gmra.mxu0 %v903
        %v2148 = vpop.f32.mrf.mxu0
        %v2149 = vadd.f32 %v2120, %v2148
        %v2150 = vpop.f32.mrf.mxu0
        %v2151 = vadd.f32 %v2122, %v2150
        %2152 = vdwg.mxu0
        %2153 = vmatpush.bf16.msra.mxu0 %v2001
        %2154 = vmatpush.bf16.msra.mxu0 %v2000
        %2155 = vmatpush.bf16.msra.mxu0 %v1999
        %2156 = vmatpush.bf16.msra.mxu0 %v1998
        %2157 = vmatpush.bf16.msra.mxu0 %v1997
        %2158 = vmatpush.bf16.msra.mxu0 %v1996
        %2159 = vmatpush.bf16.msra.mxu0 %v1995
        %2160 = vmatpush.bf16.msra.mxu0 %v1994
        %2161 = vmatmul.bf16.gmra.mxu0 %v886
        %v2162 = vpop.f32.mrf.mxu0
        %v2163 = vadd.f32 %v2134, %v2162
        %v2164 = vpop.f32.mrf.mxu0
        %v2165 = vadd.f32 %v2136, %v2164
        %2166 = vmatmul.bf16.gmra.mxu0 %v892
        %v2167 = vpop.f32.mrf.mxu0
        %v2168 = vadd.f32 %v2139, %v2167
        %v2169 = vpop.f32.mrf.mxu0
        %v2170 = vadd.f32 %v2141, %v2169
        %2171 = vmatmul.bf16.gmra.mxu0 %v898
        %v2172 = vpop.f32.mrf.mxu0
        %v2173 = vadd.f32 %v2144, %v2172
        %v2174 = vpop.f32.mrf.mxu0
        %v2175 = vadd.f32 %v2146, %v2174
        %2176 = vmatmul.bf16.gmra.mxu0 %v904
        %v2177 = vpop.f32.mrf.mxu0
        %v2178 = vadd.f32 %v2149, %v2177
        %v2179 = vpop.f32.mrf.mxu0
        %v2180 = vadd.f32 %v2151, %v2179
        %2181 = vdwg.mxu0
        %2182 = vmatpush.bf16.msra.mxu0 %v2009
        %2183 = vmatpush.bf16.msra.mxu0 %v2008
        %2184 = vmatpush.bf16.msra.mxu0 %v2007
        %2185 = vmatpush.bf16.msra.mxu0 %v2006
        %2186 = vmatpush.bf16.msra.mxu0 %v2005
        %2187 = vmatpush.bf16.msra.mxu0 %v2004
        %2188 = vmatpush.bf16.msra.mxu0 %v2003
        %2189 = vmatpush.bf16.msra.mxu0 %v2002
        %2190 = vmatmul.bf16.gmra.mxu0 %v887
        %v2191 = vpop.f32.mrf.mxu0
        %v2192 = vadd.f32 %v2163, %v2191
        %v2193 = vpop.f32.mrf.mxu0
        %v2194 = vadd.f32 %v2165, %v2193
        %2195 = vmatmul.bf16.gmra.mxu0 %v893
        %v2196 = vpop.f32.mrf.mxu0
        %v2197 = vadd.f32 %v2168, %v2196
        %v2198 = vpop.f32.mrf.mxu0
        %v2199 = vadd.f32 %v2170, %v2198
        %2200 = vmatmul.bf16.gmra.mxu0 %v899
        %v2201 = vpop.f32.mrf.mxu0
        %v2202 = vadd.f32 %v2173, %v2201
        %v2203 = vpop.f32.mrf.mxu0
        %v2204 = vadd.f32 %v2175, %v2203
        %2205 = vmatmul.bf16.gmra.mxu0 %v905
        %v2206 = vpop.f32.mrf.mxu0
        %v2207 = vadd.f32 %v2178, %v2206
        %v2208 = vpop.f32.mrf.mxu0
        %v2209 = vadd.f32 %v2180, %v2208
        %2210 = vdwg.mxu0
        %2211 = vmatpush.bf16.msra.mxu0 %v2017
        %2212 = vmatpush.bf16.msra.mxu0 %v2016
        %2213 = vmatpush.bf16.msra.mxu0 %v2015
        %2214 = vmatpush.bf16.msra.mxu0 %v2014
        %2215 = vmatpush.bf16.msra.mxu0 %v2013
        %2216 = vmatpush.bf16.msra.mxu0 %v2012
        %2217 = vmatpush.bf16.msra.mxu0 %v2011
        %2218 = vmatpush.bf16.msra.mxu0 %v2010
        %2219 = vmatmul.bf16.gmra.mxu0 %v888
        %v2220 = vpop.f32.mrf.mxu0
        %v2221 = vadd.f32 %v2192, %v2220
        %v2222 = vpop.f32.mrf.mxu0
        %v2223 = vadd.f32 %v2194, %v2222
        %2224 = vmatmul.bf16.gmra.mxu0 %v894
        %v2225 = vpop.f32.mrf.mxu0
        %v2226 = vadd.f32 %v2197, %v2225
        %v2227 = vpop.f32.mrf.mxu0
        %v2228 = vadd.f32 %v2199, %v2227
        %2229 = vmatmul.bf16.gmra.mxu0 %v900
        %v2230 = vpop.f32.mrf.mxu0
        %v2231 = vadd.f32 %v2202, %v2230
        %v2232 = vpop.f32.mrf.mxu0
        %v2233 = vadd.f32 %v2204, %v2232
        %2234 = vmatmul.bf16.gmra.mxu0 %v906
        %v2235 = vpop.f32.mrf.mxu0
        %v2236 = vadd.f32 %v2207, %v2235
        %v2237 = vpop.f32.mrf.mxu0
        %v2238 = vadd.f32 %v2209, %v2237
        %2239 = vdwg.mxu0
        %s2240 = scalar_lea.vmem [#allocation2], 64
        %v2241 = vld [vmem:[%s2240] sm:$0xff]
        %v2242 = vld [vmem:[%s2240 + $0x8] sm:$0xff]
        %v2243 = vld [vmem:[%s2240 + $0x10] sm:$0x3]
        %v2244 = vld [vmem:[%s2240 + $0x18] sm:$0x3]
        %v2245 = vld [vmem:[%s2240 + $0x20] sm:$0xff]
        %v2246 = vld [vmem:[%s2240 + $0x28] sm:$0xff]
        %v2247 = vld [vmem:[%s2240 + $0x30] sm:$0x3]
        %v2248 = vld [vmem:[%s2240 + $0x38] sm:$0x3]
        %v2249 = vld [vmem:[%s2240 + $0x40] sm:$0xff]
        %v2250 = vld [vmem:[%s2240 + $0x48] sm:$0xff]
        %v2251 = vld [vmem:[%s2240 + $0x50] sm:$0x3]
        %v2252 = vld [vmem:[%s2240 + $0x58] sm:$0x3]
        %v2253 = vld [vmem:[%s2240 + $0x60] sm:$0xff]
        %v2254 = vld [vmem:[%s2240 + $0x68] sm:$0xff]
        %v2255 = vld [vmem:[%s2240 + $0x70] sm:$0x3]
        %v2256 = vld [vmem:[%s2240 + $0x78] sm:$0x3]
        %v2257 = vld [vmem:[%s2240 + $0x80] sm:$0xff]
        %v2258 = vld [vmem:[%s2240 + $0x88] sm:$0xff]
        %v2259 = vld [vmem:[%s2240 + $0x90] sm:$0x3]
        %v2260 = vld [vmem:[%s2240 + $0x98] sm:$0x3]
        %v2261 = vld [vmem:[%s2240 + $0xa0] sm:$0xff]
        %v2262 = vld [vmem:[%s2240 + $0xa8] sm:$0xff]
        %v2263 = vld [vmem:[%s2240 + $0xb0] sm:$0x3]
        %v2264 = vld [vmem:[%s2240 + $0xb8] sm:$0x3]
        %v2265 = vld [vmem:[%s2240 + $0xc0] sm:$0xff]
        %v2266 = vld [vmem:[%s2240 + $0xc8] sm:$0xff]
        %v2267 = vld [vmem:[%s2240 + $0xd0] sm:$0x3]
        %v2268 = vld [vmem:[%s2240 + $0xd8] sm:$0x3]
        %v2269 = vld [vmem:[%s2240 + $0xe0] sm:$0xff]
        %v2270 = vld [vmem:[%s2240 + $0xe8] sm:$0xff]
        %v2271 = vld [vmem:[%s2240 + $0xf0] sm:$0x3]
        %v2272 = vld [vmem:[%s2240 + $0xf8] sm:$0x3]
        %v2305 = vrot.slane %v2241, 1
        %v2306 = vrot.slane %v2243, 1
        %v2307 = vsel %vm753, %v2305, %v2306
        %v2308 = vrot.slane %v2242, 1
        %v2309 = vrot.slane %v2244, 1
        %v2310 = vsel %vm753, %v2308, %v2309
        %v2311 = vrot.slane %v2245, 1
        %v2312 = vrot.slane %v2247, 1
        %v2313 = vsel %vm753, %v2311, %v2312
        %v2314 = vrot.slane %v2246, 1
        %v2315 = vrot.slane %v2248, 1
        %v2316 = vsel %vm753, %v2314, %v2315
        %v2317 = vrot.slane %v2249, 1
        %v2318 = vrot.slane %v2251, 1
        %v2319 = vsel %vm753, %v2317, %v2318
        %v2320 = vrot.slane %v2250, 1
        %v2321 = vrot.slane %v2252, 1
        %v2322 = vsel %vm753, %v2320, %v2321
        %v2323 = vrot.slane %v2253, 1
        %v2324 = vrot.slane %v2255, 1
        %v2325 = vsel %vm753, %v2323, %v2324
        %v2326 = vrot.slane %v2254, 1
        %v2327 = vrot.slane %v2256, 1
        %v2328 = vsel %vm753, %v2326, %v2327
        %v2329 = vrot.slane %v2257, 1
        %v2330 = vrot.slane %v2259, 1
        %v2331 = vsel %vm753, %v2329, %v2330
        %v2332 = vrot.slane %v2258, 1
        %v2333 = vrot.slane %v2260, 1
        %v2334 = vsel %vm753, %v2332, %v2333
        %v2335 = vrot.slane %v2261, 1
        %v2336 = vrot.slane %v2263, 1
        %v2337 = vsel %vm753, %v2335, %v2336
        %v2338 = vrot.slane %v2262, 1
        %v2339 = vrot.slane %v2264, 1
        %v2340 = vsel %vm753, %v2338, %v2339
        %v2341 = vrot.slane %v2265, 1
        %v2342 = vrot.slane %v2267, 1
        %v2343 = vsel %vm753, %v2341, %v2342
        %v2344 = vrot.slane %v2266, 1
        %v2345 = vrot.slane %v2268, 1
        %v2346 = vsel %vm753, %v2344, %v2345
        %v2347 = vrot.slane %v2269, 1
        %v2348 = vrot.slane %v2271, 1
        %v2349 = vsel %vm753, %v2347, %v2348
        %v2350 = vrot.slane %v2270, 1
        %v2351 = vrot.slane %v2272, 1
        %v2352 = vsel %vm753, %v2350, %v2351
        %v2369 = vrot.slane %v2241, 2
        %v2370 = vrot.slane %v2243, 2
        %v2371 = vsel %vm818, %v2369, %v2370
        %v2372 = vrot.slane %v2242, 2
        %v2373 = vrot.slane %v2244, 2
        %v2374 = vsel %vm818, %v2372, %v2373
        %v2375 = vrot.slane %v2245, 2
        %v2376 = vrot.slane %v2247, 2
        %v2377 = vsel %vm818, %v2375, %v2376
        %v2378 = vrot.slane %v2246, 2
        %v2379 = vrot.slane %v2248, 2
        %v2380 = vsel %vm818, %v2378, %v2379
        %v2381 = vrot.slane %v2249, 2
        %v2382 = vrot.slane %v2251, 2
        %v2383 = vsel %vm818, %v2381, %v2382
        %v2384 = vrot.slane %v2250, 2
        %v2385 = vrot.slane %v2252, 2
        %v2386 = vsel %vm818, %v2384, %v2385
        %v2387 = vrot.slane %v2253, 2
        %v2388 = vrot.slane %v2255, 2
        %v2389 = vsel %vm818, %v2387, %v2388
        %v2390 = vrot.slane %v2254, 2
        %v2391 = vrot.slane %v2256, 2
        %v2392 = vsel %vm818, %v2390, %v2391
        %v2393 = vrot.slane %v2257, 2
        %v2394 = vrot.slane %v2259, 2
        %v2395 = vsel %vm818, %v2393, %v2394
        %v2396 = vrot.slane %v2258, 2
        %v2397 = vrot.slane %v2260, 2
        %v2398 = vsel %vm818, %v2396, %v2397
        %v2399 = vrot.slane %v2261, 2
        %v2400 = vrot.slane %v2263, 2
        %v2401 = vsel %vm818, %v2399, %v2400
        %v2402 = vrot.slane %v2262, 2
        %v2403 = vrot.slane %v2264, 2
        %v2404 = vsel %vm818, %v2402, %v2403
        %v2405 = vrot.slane %v2265, 2
        %v2406 = vrot.slane %v2267, 2
        %v2407 = vsel %vm818, %v2405, %v2406
        %v2408 = vrot.slane %v2266, 2
        %v2409 = vrot.slane %v2268, 2
        %v2410 = vsel %vm818, %v2408, %v2409
        %v2411 = vrot.slane %v2269, 2
        %v2412 = vrot.slane %v2271, 2
        %v2413 = vsel %vm818, %v2411, %v2412
        %v2414 = vrot.slane %v2270, 2
        %v2415 = vrot.slane %v2272, 2
        %v2416 = vsel %vm818, %v2414, %v2415
        %v2433 = vpack.c.bf16 %v2245, %v2241
        %v2434 = vpack.c.bf16 %v2246, %v2242
        %v2435 = vpack.c.bf16 %v2313, %v2307
        %v2436 = vpack.c.bf16 %v2316, %v2310
        %v2437 = vpack.c.bf16 %v2377, %v2371
        %v2438 = vpack.c.bf16 %v2380, %v2374
        %v2439 = vpack.c.bf16 %v2253, %v2249
        %v2440 = vpack.c.bf16 %v2254, %v2250
        %v2441 = vpack.c.bf16 %v2325, %v2319
        %v2442 = vpack.c.bf16 %v2328, %v2322
        %v2443 = vpack.c.bf16 %v2389, %v2383
        %v2444 = vpack.c.bf16 %v2392, %v2386
        %v2445 = vpack.c.bf16 %v2261, %v2257
        %v2446 = vpack.c.bf16 %v2262, %v2258
        %v2447 = vpack.c.bf16 %v2337, %v2331
        %v2448 = vpack.c.bf16 %v2340, %v2334
        %v2449 = vpack.c.bf16 %v2401, %v2395
        %v2450 = vpack.c.bf16 %v2404, %v2398
        %v2451 = vpack.c.bf16 %v2269, %v2265
        %v2452 = vpack.c.bf16 %v2270, %v2266
        %v2453 = vpack.c.bf16 %v2349, %v2343
        %v2454 = vpack.c.bf16 %v2352, %v2346
        %v2455 = vpack.c.bf16 %v2413, %v2407
        %v2456 = vpack.c.bf16 %v2416, %v2410
        %s2457 = scalar_lea.vmem %s3, 768
        %v2458 = vld [vmem:[%s2457] sm:$0xf]
        %v2459 = vld [vmem:[%s2457 + $0x4] sm:$0xf]
        %v2460 = vld [vmem:[%s2457 + $0x8] sm:$0xf]
        %v2461 = vld [vmem:[%s2457 + $0xc] sm:$0xf]
        %v2462 = vld [vmem:[%s2457 + $0x10] sm:$0xf]
        %v2463 = vld [vmem:[%s2457 + $0x14] sm:$0xf]
        %v2464 = vld [vmem:[%s2457 + $0x18] sm:$0xf]
        %v2465 = vld [vmem:[%s2457 + $0x1c] sm:$0xf]
        %v2466 = vld [vmem:[%s2457 + $0x20] sm:$0xf]
        %v2467 = vld [vmem:[%s2457 + $0x24] sm:$0xf]
        %v2468 = vld [vmem:[%s2457 + $0x28] sm:$0xf]
        %v2469 = vld [vmem:[%s2457 + $0x2c] sm:$0xf]
        %v2470 = vld [vmem:[%s2457 + $0x30] sm:$0xf]
        %v2471 = vld [vmem:[%s2457 + $0x34] sm:$0xf]
        %v2472 = vld [vmem:[%s2457 + $0x38] sm:$0xf]
        %v2473 = vld [vmem:[%s2457 + $0x3c] sm:$0xf]
        %v2474 = vld [vmem:[%s2457 + $0x40] sm:$0xf]
        %v2475 = vld [vmem:[%s2457 + $0x44] sm:$0xf]
        %v2476 = vld [vmem:[%s2457 + $0x48] sm:$0xf]
        %v2477 = vld [vmem:[%s2457 + $0x4c] sm:$0xf]
        %v2478 = vld [vmem:[%s2457 + $0x50] sm:$0xf]
        %v2479 = vld [vmem:[%s2457 + $0x54] sm:$0xf]
        %v2480 = vld [vmem:[%s2457 + $0x58] sm:$0xf]
        %v2481 = vld [vmem:[%s2457 + $0x5c] sm:$0xf]
        %v2482 = vld [vmem:[%s2457 + $0x60] sm:$0xf]
        %v2483 = vld [vmem:[%s2457 + $0x64] sm:$0xf]
        %v2484 = vld [vmem:[%s2457 + $0x68] sm:$0xf]
        %v2485 = vld [vmem:[%s2457 + $0x6c] sm:$0xf]
        %v2486 = vld [vmem:[%s2457 + $0x70] sm:$0xf]
        %v2487 = vld [vmem:[%s2457 + $0x74] sm:$0xf]
        %v2488 = vld [vmem:[%s2457 + $0x78] sm:$0xf]
        %v2489 = vld [vmem:[%s2457 + $0x7c] sm:$0xf]
        %v2490 = vld [vmem:[%s2457 + $0x80] sm:$0xf]
        %v2491 = vld [vmem:[%s2457 + $0x84] sm:$0xf]
        %v2492 = vld [vmem:[%s2457 + $0x88] sm:$0xf]
        %v2493 = vld [vmem:[%s2457 + $0x8c] sm:$0xf]
        %v2494 = vld [vmem:[%s2457 + $0x90] sm:$0xf]
        %v2495 = vld [vmem:[%s2457 + $0x94] sm:$0xf]
        %v2496 = vld [vmem:[%s2457 + $0x98] sm:$0xf]
        %v2497 = vld [vmem:[%s2457 + $0x9c] sm:$0xf]
        %v2498 = vld [vmem:[%s2457 + $0xa0] sm:$0xf]
        %v2499 = vld [vmem:[%s2457 + $0xa4] sm:$0xf]
        %v2500 = vld [vmem:[%s2457 + $0xa8] sm:$0xf]
        %v2501 = vld [vmem:[%s2457 + $0xac] sm:$0xf]
        %v2502 = vld [vmem:[%s2457 + $0xb0] sm:$0xf]
        %v2503 = vld [vmem:[%s2457 + $0xb4] sm:$0xf]
        %v2504 = vld [vmem:[%s2457 + $0xb8] sm:$0xf]
        %v2505 = vld [vmem:[%s2457 + $0xbc] sm:$0xf]
        %v2506 = vld [vmem:[%s2457 + $0xc0] sm:$0xf]
        %v2507 = vld [vmem:[%s2457 + $0xc4] sm:$0xf]
        %v2508 = vld [vmem:[%s2457 + $0xc8] sm:$0xf]
        %v2509 = vld [vmem:[%s2457 + $0xcc] sm:$0xf]
        %v2510 = vld [vmem:[%s2457 + $0xd0] sm:$0xf]
        %v2511 = vld [vmem:[%s2457 + $0xd4] sm:$0xf]
        %v2512 = vld [vmem:[%s2457 + $0xd8] sm:$0xf]
        %v2513 = vld [vmem:[%s2457 + $0xdc] sm:$0xf]
        %v2514 = vld [vmem:[%s2457 + $0xe0] sm:$0xf]
        %v2515 = vld [vmem:[%s2457 + $0xe4] sm:$0xf]
        %v2516 = vld [vmem:[%s2457 + $0xe8] sm:$0xf]
        %v2517 = vld [vmem:[%s2457 + $0xec] sm:$0xf]
        %v2518 = vld [vmem:[%s2457 + $0xf0] sm:$0xf]
        %v2519 = vld [vmem:[%s2457 + $0xf4] sm:$0xf]
        %v2520 = vld [vmem:[%s2457 + $0xf8] sm:$0xf]
        %v2521 = vld [vmem:[%s2457 + $0xfc] sm:$0xf]
        %v2522 = vld [vmem:[%s2457 + $0x100] sm:$0xf]
        %v2523 = vld [vmem:[%s2457 + $0x104] sm:$0xf]
        %v2524 = vld [vmem:[%s2457 + $0x108] sm:$0xf]
        %v2525 = vld [vmem:[%s2457 + $0x10c] sm:$0xf]
        %v2526 = vld [vmem:[%s2457 + $0x110] sm:$0xf]
        %v2527 = vld [vmem:[%s2457 + $0x114] sm:$0xf]
        %v2528 = vld [vmem:[%s2457 + $0x118] sm:$0xf]
        %v2529 = vld [vmem:[%s2457 + $0x11c] sm:$0xf]
        %v2530 = vld [vmem:[%s2457 + $0x120] sm:$0xf]
        %v2531 = vld [vmem:[%s2457 + $0x124] sm:$0xf]
        %v2532 = vld [vmem:[%s2457 + $0x128] sm:$0xf]
        %v2533 = vld [vmem:[%s2457 + $0x12c] sm:$0xf]
        %v2534 = vld [vmem:[%s2457 + $0x130] sm:$0xf]
        %v2535 = vld [vmem:[%s2457 + $0x134] sm:$0xf]
        %v2536 = vld [vmem:[%s2457 + $0x138] sm:$0xf]
        %v2537 = vld [vmem:[%s2457 + $0x13c] sm:$0xf]
        %v2538 = vld [vmem:[%s2457 + $0x140] sm:$0xf]
        %v2539 = vld [vmem:[%s2457 + $0x144] sm:$0xf]
        %v2540 = vld [vmem:[%s2457 + $0x148] sm:$0xf]
        %v2541 = vld [vmem:[%s2457 + $0x14c] sm:$0xf]
        %v2542 = vld [vmem:[%s2457 + $0x150] sm:$0xf]
        %v2543 = vld [vmem:[%s2457 + $0x154] sm:$0xf]
        %v2544 = vld [vmem:[%s2457 + $0x158] sm:$0xf]
        %v2545 = vld [vmem:[%s2457 + $0x15c] sm:$0xf]
        %v2546 = vld [vmem:[%s2457 + $0x160] sm:$0xf]
        %v2547 = vld [vmem:[%s2457 + $0x164] sm:$0xf]
        %v2548 = vld [vmem:[%s2457 + $0x168] sm:$0xf]
        %v2549 = vld [vmem:[%s2457 + $0x16c] sm:$0xf]
        %v2550 = vld [vmem:[%s2457 + $0x170] sm:$0xf]
        %v2551 = vld [vmem:[%s2457 + $0x174] sm:$0xf]
        %v2552 = vld [vmem:[%s2457 + $0x178] sm:$0xf]
        %v2553 = vld [vmem:[%s2457 + $0x17c] sm:$0xf]
        %v2650 = vunpack.c.l.b16 %v2458
        %v2651 = vunpack.c.l.b16 %v2459
        %v2652 = vunpack.c.l.b16 %v2460
        %v2653 = vunpack.c.l.b16 %v2461
        %v2654 = vunpack.c.l.b16 %v2462
        %v2655 = vunpack.c.l.b16 %v2463
        %v2656 = vunpack.c.l.b16 %v2464
        %v2657 = vunpack.c.l.b16 %v2465
        %v2658 = vunpack.c.l.b16 %v2466
        %v2659 = vunpack.c.l.b16 %v2467
        %v2660 = vunpack.c.l.b16 %v2468
        %v2661 = vunpack.c.l.b16 %v2469
        %v2662 = vunpack.c.l.b16 %v2470
        %v2663 = vunpack.c.l.b16 %v2471
        %v2664 = vunpack.c.l.b16 %v2472
        %v2665 = vunpack.c.l.b16 %v2473
        %v2666 = vunpack.c.l.b16 %v2474
        %v2667 = vunpack.c.l.b16 %v2475
        %v2668 = vunpack.c.l.b16 %v2476
        %v2669 = vunpack.c.l.b16 %v2477
        %v2670 = vunpack.c.l.b16 %v2478
        %v2671 = vunpack.c.l.b16 %v2479
        %v2672 = vunpack.c.l.b16 %v2480
        %v2673 = vunpack.c.l.b16 %v2481
        %v2674 = vunpack.c.l.b16 %v2482
        %v2675 = vunpack.c.l.b16 %v2483
        %v2676 = vunpack.c.l.b16 %v2484
        %v2677 = vunpack.c.l.b16 %v2485
        %v2678 = vunpack.c.l.b16 %v2486
        %v2679 = vunpack.c.l.b16 %v2487
        %v2680 = vunpack.c.l.b16 %v2488
        %v2681 = vunpack.c.l.b16 %v2489
        %v2682 = vunpack.c.l.b16 %v2490
        %v2683 = vunpack.c.l.b16 %v2491
        %v2684 = vunpack.c.l.b16 %v2492
        %v2685 = vunpack.c.l.b16 %v2493
        %v2686 = vunpack.c.l.b16 %v2494
        %v2687 = vunpack.c.l.b16 %v2495
        %v2688 = vunpack.c.l.b16 %v2496
        %v2689 = vunpack.c.l.b16 %v2497
        %v2690 = vunpack.c.l.b16 %v2498
        %v2691 = vunpack.c.l.b16 %v2499
        %v2692 = vunpack.c.l.b16 %v2500
        %v2693 = vunpack.c.l.b16 %v2501
        %v2694 = vunpack.c.l.b16 %v2502
        %v2695 = vunpack.c.l.b16 %v2503
        %v2696 = vunpack.c.l.b16 %v2504
        %v2697 = vunpack.c.l.b16 %v2505
        %v2698 = vunpack.c.l.b16 %v2506
        %v2699 = vunpack.c.l.b16 %v2507
        %v2700 = vunpack.c.l.b16 %v2508
        %v2701 = vunpack.c.l.b16 %v2509
        %v2702 = vunpack.c.l.b16 %v2510
        %v2703 = vunpack.c.l.b16 %v2511
        %v2704 = vunpack.c.l.b16 %v2512
        %v2705 = vunpack.c.l.b16 %v2513
        %v2706 = vunpack.c.l.b16 %v2514
        %v2707 = vunpack.c.l.b16 %v2515
        %v2708 = vunpack.c.l.b16 %v2516
        %v2709 = vunpack.c.l.b16 %v2517
        %v2710 = vunpack.c.l.b16 %v2518
        %v2711 = vunpack.c.l.b16 %v2519
        %v2712 = vunpack.c.l.b16 %v2520
        %v2713 = vunpack.c.l.b16 %v2521
        %v2714 = vunpack.c.l.b16 %v2522
        %v2715 = vunpack.c.l.b16 %v2523
        %v2716 = vunpack.c.l.b16 %v2524
        %v2717 = vunpack.c.l.b16 %v2525
        %v2718 = vunpack.c.l.b16 %v2526
        %v2719 = vunpack.c.l.b16 %v2527
        %v2720 = vunpack.c.l.b16 %v2528
        %v2721 = vunpack.c.l.b16 %v2529
        %v2722 = vunpack.c.l.b16 %v2530
        %v2723 = vunpack.c.l.b16 %v2531
        %v2724 = vunpack.c.l.b16 %v2532
        %v2725 = vunpack.c.l.b16 %v2533
        %v2726 = vunpack.c.l.b16 %v2534
        %v2727 = vunpack.c.l.b16 %v2535
        %v2728 = vunpack.c.l.b16 %v2536
        %v2729 = vunpack.c.l.b16 %v2537
        %v2730 = vunpack.c.l.b16 %v2538
        %v2731 = vunpack.c.l.b16 %v2539
        %v2732 = vunpack.c.l.b16 %v2540
        %v2733 = vunpack.c.l.b16 %v2541
        %v2734 = vunpack.c.l.b16 %v2542
        %v2735 = vunpack.c.l.b16 %v2543
        %v2736 = vunpack.c.l.b16 %v2544
        %v2737 = vunpack.c.l.b16 %v2545
        %v2738 = vunpack.c.l.b16 %v2546
        %v2739 = vunpack.c.l.b16 %v2547
        %v2740 = vunpack.c.l.b16 %v2548
        %v2741 = vunpack.c.l.b16 %v2549
        %v2742 = vunpack.c.l.b16 %v2550
        %v2743 = vunpack.c.l.b16 %v2551
        %v2744 = vunpack.c.l.b16 %v2552
        %v2745 = vunpack.c.l.b16 %v2553
        %v2746 = vpack.c.b16 %v2651, %v2650
        %v2747 = vpack.c.b16 %v2653, %v2652
        %v2748 = vpack.c.b16 %v2655, %v2654
        %v2749 = vpack.c.b16 %v2657, %v2656
        %v2750 = vpack.c.b16 %v2659, %v2658
        %v2751 = vpack.c.b16 %v2661, %v2660
        %v2752 = vpack.c.b16 %v2663, %v2662
        %v2753 = vpack.c.b16 %v2665, %v2664
        %v2754 = vpack.c.b16 %v2667, %v2666
        %v2755 = vpack.c.b16 %v2669, %v2668
        %v2756 = vpack.c.b16 %v2671, %v2670
        %v2757 = vpack.c.b16 %v2673, %v2672
        %v2758 = vpack.c.b16 %v2675, %v2674
        %v2759 = vpack.c.b16 %v2677, %v2676
        %v2760 = vpack.c.b16 %v2679, %v2678
        %v2761 = vpack.c.b16 %v2681, %v2680
        %v2762 = vpack.c.b16 %v2683, %v2682
        %v2763 = vpack.c.b16 %v2685, %v2684
        %v2764 = vpack.c.b16 %v2687, %v2686
        %v2765 = vpack.c.b16 %v2689, %v2688
        %v2766 = vpack.c.b16 %v2691, %v2690
        %v2767 = vpack.c.b16 %v2693, %v2692
        %v2768 = vpack.c.b16 %v2695, %v2694
        %v2769 = vpack.c.b16 %v2697, %v2696
        %v2770 = vpack.c.b16 %v2699, %v2698
        %v2771 = vpack.c.b16 %v2701, %v2700
        %v2772 = vpack.c.b16 %v2703, %v2702
        %v2773 = vpack.c.b16 %v2705, %v2704
        %v2774 = vpack.c.b16 %v2707, %v2706
        %v2775 = vpack.c.b16 %v2709, %v2708
        %v2776 = vpack.c.b16 %v2711, %v2710
        %v2777 = vpack.c.b16 %v2713, %v2712
        %v2778 = vpack.c.b16 %v2715, %v2714
        %v2779 = vpack.c.b16 %v2717, %v2716
        %v2780 = vpack.c.b16 %v2719, %v2718
        %v2781 = vpack.c.b16 %v2721, %v2720
        %v2782 = vpack.c.b16 %v2723, %v2722
        %v2783 = vpack.c.b16 %v2725, %v2724
        %v2784 = vpack.c.b16 %v2727, %v2726
        %v2785 = vpack.c.b16 %v2729, %v2728
        %v2786 = vpack.c.b16 %v2731, %v2730
        %v2787 = vpack.c.b16 %v2733, %v2732
        %v2788 = vpack.c.b16 %v2735, %v2734
        %v2789 = vpack.c.b16 %v2737, %v2736
        %v2790 = vpack.c.b16 %v2739, %v2738
        %v2791 = vpack.c.b16 %v2741, %v2740
        %v2792 = vpack.c.b16 %v2743, %v2742
        %v2793 = vpack.c.b16 %v2745, %v2744
        %2842 = vmatpush.bf16.msra.mxu0 %v2753
        %2843 = vmatpush.bf16.msra.mxu0 %v2752
        %2844 = vmatpush.bf16.msra.mxu0 %v2751
        %2845 = vmatpush.bf16.msra.mxu0 %v2750
        %2846 = vmatpush.bf16.msra.mxu0 %v2749
        %2847 = vmatpush.bf16.msra.mxu0 %v2748
        %2848 = vmatpush.bf16.msra.mxu0 %v2747
        %2849 = vmatpush.bf16.msra.mxu0 %v2746
        %2850 = vmatmul.bf16.gmra.mxu0 %v2433
        %v2851 = vpop.f32.mrf.mxu0
        %v2852 = vadd.f32 0.0, %v2851
        %v2853 = vpop.f32.mrf.mxu0
        %v2854 = vadd.f32 0.0, %v2853
        %2855 = vmatmul.bf16.gmra.mxu0 %v2439
        %v2856 = vpop.f32.mrf.mxu0
        %v2857 = vadd.f32 0.0, %v2856
        %v2858 = vpop.f32.mrf.mxu0
        %v2859 = vadd.f32 0.0, %v2858
        %2860 = vmatmul.bf16.gmra.mxu0 %v2445
        %v2861 = vpop.f32.mrf.mxu0
        %v2862 = vadd.f32 0.0, %v2861
        %v2863 = vpop.f32.mrf.mxu0
        %v2864 = vadd.f32 0.0, %v2863
        %2865 = vmatmul.bf16.gmra.mxu0 %v2451
        %v2866 = vpop.f32.mrf.mxu0
        %v2867 = vadd.f32 0.0, %v2866
        %v2868 = vpop.f32.mrf.mxu0
        %v2869 = vadd.f32 0.0, %v2868
        %2870 = vdwg.mxu0
        %2871 = vmatpush.bf16.msra.mxu0 %v2761
        %2872 = vmatpush.bf16.msra.mxu0 %v2760
        %2873 = vmatpush.bf16.msra.mxu0 %v2759
        %2874 = vmatpush.bf16.msra.mxu0 %v2758
        %2875 = vmatpush.bf16.msra.mxu0 %v2757
        %2876 = vmatpush.bf16.msra.mxu0 %v2756
        %2877 = vmatpush.bf16.msra.mxu0 %v2755
        %2878 = vmatpush.bf16.msra.mxu0 %v2754
        %2879 = vmatmul.bf16.gmra.mxu0 %v2434
        %v2880 = vpop.f32.mrf.mxu0
        %v2881 = vadd.f32 %v2852, %v2880
        %v2882 = vpop.f32.mrf.mxu0
        %v2883 = vadd.f32 %v2854, %v2882
        %2884 = vmatmul.bf16.gmra.mxu0 %v2440
        %v2885 = vpop.f32.mrf.mxu0
        %v2886 = vadd.f32 %v2857, %v2885
        %v2887 = vpop.f32.mrf.mxu0
        %v2888 = vadd.f32 %v2859, %v2887
        %2889 = vmatmul.bf16.gmra.mxu0 %v2446
        %v2890 = vpop.f32.mrf.mxu0
        %v2891 = vadd.f32 %v2862, %v2890
        %v2892 = vpop.f32.mrf.mxu0
        %v2893 = vadd.f32 %v2864, %v2892
        %2894 = vmatmul.bf16.gmra.mxu0 %v2452
        %v2895 = vpop.f32.mrf.mxu0
        %v2896 = vadd.f32 %v2867, %v2895
        %v2897 = vpop.f32.mrf.mxu0
        %v2898 = vadd.f32 %v2869, %v2897
        %2899 = vdwg.mxu0
        %2900 = vmatpush.bf16.msra.mxu0 %v2769
        %2901 = vmatpush.bf16.msra.mxu0 %v2768
        %2902 = vmatpush.bf16.msra.mxu0 %v2767
        %2903 = vmatpush.bf16.msra.mxu0 %v2766
        %2904 = vmatpush.bf16.msra.mxu0 %v2765
        %2905 = vmatpush.bf16.msra.mxu0 %v2764
        %2906 = vmatpush.bf16.msra.mxu0 %v2763
        %2907 = vmatpush.bf16.msra.mxu0 %v2762
        %2908 = vmatmul.bf16.gmra.mxu0 %v2435
        %v2909 = vpop.f32.mrf.mxu0
        %v2910 = vadd.f32 %v2881, %v2909
        %v2911 = vpop.f32.mrf.mxu0
        %v2912 = vadd.f32 %v2883, %v2911
        %2913 = vmatmul.bf16.gmra.mxu0 %v2441
        %v2914 = vpop.f32.mrf.mxu0
        %v2915 = vadd.f32 %v2886, %v2914
        %v2916 = vpop.f32.mrf.mxu0
        %v2917 = vadd.f32 %v2888, %v2916
        %2918 = vmatmul.bf16.gmra.mxu0 %v2447
        %v2919 = vpop.f32.mrf.mxu0
        %v2920 = vadd.f32 %v2891, %v2919
        %v2921 = vpop.f32.mrf.mxu0
        %v2922 = vadd.f32 %v2893, %v2921
        %2923 = vmatmul.bf16.gmra.mxu0 %v2453
        %v2924 = vpop.f32.mrf.mxu0
        %v2925 = vadd.f32 %v2896, %v2924
        %v2926 = vpop.f32.mrf.mxu0
        %v2927 = vadd.f32 %v2898, %v2926
        %2928 = vdwg.mxu0
        %2929 = vmatpush.bf16.msra.mxu0 %v2777
        %2930 = vmatpush.bf16.msra.mxu0 %v2776
        %2931 = vmatpush.bf16.msra.mxu0 %v2775
        %2932 = vmatpush.bf16.msra.mxu0 %v2774
        %2933 = vmatpush.bf16.msra.mxu0 %v2773
        %2934 = vmatpush.bf16.msra.mxu0 %v2772
        %2935 = vmatpush.bf16.msra.mxu0 %v2771
        %2936 = vmatpush.bf16.msra.mxu0 %v2770
        %2937 = vmatmul.bf16.gmra.mxu0 %v2436
        %v2938 = vpop.f32.mrf.mxu0
        %v2939 = vadd.f32 %v2910, %v2938
        %v2940 = vpop.f32.mrf.mxu0
        %v2941 = vadd.f32 %v2912, %v2940
        %2942 = vmatmul.bf16.gmra.mxu0 %v2442
        %v2943 = vpop.f32.mrf.mxu0
        %v2944 = vadd.f32 %v2915, %v2943
        %v2945 = vpop.f32.mrf.mxu0
        %v2946 = vadd.f32 %v2917, %v2945
        %2947 = vmatmul.bf16.gmra.mxu0 %v2448
        %v2948 = vpop.f32.mrf.mxu0
        %v2949 = vadd.f32 %v2920, %v2948
        %v2950 = vpop.f32.mrf.mxu0
        %v2951 = vadd.f32 %v2922, %v2950
        %2952 = vmatmul.bf16.gmra.mxu0 %v2454
        %v2953 = vpop.f32.mrf.mxu0
        %v2954 = vadd.f32 %v2925, %v2953
        %v2955 = vpop.f32.mrf.mxu0
        %v2956 = vadd.f32 %v2927, %v2955
        %2957 = vdwg.mxu0
        %2958 = vmatpush.bf16.msra.mxu0 %v2785
        %2959 = vmatpush.bf16.msra.mxu0 %v2784
        %2960 = vmatpush.bf16.msra.mxu0 %v2783
        %2961 = vmatpush.bf16.msra.mxu0 %v2782
        %2962 = vmatpush.bf16.msra.mxu0 %v2781
        %2963 = vmatpush.bf16.msra.mxu0 %v2780
        %2964 = vmatpush.bf16.msra.mxu0 %v2779
        %2965 = vmatpush.bf16.msra.mxu0 %v2778
        %2966 = vmatmul.bf16.gmra.mxu0 %v2437
        %v2967 = vpop.f32.mrf.mxu0
        %v2968 = vadd.f32 %v2939, %v2967
        %v2969 = vpop.f32.mrf.mxu0
        %v2970 = vadd.f32 %v2941, %v2969
        %2971 = vmatmul.bf16.gmra.mxu0 %v2443
        %v2972 = vpop.f32.mrf.mxu0
        %v2973 = vadd.f32 %v2944, %v2972
        %v2974 = vpop.f32.mrf.mxu0
        %v2975 = vadd.f32 %v2946, %v2974
        %2976 = vmatmul.bf16.gmra.mxu0 %v2449
        %v2977 = vpop.f32.mrf.mxu0
        %v2978 = vadd.f32 %v2949, %v2977
        %v2979 = vpop.f32.mrf.mxu0
        %v2980 = vadd.f32 %v2951, %v2979
        %2981 = vmatmul.bf16.gmra.mxu0 %v2455
        %v2982 = vpop.f32.mrf.mxu0
        %v2983 = vadd.f32 %v2954, %v2982
        %v2984 = vpop.f32.mrf.mxu0
        %v2985 = vadd.f32 %v2956, %v2984
        %2986 = vdwg.mxu0
        %2987 = vmatpush.bf16.msra.mxu0 %v2793
        %2988 = vmatpush.bf16.msra.mxu0 %v2792
        %2989 = vmatpush.bf16.msra.mxu0 %v2791
        %2990 = vmatpush.bf16.msra.mxu0 %v2790
        %2991 = vmatpush.bf16.msra.mxu0 %v2789
        %2992 = vmatpush.bf16.msra.mxu0 %v2788
        %2993 = vmatpush.bf16.msra.mxu0 %v2787
        %2994 = vmatpush.bf16.msra.mxu0 %v2786
        %2995 = vmatmul.bf16.gmra.mxu0 %v2438
        %v2996 = vpop.f32.mrf.mxu0
        %v2997 = vadd.f32 %v2968, %v2996
        %v2998 = vpop.f32.mrf.mxu0
        %v2999 = vadd.f32 %v2970, %v2998
        %3000 = vmatmul.bf16.gmra.mxu0 %v2444
        %v3001 = vpop.f32.mrf.mxu0
        %v3002 = vadd.f32 %v2973, %v3001
        %v3003 = vpop.f32.mrf.mxu0
        %v3004 = vadd.f32 %v2975, %v3003
        %3005 = vmatmul.bf16.gmra.mxu0 %v2450
        %v3006 = vpop.f32.mrf.mxu0
        %v3007 = vadd.f32 %v2978, %v3006
        %v3008 = vpop.f32.mrf.mxu0
        %v3009 = vadd.f32 %v2980, %v3008
        %3010 = vmatmul.bf16.gmra.mxu0 %v2456
        %v3011 = vpop.f32.mrf.mxu0
        %v3012 = vadd.f32 %v2983, %v3011
        %v3013 = vpop.f32.mrf.mxu0
        %v3014 = vadd.f32 %v2985, %v3013
        %3015 = vdwg.mxu0
        %v3016 = vadd.f32 %v2221, %v2997
        %v3017 = vadd.f32 %v2223, %v2999
        %v3018 = vadd.f32 %v2226, %v3002
        %v3019 = vadd.f32 %v2228, %v3004
        %v3020 = vadd.f32 %v2231, %v3007
        %v3021 = vadd.f32 %v2233, %v3009
        %v3022 = vadd.f32 %v2236, %v3012
        %v3023 = vadd.f32 %v2238, %v3014
        %v3024 = vld [vmem:[%s4] sm:$0x1]
        %v3026 = vperm.slane %v3024, 0
        %v3028 = vmul.f32 %v3016, %v3026
        %v3029 = vmul.f32 %v3017, %v3026
        %v3030 = vmul.f32 %v3018, %v3026
        %v3031 = vmul.f32 %v3019, %v3026
        %v3032 = vmul.f32 %v3020, %v3026
        %v3033 = vmul.f32 %v3021, %v3026
        %v3034 = vmul.f32 %v3022, %v3026
        %v3035 = vmul.f32 %v3023, %v3026
        %v3036 = vld [vmem:[%s5] sm:$0x1]
        %v3038 = vperm.slane %v3036, 0
        %v3040 = vadd.f32 %v3028, %v3038
        %v3041 = vadd.f32 %v3029, %v3038
        %v3042 = vadd.f32 %v3030, %v3038
        %v3043 = vadd.f32 %v3031, %v3038
        %v3044 = vadd.f32 %v3032, %v3038
        %v3045 = vadd.f32 %v3033, %v3038
        %v3046 = vadd.f32 %v3034, %v3038
        %v3047 = vadd.f32 %v3035, %v3038
        %v3048 = vmax.f32 %v3040, 0.0
        %v3049 = vmax.f32 %v3041, 0.0
        %v3050 = vmax.f32 %v3042, 0.0
        %v3051 = vmax.f32 %v3043, 0.0
        %v3052 = vmax.f32 %v3044, 0.0
        %v3053 = vmax.f32 %v3045, 0.0
        %v3054 = vmax.f32 %v3046, 0.0
        %v3055 = vmax.f32 %v3047, 0.0
        %v3056 = vld [vmem:[#allocation3] sm:$0xff]
        %v3057 = vld [vmem:[#allocation3 + $0x8] sm:$0x3]
        %v3058 = vld [vmem:[#allocation3 + $0x10] sm:$0xff]
        %v3059 = vld [vmem:[#allocation3 + $0x18] sm:$0x3]
        %v3060 = vld [vmem:[#allocation3 + $0x20] sm:$0xff]
        %v3061 = vld [vmem:[#allocation3 + $0x28] sm:$0x3]
        %v3062 = vld [vmem:[#allocation3 + $0x30] sm:$0xff]
        %v3063 = vld [vmem:[#allocation3 + $0x38] sm:$0x3]
        %v3064 = vld [vmem:[#allocation3 + $0x40] sm:$0xff]
        %v3065 = vld [vmem:[#allocation3 + $0x48] sm:$0x3]
        %v3066 = vld [vmem:[#allocation3 + $0x50] sm:$0xff]
        %v3067 = vld [vmem:[#allocation3 + $0x58] sm:$0x3]
        %v3068 = vld [vmem:[#allocation3 + $0x60] sm:$0xff]
        %v3069 = vld [vmem:[#allocation3 + $0x68] sm:$0x3]
        %v3070 = vld [vmem:[#allocation3 + $0x70] sm:$0xff]
        %v3071 = vld [vmem:[#allocation3 + $0x78] sm:$0x3]
        %v3088 = vrot.slane %v3056, 1
        %v3089 = vrot.slane %v3057, 1
        %v3090 = vsel %vm753, %v3088, %v3089
        %v3091 = vrot.slane %v3058, 1
        %v3092 = vrot.slane %v3059, 1
        %v3093 = vsel %vm753, %v3091, %v3092
        %v3094 = vrot.slane %v3060, 1
        %v3095 = vrot.slane %v3061, 1
        %v3096 = vsel %vm753, %v3094, %v3095
        %v3097 = vrot.slane %v3062, 1
        %v3098 = vrot.slane %v3063, 1
        %v3099 = vsel %vm753, %v3097, %v3098
        %v3100 = vrot.slane %v3064, 1
        %v3101 = vrot.slane %v3065, 1
        %v3102 = vsel %vm753, %v3100, %v3101
        %v3103 = vrot.slane %v3066, 1
        %v3104 = vrot.slane %v3067, 1
        %v3105 = vsel %vm753, %v3103, %v3104
        %v3106 = vrot.slane %v3068, 1
        %v3107 = vrot.slane %v3069, 1
        %v3108 = vsel %vm753, %v3106, %v3107
        %v3109 = vrot.slane %v3070, 1
        %v3110 = vrot.slane %v3071, 1
        %v3111 = vsel %vm753, %v3109, %v3110
        %v3120 = vrot.slane %v3056, 2
        %v3121 = vrot.slane %v3057, 2
        %v3122 = vsel %vm818, %v3120, %v3121
        %v3123 = vrot.slane %v3058, 2
        %v3124 = vrot.slane %v3059, 2
        %v3125 = vsel %vm818, %v3123, %v3124
        %v3126 = vrot.slane %v3060, 2
        %v3127 = vrot.slane %v3061, 2
        %v3128 = vsel %vm818, %v3126, %v3127
        %v3129 = vrot.slane %v3062, 2
        %v3130 = vrot.slane %v3063, 2
        %v3131 = vsel %vm818, %v3129, %v3130
        %v3132 = vrot.slane %v3064, 2
        %v3133 = vrot.slane %v3065, 2
        %v3134 = vsel %vm818, %v3132, %v3133
        %v3135 = vrot.slane %v3066, 2
        %v3136 = vrot.slane %v3067, 2
        %v3137 = vsel %vm818, %v3135, %v3136
        %v3138 = vrot.slane %v3068, 2
        %v3139 = vrot.slane %v3069, 2
        %v3140 = vsel %vm818, %v3138, %v3139
        %v3141 = vrot.slane %v3070, 2
        %v3142 = vrot.slane %v3071, 2
        %v3143 = vsel %vm818, %v3141, %v3142
        %v3152 = vpack.c.bf16 %v3058, %v3056
        %v3153 = vpack.c.bf16 %v3093, %v3090
        %v3154 = vpack.c.bf16 %v3125, %v3122
        %v3155 = vpack.c.bf16 %v3062, %v3060
        %v3156 = vpack.c.bf16 %v3099, %v3096
        %v3157 = vpack.c.bf16 %v3131, %v3128
        %v3158 = vpack.c.bf16 %v3066, %v3064
        %v3159 = vpack.c.bf16 %v3105, %v3102
        %v3160 = vpack.c.bf16 %v3137, %v3134
        %v3161 = vpack.c.bf16 %v3070, %v3068
        %v3162 = vpack.c.bf16 %v3111, %v3108
        %v3163 = vpack.c.bf16 %v3143, %v3140
        %v3164 = vld [vmem:[%s6] sm:$0xf]
        %v3165 = vld [vmem:[%s6 + $0x4] sm:$0xf]
        %v3166 = vld [vmem:[%s6 + $0x8] sm:$0xf]
        %v3167 = vld [vmem:[%s6 + $0xc] sm:$0xf]
        %v3168 = vld [vmem:[%s6 + $0x10] sm:$0xf]
        %v3169 = vld [vmem:[%s6 + $0x14] sm:$0xf]
        %v3170 = vld [vmem:[%s6 + $0x18] sm:$0xf]
        %v3171 = vld [vmem:[%s6 + $0x1c] sm:$0xf]
        %v3172 = vld [vmem:[%s6 + $0x20] sm:$0xf]
        %v3173 = vld [vmem:[%s6 + $0x24] sm:$0xf]
        %v3174 = vld [vmem:[%s6 + $0x28] sm:$0xf]
        %v3175 = vld [vmem:[%s6 + $0x2c] sm:$0xf]
        %v3176 = vld [vmem:[%s6 + $0x30] sm:$0xf]
        %v3177 = vld [vmem:[%s6 + $0x34] sm:$0xf]
        %v3178 = vld [vmem:[%s6 + $0x38] sm:$0xf]
        %v3179 = vld [vmem:[%s6 + $0x3c] sm:$0xf]
        %v3180 = vld [vmem:[%s6 + $0x40] sm:$0xf]
        %v3181 = vld [vmem:[%s6 + $0x44] sm:$0xf]
        %v3182 = vld [vmem:[%s6 + $0x48] sm:$0xf]
        %v3183 = vld [vmem:[%s6 + $0x4c] sm:$0xf]
        %v3184 = vld [vmem:[%s6 + $0x50] sm:$0xf]
        %v3185 = vld [vmem:[%s6 + $0x54] sm:$0xf]
        %v3186 = vld [vmem:[%s6 + $0x58] sm:$0xf]
        %v3187 = vld [vmem:[%s6 + $0x5c] sm:$0xf]
        %v3188 = vld [vmem:[%s6 + $0x60] sm:$0xf]
        %v3189 = vld [vmem:[%s6 + $0x64] sm:$0xf]
        %v3190 = vld [vmem:[%s6 + $0x68] sm:$0xf]
        %v3191 = vld [vmem:[%s6 + $0x6c] sm:$0xf]
        %v3192 = vld [vmem:[%s6 + $0x70] sm:$0xf]
        %v3193 = vld [vmem:[%s6 + $0x74] sm:$0xf]
        %v3194 = vld [vmem:[%s6 + $0x78] sm:$0xf]
        %v3195 = vld [vmem:[%s6 + $0x7c] sm:$0xf]
        %v3196 = vld [vmem:[%s6 + $0x80] sm:$0xf]
        %v3197 = vld [vmem:[%s6 + $0x84] sm:$0xf]
        %v3198 = vld [vmem:[%s6 + $0x88] sm:$0xf]
        %v3199 = vld [vmem:[%s6 + $0x8c] sm:$0xf]
        %v3200 = vld [vmem:[%s6 + $0x90] sm:$0xf]
        %v3201 = vld [vmem:[%s6 + $0x94] sm:$0xf]
        %v3202 = vld [vmem:[%s6 + $0x98] sm:$0xf]
        %v3203 = vld [vmem:[%s6 + $0x9c] sm:$0xf]
        %v3204 = vld [vmem:[%s6 + $0xa0] sm:$0xf]
        %v3205 = vld [vmem:[%s6 + $0xa4] sm:$0xf]
        %v3206 = vld [vmem:[%s6 + $0xa8] sm:$0xf]
        %v3207 = vld [vmem:[%s6 + $0xac] sm:$0xf]
        %v3208 = vld [vmem:[%s6 + $0xb0] sm:$0xf]
        %v3209 = vld [vmem:[%s6 + $0xb4] sm:$0xf]
        %v3210 = vld [vmem:[%s6 + $0xb8] sm:$0xf]
        %v3211 = vld [vmem:[%s6 + $0xbc] sm:$0xf]
        %v3212 = vld [vmem:[%s680] sm:$0xff]
        %v3213 = vld [vmem:[%s680 + $0x8] sm:$0x3]
        %v3214 = vld [vmem:[%s680 + $0x10] sm:$0xff]
        %v3215 = vld [vmem:[%s680 + $0x18] sm:$0x3]
        %v3216 = vld [vmem:[%s680 + $0x20] sm:$0xff]
        %v3217 = vld [vmem:[%s680 + $0x28] sm:$0x3]
        %v3218 = vld [vmem:[%s680 + $0x30] sm:$0xff]
        %v3219 = vld [vmem:[%s680 + $0x38] sm:$0x3]
        %v3220 = vld [vmem:[%s680 + $0x40] sm:$0xff]
        %v3221 = vld [vmem:[%s680 + $0x48] sm:$0x3]
        %v3222 = vld [vmem:[%s680 + $0x50] sm:$0xff]
        %v3223 = vld [vmem:[%s680 + $0x58] sm:$0x3]
        %v3224 = vld [vmem:[%s680 + $0x60] sm:$0xff]
        %v3225 = vld [vmem:[%s680 + $0x68] sm:$0x3]
        %v3226 = vld [vmem:[%s680 + $0x70] sm:$0xff]
        %v3227 = vld [vmem:[%s680 + $0x78] sm:$0x3]
        %v3244 = vrot.slane %v3212, 1
        %v3245 = vrot.slane %v3213, 1
        %v3246 = vsel %vm753, %v3244, %v3245
        %v3247 = vrot.slane %v3214, 1
        %v3248 = vrot.slane %v3215, 1
        %v3249 = vsel %vm753, %v3247, %v3248
        %v3250 = vrot.slane %v3216, 1
        %v3251 = vrot.slane %v3217, 1
        %v3252 = vsel %vm753, %v3250, %v3251
        %v3253 = vrot.slane %v3218, 1
        %v3254 = vrot.slane %v3219, 1
        %v3255 = vsel %vm753, %v3253, %v3254
        %v3256 = vrot.slane %v3220, 1
        %v3257 = vrot.slane %v3221, 1
        %v3258 = vsel %vm753, %v3256, %v3257
        %v3259 = vrot.slane %v3222, 1
        %v3260 = vrot.slane %v3223, 1
        %v3261 = vsel %vm753, %v3259, %v3260
        %v3262 = vrot.slane %v3224, 1
        %v3263 = vrot.slane %v3225, 1
        %v3264 = vsel %vm753, %v3262, %v3263
        %v3265 = vrot.slane %v3226, 1
        %v3266 = vrot.slane %v3227, 1
        %v3267 = vsel %vm753, %v3265, %v3266
        %v3276 = vrot.slane %v3212, 2
        %v3277 = vrot.slane %v3213, 2
        %v3278 = vsel %vm818, %v3276, %v3277
        %v3279 = vrot.slane %v3214, 2
        %v3280 = vrot.slane %v3215, 2
        %v3281 = vsel %vm818, %v3279, %v3280
        %v3282 = vrot.slane %v3216, 2
        %v3283 = vrot.slane %v3217, 2
        %v3284 = vsel %vm818, %v3282, %v3283
        %v3285 = vrot.slane %v3218, 2
        %v3286 = vrot.slane %v3219, 2
        %v3287 = vsel %vm818, %v3285, %v3286
        %v3288 = vrot.slane %v3220, 2
        %v3289 = vrot.slane %v3221, 2
        %v3290 = vsel %vm818, %v3288, %v3289
        %v3291 = vrot.slane %v3222, 2
        %v3292 = vrot.slane %v3223, 2
        %v3293 = vsel %vm818, %v3291, %v3292
        %v3294 = vrot.slane %v3224, 2
        %v3295 = vrot.slane %v3225, 2
        %v3296 = vsel %vm818, %v3294, %v3295
        %v3297 = vrot.slane %v3226, 2
        %v3298 = vrot.slane %v3227, 2
        %v3299 = vsel %vm818, %v3297, %v3298
        %v3308 = vpack.c.bf16 %v3214, %v3212
        %v3309 = vpack.c.bf16 %v3249, %v3246
        %v3310 = vpack.c.bf16 %v3281, %v3278
        %v3311 = vpack.c.bf16 %v3218, %v3216
        %v3312 = vpack.c.bf16 %v3255, %v3252
        %v3313 = vpack.c.bf16 %v3287, %v3284
        %v3314 = vpack.c.bf16 %v3222, %v3220
        %v3315 = vpack.c.bf16 %v3261, %v3258
        %v3316 = vpack.c.bf16 %v3293, %v3290
        %v3317 = vpack.c.bf16 %v3226, %v3224
        %v3318 = vpack.c.bf16 %v3267, %v3264
        %v3319 = vpack.c.bf16 %v3299, %v3296
        %s3320 = scalar_lea.vmem %s6, 192
        %v3321 = vld [vmem:[%s3320] sm:$0xf]
        %v3322 = vld [vmem:[%s3320 + $0x4] sm:$0xf]
        %v3323 = vld [vmem:[%s3320 + $0x8] sm:$0xf]
        %v3324 = vld [vmem:[%s3320 + $0xc] sm:$0xf]
        %v3325 = vld [vmem:[%s3320 + $0x10] sm:$0xf]
        %v3326 = vld [vmem:[%s3320 + $0x14] sm:$0xf]
        %v3327 = vld [vmem:[%s3320 + $0x18] sm:$0xf]
        %v3328 = vld [vmem:[%s3320 + $0x1c] sm:$0xf]
        %v3329 = vld [vmem:[%s3320 + $0x20] sm:$0xf]
        %v3330 = vld [vmem:[%s3320 + $0x24] sm:$0xf]
        %v3331 = vld [vmem:[%s3320 + $0x28] sm:$0xf]
        %v3332 = vld [vmem:[%s3320 + $0x2c] sm:$0xf]
        %v3333 = vld [vmem:[%s3320 + $0x30] sm:$0xf]
        %v3334 = vld [vmem:[%s3320 + $0x34] sm:$0xf]
        %v3335 = vld [vmem:[%s3320 + $0x38] sm:$0xf]
        %v3336 = vld [vmem:[%s3320 + $0x3c] sm:$0xf]
        %v3337 = vld [vmem:[%s3320 + $0x40] sm:$0xf]
        %v3338 = vld [vmem:[%s3320 + $0x44] sm:$0xf]
        %v3339 = vld [vmem:[%s3320 + $0x48] sm:$0xf]
        %v3340 = vld [vmem:[%s3320 + $0x4c] sm:$0xf]
        %v3341 = vld [vmem:[%s3320 + $0x50] sm:$0xf]
        %v3342 = vld [vmem:[%s3320 + $0x54] sm:$0xf]
        %v3343 = vld [vmem:[%s3320 + $0x58] sm:$0xf]
        %v3344 = vld [vmem:[%s3320 + $0x5c] sm:$0xf]
        %v3345 = vld [vmem:[%s3320 + $0x60] sm:$0xf]
        %v3346 = vld [vmem:[%s3320 + $0x64] sm:$0xf]
        %v3347 = vld [vmem:[%s3320 + $0x68] sm:$0xf]
        %v3348 = vld [vmem:[%s3320 + $0x6c] sm:$0xf]
        %v3349 = vld [vmem:[%s3320 + $0x70] sm:$0xf]
        %v3350 = vld [vmem:[%s3320 + $0x74] sm:$0xf]
        %v3351 = vld [vmem:[%s3320 + $0x78] sm:$0xf]
        %v3352 = vld [vmem:[%s3320 + $0x7c] sm:$0xf]
        %v3353 = vld [vmem:[%s3320 + $0x80] sm:$0xf]
        %v3354 = vld [vmem:[%s3320 + $0x84] sm:$0xf]
        %v3355 = vld [vmem:[%s3320 + $0x88] sm:$0xf]
        %v3356 = vld [vmem:[%s3320 + $0x8c] sm:$0xf]
        %v3357 = vld [vmem:[%s3320 + $0x90] sm:$0xf]
        %v3358 = vld [vmem:[%s3320 + $0x94] sm:$0xf]
        %v3359 = vld [vmem:[%s3320 + $0x98] sm:$0xf]
        %v3360 = vld [vmem:[%s3320 + $0x9c] sm:$0xf]
        %v3361 = vld [vmem:[%s3320 + $0xa0] sm:$0xf]
        %v3362 = vld [vmem:[%s3320 + $0xa4] sm:$0xf]
        %v3363 = vld [vmem:[%s3320 + $0xa8] sm:$0xf]
        %v3364 = vld [vmem:[%s3320 + $0xac] sm:$0xf]
        %v3365 = vld [vmem:[%s3320 + $0xb0] sm:$0xf]
        %v3366 = vld [vmem:[%s3320 + $0xb4] sm:$0xf]
        %v3367 = vld [vmem:[%s3320 + $0xb8] sm:$0xf]
        %v3368 = vld [vmem:[%s3320 + $0xbc] sm:$0xf]
        %v3417 = vunpack.c.l.b16 %v3321
        %v3418 = vunpack.c.l.b16 %v3322
        %v3419 = vunpack.c.l.b16 %v3323
        %v3420 = vunpack.c.l.b16 %v3324
        %v3421 = vunpack.c.l.b16 %v3325
        %v3422 = vunpack.c.l.b16 %v3326
        %v3423 = vunpack.c.l.b16 %v3327
        %v3424 = vunpack.c.l.b16 %v3328
        %v3425 = vunpack.c.l.b16 %v3329
        %v3426 = vunpack.c.l.b16 %v3330
        %v3427 = vunpack.c.l.b16 %v3331
        %v3428 = vunpack.c.l.b16 %v3332
        %v3429 = vunpack.c.l.b16 %v3333
        %v3430 = vunpack.c.l.b16 %v3334
        %v3431 = vunpack.c.l.b16 %v3335
        %v3432 = vunpack.c.l.b16 %v3336
        %v3433 = vunpack.c.l.b16 %v3337
        %v3434 = vunpack.c.l.b16 %v3338
        %v3435 = vunpack.c.l.b16 %v3339
        %v3436 = vunpack.c.l.b16 %v3340
        %v3437 = vunpack.c.l.b16 %v3341
        %v3438 = vunpack.c.l.b16 %v3342
        %v3439 = vunpack.c.l.b16 %v3343
        %v3440 = vunpack.c.l.b16 %v3344
        %v3441 = vunpack.c.l.b16 %v3345
        %v3442 = vunpack.c.l.b16 %v3346
        %v3443 = vunpack.c.l.b16 %v3347
        %v3444 = vunpack.c.l.b16 %v3348
        %v3445 = vunpack.c.l.b16 %v3349
        %v3446 = vunpack.c.l.b16 %v3350
        %v3447 = vunpack.c.l.b16 %v3351
        %v3448 = vunpack.c.l.b16 %v3352
        %v3449 = vunpack.c.l.b16 %v3353
        %v3450 = vunpack.c.l.b16 %v3354
        %v3451 = vunpack.c.l.b16 %v3355
        %v3452 = vunpack.c.l.b16 %v3356
        %v3453 = vunpack.c.l.b16 %v3357
        %v3454 = vunpack.c.l.b16 %v3358
        %v3455 = vunpack.c.l.b16 %v3359
        %v3456 = vunpack.c.l.b16 %v3360
        %v3457 = vunpack.c.l.b16 %v3361
        %v3458 = vunpack.c.l.b16 %v3362
        %v3459 = vunpack.c.l.b16 %v3363
        %v3460 = vunpack.c.l.b16 %v3364
        %v3461 = vunpack.c.l.b16 %v3365
        %v3462 = vunpack.c.l.b16 %v3366
        %v3463 = vunpack.c.l.b16 %v3367
        %v3464 = vunpack.c.l.b16 %v3368
        %v3465 = vpack.c.b16 %v3418, %v3417
        %v3466 = vpack.c.b16 %v3420, %v3419
        %v3467 = vpack.c.b16 %v3422, %v3421
        %v3468 = vpack.c.b16 %v3424, %v3423
        %v3469 = vpack.c.b16 %v3426, %v3425
        %v3470 = vpack.c.b16 %v3428, %v3427
        %v3471 = vpack.c.b16 %v3430, %v3429
        %v3472 = vpack.c.b16 %v3432, %v3431
        %v3473 = vpack.c.b16 %v3434, %v3433
        %v3474 = vpack.c.b16 %v3436, %v3435
        %v3475 = vpack.c.b16 %v3438, %v3437
        %v3476 = vpack.c.b16 %v3440, %v3439
        %v3477 = vpack.c.b16 %v3442, %v3441
        %v3478 = vpack.c.b16 %v3444, %v3443
        %v3479 = vpack.c.b16 %v3446, %v3445
        %v3480 = vpack.c.b16 %v3448, %v3447
        %v3481 = vpack.c.b16 %v3450, %v3449
        %v3482 = vpack.c.b16 %v3452, %v3451
        %v3483 = vpack.c.b16 %v3454, %v3453
        %v3484 = vpack.c.b16 %v3456, %v3455
        %v3485 = vpack.c.b16 %v3458, %v3457
        %v3486 = vpack.c.b16 %v3460, %v3459
        %v3487 = vpack.c.b16 %v3462, %v3461
        %v3488 = vpack.c.b16 %v3464, %v3463
        %3513 = vmatpush.bf16.msra.mxu0 %v3472
        %3514 = vmatpush.bf16.msra.mxu0 %v3471
        %3515 = vmatpush.bf16.msra.mxu0 %v3470
        %3516 = vmatpush.bf16.msra.mxu0 %v3469
        %3517 = vmatpush.bf16.msra.mxu0 %v3468
        %3518 = vmatpush.bf16.msra.mxu0 %v3467
        %3519 = vmatpush.bf16.msra.mxu0 %v3466
        %3520 = vmatpush.bf16.msra.mxu0 %v3465
        %3521 = vmatmul.bf16.gmra.mxu0 %v3308
        %v3522 = vpop.f32.mrf.mxu0
        %v3523 = vadd.f32 0.0, %v3522
        %v3524 = vpop.f32.mrf.mxu0
        %v3525 = vadd.f32 0.0, %v3524
        %3526 = vmatmul.bf16.gmra.mxu0 %v3311
        %v3527 = vpop.f32.mrf.mxu0
        %v3528 = vadd.f32 0.0, %v3527
        %v3529 = vpop.f32.mrf.mxu0
        %v3530 = vadd.f32 0.0, %v3529
        %3531 = vmatmul.bf16.gmra.mxu0 %v3314
        %v3532 = vpop.f32.mrf.mxu0
        %v3533 = vadd.f32 0.0, %v3532
        %v3534 = vpop.f32.mrf.mxu0
        %v3535 = vadd.f32 0.0, %v3534
        %3536 = vmatmul.bf16.gmra.mxu0 %v3317
        %v3537 = vpop.f32.mrf.mxu0
        %v3538 = vadd.f32 0.0, %v3537
        %v3539 = vpop.f32.mrf.mxu0
        %v3540 = vadd.f32 0.0, %v3539
        %3541 = vdwg.mxu0
        %3542 = vmatpush.bf16.msra.mxu0 %v3480
        %3543 = vmatpush.bf16.msra.mxu0 %v3479
        %3544 = vmatpush.bf16.msra.mxu0 %v3478
        %3545 = vmatpush.bf16.msra.mxu0 %v3477
        %3546 = vmatpush.bf16.msra.mxu0 %v3476
        %3547 = vmatpush.bf16.msra.mxu0 %v3475
        %3548 = vmatpush.bf16.msra.mxu0 %v3474
        %3549 = vmatpush.bf16.msra.mxu0 %v3473
        %3550 = vmatmul.bf16.gmra.mxu0 %v3309
        %v3551 = vpop.f32.mrf.mxu0
        %v3552 = vadd.f32 %v3523, %v3551
        %v3553 = vpop.f32.mrf.mxu0
        %v3554 = vadd.f32 %v3525, %v3553
        %3555 = vmatmul.bf16.gmra.mxu0 %v3312
        %v3556 = vpop.f32.mrf.mxu0
        %v3557 = vadd.f32 %v3528, %v3556
        %v3558 = vpop.f32.mrf.mxu0
        %v3559 = vadd.f32 %v3530, %v3558
        %3560 = vmatmul.bf16.gmra.mxu0 %v3315
        %v3561 = vpop.f32.mrf.mxu0
        %v3562 = vadd.f32 %v3533, %v3561
        %v3563 = vpop.f32.mrf.mxu0
        %v3564 = vadd.f32 %v3535, %v3563
        %3565 = vmatmul.bf16.gmra.mxu0 %v3318
        %v3566 = vpop.f32.mrf.mxu0
        %v3567 = vadd.f32 %v3538, %v3566
        %v3568 = vpop.f32.mrf.mxu0
        %v3569 = vadd.f32 %v3540, %v3568
        %3570 = vdwg.mxu0
        %3571 = vmatpush.bf16.msra.mxu0 %v3488
        %3572 = vmatpush.bf16.msra.mxu0 %v3487
        %3573 = vmatpush.bf16.msra.mxu0 %v3486
        %3574 = vmatpush.bf16.msra.mxu0 %v3485
        %3575 = vmatpush.bf16.msra.mxu0 %v3484
        %3576 = vmatpush.bf16.msra.mxu0 %v3483
        %3577 = vmatpush.bf16.msra.mxu0 %v3482
        %3578 = vmatpush.bf16.msra.mxu0 %v3481
        %3579 = vmatmul.bf16.gmra.mxu0 %v3310
        %v3580 = vpop.f32.mrf.mxu0
        %v3581 = vadd.f32 %v3552, %v3580
        %v3582 = vpop.f32.mrf.mxu0
        %v3583 = vadd.f32 %v3554, %v3582
        %3584 = vmatmul.bf16.gmra.mxu0 %v3313
        %v3585 = vpop.f32.mrf.mxu0
        %v3586 = vadd.f32 %v3557, %v3585
        %v3587 = vpop.f32.mrf.mxu0
        %v3588 = vadd.f32 %v3559, %v3587
        %3589 = vmatmul.bf16.gmra.mxu0 %v3316
        %v3590 = vpop.f32.mrf.mxu0
        %v3591 = vadd.f32 %v3562, %v3590
        %v3592 = vpop.f32.mrf.mxu0
        %v3593 = vadd.f32 %v3564, %v3592
        %3594 = vmatmul.bf16.gmra.mxu0 %v3319
        %v3595 = vpop.f32.mrf.mxu0
        %v3596 = vadd.f32 %v3567, %v3595
        %v3597 = vpop.f32.mrf.mxu0
        %v3598 = vadd.f32 %v3569, %v3597
        %3599 = vdwg.mxu0
        %v3648 = vunpack.c.l.b16 %v3164
        %v3649 = vunpack.c.l.b16 %v3165
        %v3650 = vunpack.c.l.b16 %v3166
        %v3651 = vunpack.c.l.b16 %v3167
        %v3652 = vunpack.c.l.b16 %v3168
        %v3653 = vunpack.c.l.b16 %v3169
        %v3654 = vunpack.c.l.b16 %v3170
        %v3655 = vunpack.c.l.b16 %v3171
        %v3656 = vunpack.c.l.b16 %v3172
        %v3657 = vunpack.c.l.b16 %v3173
        %v3658 = vunpack.c.l.b16 %v3174
        %v3659 = vunpack.c.l.b16 %v3175
        %v3660 = vunpack.c.l.b16 %v3176
        %v3661 = vunpack.c.l.b16 %v3177
        %v3662 = vunpack.c.l.b16 %v3178
        %v3663 = vunpack.c.l.b16 %v3179
        %v3664 = vunpack.c.l.b16 %v3180
        %v3665 = vunpack.c.l.b16 %v3181
        %v3666 = vunpack.c.l.b16 %v3182
        %v3667 = vunpack.c.l.b16 %v3183
        %v3668 = vunpack.c.l.b16 %v3184
        %v3669 = vunpack.c.l.b16 %v3185
        %v3670 = vunpack.c.l.b16 %v3186
        %v3671 = vunpack.c.l.b16 %v3187
        %v3672 = vunpack.c.l.b16 %v3188
        %v3673 = vunpack.c.l.b16 %v3189
        %v3674 = vunpack.c.l.b16 %v3190
        %v3675 = vunpack.c.l.b16 %v3191
        %v3676 = vunpack.c.l.b16 %v3192
        %v3677 = vunpack.c.l.b16 %v3193
        %v3678 = vunpack.c.l.b16 %v3194
        %v3679 = vunpack.c.l.b16 %v3195
        %v3680 = vunpack.c.l.b16 %v3196
        %v3681 = vunpack.c.l.b16 %v3197
        %v3682 = vunpack.c.l.b16 %v3198
        %v3683 = vunpack.c.l.b16 %v3199
        %v3684 = vunpack.c.l.b16 %v3200
        %v3685 = vunpack.c.l.b16 %v3201
        %v3686 = vunpack.c.l.b16 %v3202
        %v3687 = vunpack.c.l.b16 %v3203
        %v3688 = vunpack.c.l.b16 %v3204
        %v3689 = vunpack.c.l.b16 %v3205
        %v3690 = vunpack.c.l.b16 %v3206
        %v3691 = vunpack.c.l.b16 %v3207
        %v3692 = vunpack.c.l.b16 %v3208
        %v3693 = vunpack.c.l.b16 %v3209
        %v3694 = vunpack.c.l.b16 %v3210
        %v3695 = vunpack.c.l.b16 %v3211
        %v3696 = vpack.c.b16 %v3649, %v3648
        %v3697 = vpack.c.b16 %v3651, %v3650
        %v3698 = vpack.c.b16 %v3653, %v3652
        %v3699 = vpack.c.b16 %v3655, %v3654
        %v3700 = vpack.c.b16 %v3657, %v3656
        %v3701 = vpack.c.b16 %v3659, %v3658
        %v3702 = vpack.c.b16 %v3661, %v3660
        %v3703 = vpack.c.b16 %v3663, %v3662
        %v3704 = vpack.c.b16 %v3665, %v3664
        %v3705 = vpack.c.b16 %v3667, %v3666
        %v3706 = vpack.c.b16 %v3669, %v3668
        %v3707 = vpack.c.b16 %v3671, %v3670
        %v3708 = vpack.c.b16 %v3673, %v3672
        %v3709 = vpack.c.b16 %v3675, %v3674
        %v3710 = vpack.c.b16 %v3677, %v3676
        %v3711 = vpack.c.b16 %v3679, %v3678
        %v3712 = vpack.c.b16 %v3681, %v3680
        %v3713 = vpack.c.b16 %v3683, %v3682
        %v3714 = vpack.c.b16 %v3685, %v3684
        %v3715 = vpack.c.b16 %v3687, %v3686
        %v3716 = vpack.c.b16 %v3689, %v3688
        %v3717 = vpack.c.b16 %v3691, %v3690
        %v3718 = vpack.c.b16 %v3693, %v3692
        %v3719 = vpack.c.b16 %v3695, %v3694
        %3744 = vmatpush.bf16.msra.mxu0 %v3703
        %3745 = vmatpush.bf16.msra.mxu0 %v3702
        %3746 = vmatpush.bf16.msra.mxu0 %v3701
        %3747 = vmatpush.bf16.msra.mxu0 %v3700
        %3748 = vmatpush.bf16.msra.mxu0 %v3699
        %3749 = vmatpush.bf16.msra.mxu0 %v3698
        %3750 = vmatpush.bf16.msra.mxu0 %v3697
        %3751 = vmatpush.bf16.msra.mxu0 %v3696
        %3752 = vmatmul.bf16.gmra.mxu0 %v3152
        %v3753 = vpop.f32.mrf.mxu0
        %v3754 = vadd.f32 %v3581, %v3753
        %v3755 = vpop.f32.mrf.mxu0
        %v3756 = vadd.f32 %v3583, %v3755
        %3757 = vmatmul.bf16.gmra.mxu0 %v3155
        %v3758 = vpop.f32.mrf.mxu0
        %v3759 = vadd.f32 %v3586, %v3758
        %v3760 = vpop.f32.mrf.mxu0
        %v3761 = vadd.f32 %v3588, %v3760
        %3762 = vmatmul.bf16.gmra.mxu0 %v3158
        %v3763 = vpop.f32.mrf.mxu0
        %v3764 = vadd.f32 %v3591, %v3763
        %v3765 = vpop.f32.mrf.mxu0
        %v3766 = vadd.f32 %v3593, %v3765
        %3767 = vmatmul.bf16.gmra.mxu0 %v3161
        %v3768 = vpop.f32.mrf.mxu0
        %v3769 = vadd.f32 %v3596, %v3768
        %v3770 = vpop.f32.mrf.mxu0
        %v3771 = vadd.f32 %v3598, %v3770
        %3772 = vdwg.mxu0
        %3773 = vmatpush.bf16.msra.mxu0 %v3711
        %3774 = vmatpush.bf16.msra.mxu0 %v3710
        %3775 = vmatpush.bf16.msra.mxu0 %v3709
        %3776 = vmatpush.bf16.msra.mxu0 %v3708
        %3777 = vmatpush.bf16.msra.mxu0 %v3707
        %3778 = vmatpush.bf16.msra.mxu0 %v3706
        %3779 = vmatpush.bf16.msra.mxu0 %v3705
        %3780 = vmatpush.bf16.msra.mxu0 %v3704
        %3781 = vmatmul.bf16.gmra.mxu0 %v3153
        %v3782 = vpop.f32.mrf.mxu0
        %v3783 = vadd.f32 %v3754, %v3782
        %v3784 = vpop.f32.mrf.mxu0
        %v3785 = vadd.f32 %v3756, %v3784
        %3786 = vmatmul.bf16.gmra.mxu0 %v3156
        %v3787 = vpop.f32.mrf.mxu0
        %v3788 = vadd.f32 %v3759, %v3787
        %v3789 = vpop.f32.mrf.mxu0
        %v3790 = vadd.f32 %v3761, %v3789
        %3791 = vmatmul.bf16.gmra.mxu0 %v3159
        %v3792 = vpop.f32.mrf.mxu0
        %v3793 = vadd.f32 %v3764, %v3792
        %v3794 = vpop.f32.mrf.mxu0
        %v3795 = vadd.f32 %v3766, %v3794
        %3796 = vmatmul.bf16.gmra.mxu0 %v3162
        %v3797 = vpop.f32.mrf.mxu0
        %v3798 = vadd.f32 %v3769, %v3797
        %v3799 = vpop.f32.mrf.mxu0
        %v3800 = vadd.f32 %v3771, %v3799
        %3801 = vdwg.mxu0
        %3802 = vmatpush.bf16.msra.mxu0 %v3719
        %3803 = vmatpush.bf16.msra.mxu0 %v3718
        %3804 = vmatpush.bf16.msra.mxu0 %v3717
        %3805 = vmatpush.bf16.msra.mxu0 %v3716
        %3806 = vmatpush.bf16.msra.mxu0 %v3715
        %3807 = vmatpush.bf16.msra.mxu0 %v3714
        %3808 = vmatpush.bf16.msra.mxu0 %v3713
        %3809 = vmatpush.bf16.msra.mxu0 %v3712
        %3810 = vmatmul.bf16.gmra.mxu0 %v3154
        %v3811 = vpop.f32.mrf.mxu0
        %v3812 = vadd.f32 %v3783, %v3811
        %v3813 = vpop.f32.mrf.mxu0
        %v3814 = vadd.f32 %v3785, %v3813
        %3815 = vmatmul.bf16.gmra.mxu0 %v3157
        %v3816 = vpop.f32.mrf.mxu0
        %v3817 = vadd.f32 %v3788, %v3816
        %v3818 = vpop.f32.mrf.mxu0
        %v3819 = vadd.f32 %v3790, %v3818
        %3820 = vmatmul.bf16.gmra.mxu0 %v3160
        %v3821 = vpop.f32.mrf.mxu0
        %v3822 = vadd.f32 %v3793, %v3821
        %v3823 = vpop.f32.mrf.mxu0
        %v3824 = vadd.f32 %v3795, %v3823
        %3825 = vmatmul.bf16.gmra.mxu0 %v3163
        %v3826 = vpop.f32.mrf.mxu0
        %v3827 = vadd.f32 %v3798, %v3826
        %v3828 = vpop.f32.mrf.mxu0
        %v3829 = vadd.f32 %v3800, %v3828
        %3830 = vdwg.mxu0
        %s3831 = scalar_lea.vmem [#allocation3], 32
        %v3832 = vld [vmem:[%s3831] sm:$0xff]
        %v3833 = vld [vmem:[%s3831 + $0x8] sm:$0x3]
        %v3834 = vld [vmem:[%s3831 + $0x10] sm:$0xff]
        %v3835 = vld [vmem:[%s3831 + $0x18] sm:$0x3]
        %v3836 = vld [vmem:[%s3831 + $0x20] sm:$0xff]
        %v3837 = vld [vmem:[%s3831 + $0x28] sm:$0x3]
        %v3838 = vld [vmem:[%s3831 + $0x30] sm:$0xff]
        %v3839 = vld [vmem:[%s3831 + $0x38] sm:$0x3]
        %v3840 = vld [vmem:[%s3831 + $0x40] sm:$0xff]
        %v3841 = vld [vmem:[%s3831 + $0x48] sm:$0x3]
        %v3842 = vld [vmem:[%s3831 + $0x50] sm:$0xff]
        %v3843 = vld [vmem:[%s3831 + $0x58] sm:$0x3]
        %v3844 = vld [vmem:[%s3831 + $0x60] sm:$0xff]
        %v3845 = vld [vmem:[%s3831 + $0x68] sm:$0x3]
        %v3846 = vld [vmem:[%s3831 + $0x70] sm:$0xff]
        %v3847 = vld [vmem:[%s3831 + $0x78] sm:$0x3]
        %v3864 = vrot.slane %v3832, 1
        %v3865 = vrot.slane %v3833, 1
        %v3866 = vsel %vm753, %v3864, %v3865
        %v3867 = vrot.slane %v3834, 1
        %v3868 = vrot.slane %v3835, 1
        %v3869 = vsel %vm753, %v3867, %v3868
        %v3870 = vrot.slane %v3836, 1
        %v3871 = vrot.slane %v3837, 1
        %v3872 = vsel %vm753, %v3870, %v3871
        %v3873 = vrot.slane %v3838, 1
        %v3874 = vrot.slane %v3839, 1
        %v3875 = vsel %vm753, %v3873, %v3874
        %v3876 = vrot.slane %v3840, 1
        %v3877 = vrot.slane %v3841, 1
        %v3878 = vsel %vm753, %v3876, %v3877
        %v3879 = vrot.slane %v3842, 1
        %v3880 = vrot.slane %v3843, 1
        %v3881 = vsel %vm753, %v3879, %v3880
        %v3882 = vrot.slane %v3844, 1
        %v3883 = vrot.slane %v3845, 1
        %v3884 = vsel %vm753, %v3882, %v3883
        %v3885 = vrot.slane %v3846, 1
        %v3886 = vrot.slane %v3847, 1
        %v3887 = vsel %vm753, %v3885, %v3886
        %v3896 = vrot.slane %v3832, 2
        %v3897 = vrot.slane %v3833, 2
        %v3898 = vsel %vm818, %v3896, %v3897
        %v3899 = vrot.slane %v3834, 2
        %v3900 = vrot.slane %v3835, 2
        %v3901 = vsel %vm818, %v3899, %v3900
        %v3902 = vrot.slane %v3836, 2
        %v3903 = vrot.slane %v3837, 2
        %v3904 = vsel %vm818, %v3902, %v3903
        %v3905 = vrot.slane %v3838, 2
        %v3906 = vrot.slane %v3839, 2
        %v3907 = vsel %vm818, %v3905, %v3906
        %v3908 = vrot.slane %v3840, 2
        %v3909 = vrot.slane %v3841, 2
        %v3910 = vsel %vm818, %v3908, %v3909
        %v3911 = vrot.slane %v3842, 2
        %v3912 = vrot.slane %v3843, 2
        %v3913 = vsel %vm818, %v3911, %v3912
        %v3914 = vrot.slane %v3844, 2
        %v3915 = vrot.slane %v3845, 2
        %v3916 = vsel %vm818, %v3914, %v3915
        %v3917 = vrot.slane %v3846, 2
        %v3918 = vrot.slane %v3847, 2
        %v3919 = vsel %vm818, %v3917, %v3918
        %v3928 = vpack.c.bf16 %v3834, %v3832
        %v3929 = vpack.c.bf16 %v3869, %v3866
        %v3930 = vpack.c.bf16 %v3901, %v3898
        %v3931 = vpack.c.bf16 %v3838, %v3836
        %v3932 = vpack.c.bf16 %v3875, %v3872
        %v3933 = vpack.c.bf16 %v3907, %v3904
        %v3934 = vpack.c.bf16 %v3842, %v3840
        %v3935 = vpack.c.bf16 %v3881, %v3878
        %v3936 = vpack.c.bf16 %v3913, %v3910
        %v3937 = vpack.c.bf16 %v3846, %v3844
        %v3938 = vpack.c.bf16 %v3887, %v3884
        %v3939 = vpack.c.bf16 %v3919, %v3916
        %s3940 = scalar_lea.vmem %s6, 384
        %v3941 = vld [vmem:[%s3940] sm:$0xf]
        %v3942 = vld [vmem:[%s3940 + $0x4] sm:$0xf]
        %v3943 = vld [vmem:[%s3940 + $0x8] sm:$0xf]
        %v3944 = vld [vmem:[%s3940 + $0xc] sm:$0xf]
        %v3945 = vld [vmem:[%s3940 + $0x10] sm:$0xf]
        %v3946 = vld [vmem:[%s3940 + $0x14] sm:$0xf]
        %v3947 = vld [vmem:[%s3940 + $0x18] sm:$0xf]
        %v3948 = vld [vmem:[%s3940 + $0x1c] sm:$0xf]
        %v3949 = vld [vmem:[%s3940 + $0x20] sm:$0xf]
        %v3950 = vld [vmem:[%s3940 + $0x24] sm:$0xf]
        %v3951 = vld [vmem:[%s3940 + $0x28] sm:$0xf]
        %v3952 = vld [vmem:[%s3940 + $0x2c] sm:$0xf]
        %v3953 = vld [vmem:[%s3940 + $0x30] sm:$0xf]
        %v3954 = vld [vmem:[%s3940 + $0x34] sm:$0xf]
        %v3955 = vld [vmem:[%s3940 + $0x38] sm:$0xf]
        %v3956 = vld [vmem:[%s3940 + $0x3c] sm:$0xf]
        %v3957 = vld [vmem:[%s3940 + $0x40] sm:$0xf]
        %v3958 = vld [vmem:[%s3940 + $0x44] sm:$0xf]
        %v3959 = vld [vmem:[%s3940 + $0x48] sm:$0xf]
        %v3960 = vld [vmem:[%s3940 + $0x4c] sm:$0xf]
        %v3961 = vld [vmem:[%s3940 + $0x50] sm:$0xf]
        %v3962 = vld [vmem:[%s3940 + $0x54] sm:$0xf]
        %v3963 = vld [vmem:[%s3940 + $0x58] sm:$0xf]
        %v3964 = vld [vmem:[%s3940 + $0x5c] sm:$0xf]
        %v3965 = vld [vmem:[%s3940 + $0x60] sm:$0xf]
        %v3966 = vld [vmem:[%s3940 + $0x64] sm:$0xf]
        %v3967 = vld [vmem:[%s3940 + $0x68] sm:$0xf]
        %v3968 = vld [vmem:[%s3940 + $0x6c] sm:$0xf]
        %v3969 = vld [vmem:[%s3940 + $0x70] sm:$0xf]
        %v3970 = vld [vmem:[%s3940 + $0x74] sm:$0xf]
        %v3971 = vld [vmem:[%s3940 + $0x78] sm:$0xf]
        %v3972 = vld [vmem:[%s3940 + $0x7c] sm:$0xf]
        %v3973 = vld [vmem:[%s3940 + $0x80] sm:$0xf]
        %v3974 = vld [vmem:[%s3940 + $0x84] sm:$0xf]
        %v3975 = vld [vmem:[%s3940 + $0x88] sm:$0xf]
        %v3976 = vld [vmem:[%s3940 + $0x8c] sm:$0xf]
        %v3977 = vld [vmem:[%s3940 + $0x90] sm:$0xf]
        %v3978 = vld [vmem:[%s3940 + $0x94] sm:$0xf]
        %v3979 = vld [vmem:[%s3940 + $0x98] sm:$0xf]
        %v3980 = vld [vmem:[%s3940 + $0x9c] sm:$0xf]
        %v3981 = vld [vmem:[%s3940 + $0xa0] sm:$0xf]
        %v3982 = vld [vmem:[%s3940 + $0xa4] sm:$0xf]
        %v3983 = vld [vmem:[%s3940 + $0xa8] sm:$0xf]
        %v3984 = vld [vmem:[%s3940 + $0xac] sm:$0xf]
        %v3985 = vld [vmem:[%s3940 + $0xb0] sm:$0xf]
        %v3986 = vld [vmem:[%s3940 + $0xb4] sm:$0xf]
        %v3987 = vld [vmem:[%s3940 + $0xb8] sm:$0xf]
        %v3988 = vld [vmem:[%s3940 + $0xbc] sm:$0xf]
        %v4037 = vunpack.c.l.b16 %v3941
        %v4038 = vunpack.c.l.b16 %v3942
        %v4039 = vunpack.c.l.b16 %v3943
        %v4040 = vunpack.c.l.b16 %v3944
        %v4041 = vunpack.c.l.b16 %v3945
        %v4042 = vunpack.c.l.b16 %v3946
        %v4043 = vunpack.c.l.b16 %v3947
        %v4044 = vunpack.c.l.b16 %v3948
        %v4045 = vunpack.c.l.b16 %v3949
        %v4046 = vunpack.c.l.b16 %v3950
        %v4047 = vunpack.c.l.b16 %v3951
        %v4048 = vunpack.c.l.b16 %v3952
        %v4049 = vunpack.c.l.b16 %v3953
        %v4050 = vunpack.c.l.b16 %v3954
        %v4051 = vunpack.c.l.b16 %v3955
        %v4052 = vunpack.c.l.b16 %v3956
        %v4053 = vunpack.c.l.b16 %v3957
        %v4054 = vunpack.c.l.b16 %v3958
        %v4055 = vunpack.c.l.b16 %v3959
        %v4056 = vunpack.c.l.b16 %v3960
        %v4057 = vunpack.c.l.b16 %v3961
        %v4058 = vunpack.c.l.b16 %v3962
        %v4059 = vunpack.c.l.b16 %v3963
        %v4060 = vunpack.c.l.b16 %v3964
        %v4061 = vunpack.c.l.b16 %v3965
        %v4062 = vunpack.c.l.b16 %v3966
        %v4063 = vunpack.c.l.b16 %v3967
        %v4064 = vunpack.c.l.b16 %v3968
        %v4065 = vunpack.c.l.b16 %v3969
        %v4066 = vunpack.c.l.b16 %v3970
        %v4067 = vunpack.c.l.b16 %v3971
        %v4068 = vunpack.c.l.b16 %v3972
        %v4069 = vunpack.c.l.b16 %v3973
        %v4070 = vunpack.c.l.b16 %v3974
        %v4071 = vunpack.c.l.b16 %v3975
        %v4072 = vunpack.c.l.b16 %v3976
        %v4073 = vunpack.c.l.b16 %v3977
        %v4074 = vunpack.c.l.b16 %v3978
        %v4075 = vunpack.c.l.b16 %v3979
        %v4076 = vunpack.c.l.b16 %v3980
        %v4077 = vunpack.c.l.b16 %v3981
        %v4078 = vunpack.c.l.b16 %v3982
        %v4079 = vunpack.c.l.b16 %v3983
        %v4080 = vunpack.c.l.b16 %v3984
        %v4081 = vunpack.c.l.b16 %v3985
        %v4082 = vunpack.c.l.b16 %v3986
        %v4083 = vunpack.c.l.b16 %v3987
        %v4084 = vunpack.c.l.b16 %v3988
        %v4085 = vpack.c.b16 %v4038, %v4037
        %v4086 = vpack.c.b16 %v4040, %v4039
        %v4087 = vpack.c.b16 %v4042, %v4041
        %v4088 = vpack.c.b16 %v4044, %v4043
        %v4089 = vpack.c.b16 %v4046, %v4045
        %v4090 = vpack.c.b16 %v4048, %v4047
        %v4091 = vpack.c.b16 %v4050, %v4049
        %v4092 = vpack.c.b16 %v4052, %v4051
        %v4093 = vpack.c.b16 %v4054, %v4053
        %v4094 = vpack.c.b16 %v4056, %v4055
        %v4095 = vpack.c.b16 %v4058, %v4057
        %v4096 = vpack.c.b16 %v4060, %v4059
        %v4097 = vpack.c.b16 %v4062, %v4061
        %v4098 = vpack.c.b16 %v4064, %v4063
        %v4099 = vpack.c.b16 %v4066, %v4065
        %v4100 = vpack.c.b16 %v4068, %v4067
        %v4101 = vpack.c.b16 %v4070, %v4069
        %v4102 = vpack.c.b16 %v4072, %v4071
        %v4103 = vpack.c.b16 %v4074, %v4073
        %v4104 = vpack.c.b16 %v4076, %v4075
        %v4105 = vpack.c.b16 %v4078, %v4077
        %v4106 = vpack.c.b16 %v4080, %v4079
        %v4107 = vpack.c.b16 %v4082, %v4081
        %v4108 = vpack.c.b16 %v4084, %v4083
        %4133 = vmatpush.bf16.msra.mxu0 %v4092
        %4134 = vmatpush.bf16.msra.mxu0 %v4091
        %4135 = vmatpush.bf16.msra.mxu0 %v4090
        %4136 = vmatpush.bf16.msra.mxu0 %v4089
        %4137 = vmatpush.bf16.msra.mxu0 %v4088
        %4138 = vmatpush.bf16.msra.mxu0 %v4087
        %4139 = vmatpush.bf16.msra.mxu0 %v4086
        %4140 = vmatpush.bf16.msra.mxu0 %v4085
        %4141 = vmatmul.bf16.gmra.mxu0 %v3928
        %v4142 = vpop.f32.mrf.mxu0
        %v4143 = vadd.f32 0.0, %v4142
        %v4144 = vpop.f32.mrf.mxu0
        %v4145 = vadd.f32 0.0, %v4144
        %4146 = vmatmul.bf16.gmra.mxu0 %v3931
        %v4147 = vpop.f32.mrf.mxu0
        %v4148 = vadd.f32 0.0, %v4147
        %v4149 = vpop.f32.mrf.mxu0
        %v4150 = vadd.f32 0.0, %v4149
        %4151 = vmatmul.bf16.gmra.mxu0 %v3934
        %v4152 = vpop.f32.mrf.mxu0
        %v4153 = vadd.f32 0.0, %v4152
        %v4154 = vpop.f32.mrf.mxu0
        %v4155 = vadd.f32 0.0, %v4154
        %4156 = vmatmul.bf16.gmra.mxu0 %v3937
        %v4157 = vpop.f32.mrf.mxu0
        %v4158 = vadd.f32 0.0, %v4157
        %v4159 = vpop.f32.mrf.mxu0
        %v4160 = vadd.f32 0.0, %v4159
        %4161 = vdwg.mxu0
        %4162 = vmatpush.bf16.msra.mxu0 %v4100
        %4163 = vmatpush.bf16.msra.mxu0 %v4099
        %4164 = vmatpush.bf16.msra.mxu0 %v4098
        %4165 = vmatpush.bf16.msra.mxu0 %v4097
        %4166 = vmatpush.bf16.msra.mxu0 %v4096
        %4167 = vmatpush.bf16.msra.mxu0 %v4095
        %4168 = vmatpush.bf16.msra.mxu0 %v4094
        %4169 = vmatpush.bf16.msra.mxu0 %v4093
        %4170 = vmatmul.bf16.gmra.mxu0 %v3929
        %v4171 = vpop.f32.mrf.mxu0
        %v4172 = vadd.f32 %v4143, %v4171
        %v4173 = vpop.f32.mrf.mxu0
        %v4174 = vadd.f32 %v4145, %v4173
        %4175 = vmatmul.bf16.gmra.mxu0 %v3932
        %v4176 = vpop.f32.mrf.mxu0
        %v4177 = vadd.f32 %v4148, %v4176
        %v4178 = vpop.f32.mrf.mxu0
        %v4179 = vadd.f32 %v4150, %v4178
        %4180 = vmatmul.bf16.gmra.mxu0 %v3935
        %v4181 = vpop.f32.mrf.mxu0
        %v4182 = vadd.f32 %v4153, %v4181
        %v4183 = vpop.f32.mrf.mxu0
        %v4184 = vadd.f32 %v4155, %v4183
        %4185 = vmatmul.bf16.gmra.mxu0 %v3938
        %v4186 = vpop.f32.mrf.mxu0
        %v4187 = vadd.f32 %v4158, %v4186
        %v4188 = vpop.f32.mrf.mxu0
        %v4189 = vadd.f32 %v4160, %v4188
        %4190 = vdwg.mxu0
        %4191 = vmatpush.bf16.msra.mxu0 %v4108
        %4192 = vmatpush.bf16.msra.mxu0 %v4107
        %4193 = vmatpush.bf16.msra.mxu0 %v4106
        %4194 = vmatpush.bf16.msra.mxu0 %v4105
        %4195 = vmatpush.bf16.msra.mxu0 %v4104
        %4196 = vmatpush.bf16.msra.mxu0 %v4103
        %4197 = vmatpush.bf16.msra.mxu0 %v4102
        %4198 = vmatpush.bf16.msra.mxu0 %v4101
        %4199 = vmatmul.bf16.gmra.mxu0 %v3930
        %v4200 = vpop.f32.mrf.mxu0
        %v4201 = vadd.f32 %v4172, %v4200
        %v4202 = vpop.f32.mrf.mxu0
        %v4203 = vadd.f32 %v4174, %v4202
        %4204 = vmatmul.bf16.gmra.mxu0 %v3933
        %v4205 = vpop.f32.mrf.mxu0
        %v4206 = vadd.f32 %v4177, %v4205
        %v4207 = vpop.f32.mrf.mxu0
        %v4208 = vadd.f32 %v4179, %v4207
        %4209 = vmatmul.bf16.gmra.mxu0 %v3936
        %v4210 = vpop.f32.mrf.mxu0
        %v4211 = vadd.f32 %v4182, %v4210
        %v4212 = vpop.f32.mrf.mxu0
        %v4213 = vadd.f32 %v4184, %v4212
        %4214 = vmatmul.bf16.gmra.mxu0 %v3939
        %v4215 = vpop.f32.mrf.mxu0
        %v4216 = vadd.f32 %v4187, %v4215
        %v4217 = vpop.f32.mrf.mxu0
        %v4218 = vadd.f32 %v4189, %v4217
        %4219 = vdwg.mxu0
        %v4220 = vadd.f32 %v3812, %v4201
        %v4221 = vadd.f32 %v3814, %v4203
        %v4222 = vadd.f32 %v3817, %v4206
        %v4223 = vadd.f32 %v3819, %v4208
        %v4224 = vadd.f32 %v3822, %v4211
        %v4225 = vadd.f32 %v3824, %v4213
        %v4226 = vadd.f32 %v3827, %v4216
        %v4227 = vadd.f32 %v3829, %v4218
        %v4228 = vld [vmem:[%s7] sm:$0x1]
        %v4230 = vperm.slane %v4228, 0
        %v4232 = vmul.f32 %v4220, %v4230
        %v4233 = vmul.f32 %v4221, %v4230
        %v4234 = vmul.f32 %v4222, %v4230
        %v4235 = vmul.f32 %v4223, %v4230
        %v4236 = vmul.f32 %v4224, %v4230
        %v4237 = vmul.f32 %v4225, %v4230
        %v4238 = vmul.f32 %v4226, %v4230
        %v4239 = vmul.f32 %v4227, %v4230
        %v4240 = vld [vmem:[%s8] sm:$0x1]
        %v4242 = vperm.slane %v4240, 0
        %v4244 = vadd.f32 %v4232, %v4242
        %v4245 = vadd.f32 %v4233, %v4242
        %v4246 = vadd.f32 %v4234, %v4242
        %v4247 = vadd.f32 %v4235, %v4242
        %v4248 = vadd.f32 %v4236, %v4242
        %v4249 = vadd.f32 %v4237, %v4242
        %v4250 = vadd.f32 %v4238, %v4242
        %v4251 = vadd.f32 %v4239, %v4242
        %v4252 = vmax.f32 %v4244, 0.0
        %v4253 = vmax.f32 %v4245, 0.0
        %v4254 = vmax.f32 %v4246, 0.0
        %v4255 = vmax.f32 %v4247, 0.0
        %v4256 = vmax.f32 %v4248, 0.0
        %v4257 = vmax.f32 %v4249, 0.0
        %v4258 = vmax.f32 %v4250, 0.0
        %v4259 = vmax.f32 %v4251, 0.0
        %v4260 = vadd.f32 %v3048, %v4252
        %v4261 = vadd.f32 %v3049, %v4253
        %v4262 = vadd.f32 %v3050, %v4254
        %v4263 = vadd.f32 %v3051, %v4255
        %v4264 = vadd.f32 %v3052, %v4256
        %v4265 = vadd.f32 %v3053, %v4257
        %v4266 = vadd.f32 %v3054, %v4258
        %v4267 = vadd.f32 %v3055, %v4259
        %s4268 = scalar_lea.vmem [#allocation4], 16
        %4269 = vst [vmem:[%s4268 + $0x1] sm:$0xff] %v4260
        %4270 = vst [vmem:[%s4268 + $0x11] sm:$0xff] %v4261
        %4271 = vst [vmem:[%s4268 + $0x21] sm:$0xff] %v4262
        %4272 = vst [vmem:[%s4268 + $0x31] sm:$0xff] %v4263
        %4273 = vst [vmem:[%s4268 + $0x41] sm:$0xff] %v4264
        %4274 = vst [vmem:[%s4268 + $0x51] sm:$0xff] %v4265
        %4275 = vst [vmem:[%s4268 + $0x61] sm:$0xff] %v4266
        %4276 = vst [vmem:[%s4268 + $0x71] sm:$0xff] %v4267
        %v4277 = vld [vmem:[#allocation4] sm:$0xff]
        %v4278 = vld [vmem:[#allocation4 + $0x8] sm:$0x3]
        %v4279 = vld [vmem:[#allocation4 + $0x10] sm:$0xff]
        %v4280 = vld [vmem:[#allocation4 + $0x18] sm:$0x3]
        %v4281 = vld [vmem:[#allocation4 + $0x20] sm:$0xff]
        %v4282 = vld [vmem:[#allocation4 + $0x28] sm:$0x3]
        %v4283 = vld [vmem:[#allocation4 + $0x30] sm:$0xff]
        %v4284 = vld [vmem:[#allocation4 + $0x38] sm:$0x3]
        %v4285 = vld [vmem:[#allocation4 + $0x40] sm:$0xff]
        %v4286 = vld [vmem:[#allocation4 + $0x48] sm:$0x3]
        %v4287 = vld [vmem:[#allocation4 + $0x50] sm:$0xff]
        %v4288 = vld [vmem:[#allocation4 + $0x58] sm:$0x3]
        %v4289 = vld [vmem:[#allocation4 + $0x60] sm:$0xff]
        %v4290 = vld [vmem:[#allocation4 + $0x68] sm:$0x3]
        %v4291 = vld [vmem:[#allocation4 + $0x70] sm:$0xff]
        %v4292 = vld [vmem:[#allocation4 + $0x78] sm:$0x3]
        %v4309 = vrot.slane %v4277, 1
        %v4310 = vrot.slane %v4278, 1
        %v4311 = vsel %vm753, %v4309, %v4310
        %v4312 = vrot.slane %v4279, 1
        %v4313 = vrot.slane %v4280, 1
        %v4314 = vsel %vm753, %v4312, %v4313
        %v4315 = vrot.slane %v4281, 1
        %v4316 = vrot.slane %v4282, 1
        %v4317 = vsel %vm753, %v4315, %v4316
        %v4318 = vrot.slane %v4283, 1
        %v4319 = vrot.slane %v4284, 1
        %v4320 = vsel %vm753, %v4318, %v4319
        %v4321 = vrot.slane %v4285, 1
        %v4322 = vrot.slane %v4286, 1
        %v4323 = vsel %vm753, %v4321, %v4322
        %v4324 = vrot.slane %v4287, 1
        %v4325 = vrot.slane %v4288, 1
        %v4326 = vsel %vm753, %v4324, %v4325
        %v4327 = vrot.slane %v4289, 1
        %v4328 = vrot.slane %v4290, 1
        %v4329 = vsel %vm753, %v4327, %v4328
        %v4330 = vrot.slane %v4291, 1
        %v4331 = vrot.slane %v4292, 1
        %v4332 = vsel %vm753, %v4330, %v4331
        %v4341 = vrot.slane %v4277, 2
        %v4342 = vrot.slane %v4278, 2
        %v4343 = vsel %vm818, %v4341, %v4342
        %v4344 = vrot.slane %v4279, 2
        %v4345 = vrot.slane %v4280, 2
        %v4346 = vsel %vm818, %v4344, %v4345
        %v4347 = vrot.slane %v4281, 2
        %v4348 = vrot.slane %v4282, 2
        %v4349 = vsel %vm818, %v4347, %v4348
        %v4350 = vrot.slane %v4283, 2
        %v4351 = vrot.slane %v4284, 2
        %v4352 = vsel %vm818, %v4350, %v4351
        %v4353 = vrot.slane %v4285, 2
        %v4354 = vrot.slane %v4286, 2
        %v4355 = vsel %vm818, %v4353, %v4354
        %v4356 = vrot.slane %v4287, 2
        %v4357 = vrot.slane %v4288, 2
        %v4358 = vsel %vm818, %v4356, %v4357
        %v4359 = vrot.slane %v4289, 2
        %v4360 = vrot.slane %v4290, 2
        %v4361 = vsel %vm818, %v4359, %v4360
        %v4362 = vrot.slane %v4291, 2
        %v4363 = vrot.slane %v4292, 2
        %v4364 = vsel %vm818, %v4362, %v4363
        %v4373 = vpack.c.bf16 %v4279, %v4277
        %v4374 = vpack.c.bf16 %v4314, %v4311
        %v4375 = vpack.c.bf16 %v4346, %v4343
        %v4376 = vpack.c.bf16 %v4283, %v4281
        %v4377 = vpack.c.bf16 %v4320, %v4317
        %v4378 = vpack.c.bf16 %v4352, %v4349
        %v4379 = vpack.c.bf16 %v4287, %v4285
        %v4380 = vpack.c.bf16 %v4326, %v4323
        %v4381 = vpack.c.bf16 %v4358, %v4355
        %v4382 = vpack.c.bf16 %v4291, %v4289
        %v4383 = vpack.c.bf16 %v4332, %v4329
        %v4384 = vpack.c.bf16 %v4364, %v4361
        %v4385 = vld [vmem:[%s9] sm:$0xf]
        %v4386 = vld [vmem:[%s9 + $0x4] sm:$0xf]
        %v4387 = vld [vmem:[%s9 + $0x8] sm:$0xf]
        %v4388 = vld [vmem:[%s9 + $0xc] sm:$0xf]
        %v4389 = vld [vmem:[%s9 + $0x10] sm:$0xf]
        %v4390 = vld [vmem:[%s9 + $0x14] sm:$0xf]
        %v4391 = vld [vmem:[%s9 + $0x18] sm:$0xf]
        %v4392 = vld [vmem:[%s9 + $0x1c] sm:$0xf]
        %v4393 = vld [vmem:[%s9 + $0x20] sm:$0xf]
        %v4394 = vld [vmem:[%s9 + $0x24] sm:$0xf]
        %v4395 = vld [vmem:[%s9 + $0x28] sm:$0xf]
        %v4396 = vld [vmem:[%s9 + $0x2c] sm:$0xf]
        %v4397 = vld [vmem:[%s9 + $0x30] sm:$0xf]
        %v4398 = vld [vmem:[%s9 + $0x34] sm:$0xf]
        %v4399 = vld [vmem:[%s9 + $0x38] sm:$0xf]
        %v4400 = vld [vmem:[%s9 + $0x3c] sm:$0xf]
        %v4401 = vld [vmem:[%s9 + $0x40] sm:$0xf]
        %v4402 = vld [vmem:[%s9 + $0x44] sm:$0xf]
        %v4403 = vld [vmem:[%s9 + $0x48] sm:$0xf]
        %v4404 = vld [vmem:[%s9 + $0x4c] sm:$0xf]
        %v4405 = vld [vmem:[%s9 + $0x50] sm:$0xf]
        %v4406 = vld [vmem:[%s9 + $0x54] sm:$0xf]
        %v4407 = vld [vmem:[%s9 + $0x58] sm:$0xf]
        %v4408 = vld [vmem:[%s9 + $0x5c] sm:$0xf]
        %v4409 = vld [vmem:[%s9 + $0x60] sm:$0xf]
        %v4410 = vld [vmem:[%s9 + $0x64] sm:$0xf]
        %v4411 = vld [vmem:[%s9 + $0x68] sm:$0xf]
        %v4412 = vld [vmem:[%s9 + $0x6c] sm:$0xf]
        %v4413 = vld [vmem:[%s9 + $0x70] sm:$0xf]
        %v4414 = vld [vmem:[%s9 + $0x74] sm:$0xf]
        %v4415 = vld [vmem:[%s9 + $0x78] sm:$0xf]
        %v4416 = vld [vmem:[%s9 + $0x7c] sm:$0xf]
        %v4417 = vld [vmem:[%s9 + $0x80] sm:$0xf]
        %v4418 = vld [vmem:[%s9 + $0x84] sm:$0xf]
        %v4419 = vld [vmem:[%s9 + $0x88] sm:$0xf]
        %v4420 = vld [vmem:[%s9 + $0x8c] sm:$0xf]
        %v4421 = vld [vmem:[%s9 + $0x90] sm:$0xf]
        %v4422 = vld [vmem:[%s9 + $0x94] sm:$0xf]
        %v4423 = vld [vmem:[%s9 + $0x98] sm:$0xf]
        %v4424 = vld [vmem:[%s9 + $0x9c] sm:$0xf]
        %v4425 = vld [vmem:[%s9 + $0xa0] sm:$0xf]
        %v4426 = vld [vmem:[%s9 + $0xa4] sm:$0xf]
        %v4427 = vld [vmem:[%s9 + $0xa8] sm:$0xf]
        %v4428 = vld [vmem:[%s9 + $0xac] sm:$0xf]
        %v4429 = vld [vmem:[%s9 + $0xb0] sm:$0xf]
        %v4430 = vld [vmem:[%s9 + $0xb4] sm:$0xf]
        %v4431 = vld [vmem:[%s9 + $0xb8] sm:$0xf]
        %v4432 = vld [vmem:[%s9 + $0xbc] sm:$0xf]
        %v4433 = vld [vmem:[%s4268] sm:$0xff]
        %v4434 = vld [vmem:[%s4268 + $0x8] sm:$0x3]
        %v4435 = vld [vmem:[%s4268 + $0x10] sm:$0xff]
        %v4436 = vld [vmem:[%s4268 + $0x18] sm:$0x3]
        %v4437 = vld [vmem:[%s4268 + $0x20] sm:$0xff]
        %v4438 = vld [vmem:[%s4268 + $0x28] sm:$0x3]
        %v4439 = vld [vmem:[%s4268 + $0x30] sm:$0xff]
        %v4440 = vld [vmem:[%s4268 + $0x38] sm:$0x3]
        %v4441 = vld [vmem:[%s4268 + $0x40] sm:$0xff]
        %v4442 = vld [vmem:[%s4268 + $0x48] sm:$0x3]
        %v4443 = vld [vmem:[%s4268 + $0x50] sm:$0xff]
        %v4444 = vld [vmem:[%s4268 + $0x58] sm:$0x3]
        %v4445 = vld [vmem:[%s4268 + $0x60] sm:$0xff]
        %v4446 = vld [vmem:[%s4268 + $0x68] sm:$0x3]
        %v4447 = vld [vmem:[%s4268 + $0x70] sm:$0xff]
        %v4448 = vld [vmem:[%s4268 + $0x78] sm:$0x3]
        %v4465 = vrot.slane %v4433, 1
        %v4466 = vrot.slane %v4434, 1
        %v4467 = vsel %vm753, %v4465, %v4466
        %v4468 = vrot.slane %v4435, 1
        %v4469 = vrot.slane %v4436, 1
        %v4470 = vsel %vm753, %v4468, %v4469
        %v4471 = vrot.slane %v4437, 1
        %v4472 = vrot.slane %v4438, 1
        %v4473 = vsel %vm753, %v4471, %v4472
        %v4474 = vrot.slane %v4439, 1
        %v4475 = vrot.slane %v4440, 1
        %v4476 = vsel %vm753, %v4474, %v4475
        %v4477 = vrot.slane %v4441, 1
        %v4478 = vrot.slane %v4442, 1
        %v4479 = vsel %vm753, %v4477, %v4478
        %v4480 = vrot.slane %v4443, 1
        %v4481 = vrot.slane %v4444, 1
        %v4482 = vsel %vm753, %v4480, %v4481
        %v4483 = vrot.slane %v4445, 1
        %v4484 = vrot.slane %v4446, 1
        %v4485 = vsel %vm753, %v4483, %v4484
        %v4486 = vrot.slane %v4447, 1
        %v4487 = vrot.slane %v4448, 1
        %v4488 = vsel %vm753, %v4486, %v4487
        %v4497 = vrot.slane %v4433, 2
        %v4498 = vrot.slane %v4434, 2
        %v4499 = vsel %vm818, %v4497, %v4498
        %v4500 = vrot.slane %v4435, 2
        %v4501 = vrot.slane %v4436, 2
        %v4502 = vsel %vm818, %v4500, %v4501
        %v4503 = vrot.slane %v4437, 2
        %v4504 = vrot.slane %v4438, 2
        %v4505 = vsel %vm818, %v4503, %v4504
        %v4506 = vrot.slane %v4439, 2
        %v4507 = vrot.slane %v4440, 2
        %v4508 = vsel %vm818, %v4506, %v4507
        %v4509 = vrot.slane %v4441, 2
        %v4510 = vrot.slane %v4442, 2
        %v4511 = vsel %vm818, %v4509, %v4510
        %v4512 = vrot.slane %v4443, 2
        %v4513 = vrot.slane %v4444, 2
        %v4514 = vsel %vm818, %v4512, %v4513
        %v4515 = vrot.slane %v4445, 2
        %v4516 = vrot.slane %v4446, 2
        %v4517 = vsel %vm818, %v4515, %v4516
        %v4518 = vrot.slane %v4447, 2
        %v4519 = vrot.slane %v4448, 2
        %v4520 = vsel %vm818, %v4518, %v4519
        %v4529 = vpack.c.bf16 %v4435, %v4433
        %v4530 = vpack.c.bf16 %v4470, %v4467
        %v4531 = vpack.c.bf16 %v4502, %v4499
        %v4532 = vpack.c.bf16 %v4439, %v4437
        %v4533 = vpack.c.bf16 %v4476, %v4473
        %v4534 = vpack.c.bf16 %v4508, %v4505
        %v4535 = vpack.c.bf16 %v4443, %v4441
        %v4536 = vpack.c.bf16 %v4482, %v4479
        %v4537 = vpack.c.bf16 %v4514, %v4511
        %v4538 = vpack.c.bf16 %v4447, %v4445
        %v4539 = vpack.c.bf16 %v4488, %v4485
        %v4540 = vpack.c.bf16 %v4520, %v4517
        %s4541 = scalar_lea.vmem %s9, 192
        %v4542 = vld [vmem:[%s4541] sm:$0xf]
        %v4543 = vld [vmem:[%s4541 + $0x4] sm:$0xf]
        %v4544 = vld [vmem:[%s4541 + $0x8] sm:$0xf]
        %v4545 = vld [vmem:[%s4541 + $0xc] sm:$0xf]
        %v4546 = vld [vmem:[%s4541 + $0x10] sm:$0xf]
        %v4547 = vld [vmem:[%s4541 + $0x14] sm:$0xf]
        %v4548 = vld [vmem:[%s4541 + $0x18] sm:$0xf]
        %v4549 = vld [vmem:[%s4541 + $0x1c] sm:$0xf]
        %v4550 = vld [vmem:[%s4541 + $0x20] sm:$0xf]
        %v4551 = vld [vmem:[%s4541 + $0x24] sm:$0xf]
        %v4552 = vld [vmem:[%s4541 + $0x28] sm:$0xf]
        %v4553 = vld [vmem:[%s4541 + $0x2c] sm:$0xf]
        %v4554 = vld [vmem:[%s4541 + $0x30] sm:$0xf]
        %v4555 = vld [vmem:[%s4541 + $0x34] sm:$0xf]
        %v4556 = vld [vmem:[%s4541 + $0x38] sm:$0xf]
        %v4557 = vld [vmem:[%s4541 + $0x3c] sm:$0xf]
        %v4558 = vld [vmem:[%s4541 + $0x40] sm:$0xf]
        %v4559 = vld [vmem:[%s4541 + $0x44] sm:$0xf]
        %v4560 = vld [vmem:[%s4541 + $0x48] sm:$0xf]
        %v4561 = vld [vmem:[%s4541 + $0x4c] sm:$0xf]
        %v4562 = vld [vmem:[%s4541 + $0x50] sm:$0xf]
        %v4563 = vld [vmem:[%s4541 + $0x54] sm:$0xf]
        %v4564 = vld [vmem:[%s4541 + $0x58] sm:$0xf]
        %v4565 = vld [vmem:[%s4541 + $0x5c] sm:$0xf]
        %v4566 = vld [vmem:[%s4541 + $0x60] sm:$0xf]
        %v4567 = vld [vmem:[%s4541 + $0x64] sm:$0xf]
        %v4568 = vld [vmem:[%s4541 + $0x68] sm:$0xf]
        %v4569 = vld [vmem:[%s4541 + $0x6c] sm:$0xf]
        %v4570 = vld [vmem:[%s4541 + $0x70] sm:$0xf]
        %v4571 = vld [vmem:[%s4541 + $0x74] sm:$0xf]
        %v4572 = vld [vmem:[%s4541 + $0x78] sm:$0xf]
        %v4573 = vld [vmem:[%s4541 + $0x7c] sm:$0xf]
        %v4574 = vld [vmem:[%s4541 + $0x80] sm:$0xf]
        %v4575 = vld [vmem:[%s4541 + $0x84] sm:$0xf]
        %v4576 = vld [vmem:[%s4541 + $0x88] sm:$0xf]
        %v4577 = vld [vmem:[%s4541 + $0x8c] sm:$0xf]
        %v4578 = vld [vmem:[%s4541 + $0x90] sm:$0xf]
        %v4579 = vld [vmem:[%s4541 + $0x94] sm:$0xf]
        %v4580 = vld [vmem:[%s4541 + $0x98] sm:$0xf]
        %v4581 = vld [vmem:[%s4541 + $0x9c] sm:$0xf]
        %v4582 = vld [vmem:[%s4541 + $0xa0] sm:$0xf]
        %v4583 = vld [vmem:[%s4541 + $0xa4] sm:$0xf]
        %v4584 = vld [vmem:[%s4541 + $0xa8] sm:$0xf]
        %v4585 = vld [vmem:[%s4541 + $0xac] sm:$0xf]
        %v4586 = vld [vmem:[%s4541 + $0xb0] sm:$0xf]
        %v4587 = vld [vmem:[%s4541 + $0xb4] sm:$0xf]
        %v4588 = vld [vmem:[%s4541 + $0xb8] sm:$0xf]
        %v4589 = vld [vmem:[%s4541 + $0xbc] sm:$0xf]
        %v4638 = vunpack.c.l.b16 %v4542
        %v4639 = vunpack.c.l.b16 %v4543
        %v4640 = vunpack.c.l.b16 %v4544
        %v4641 = vunpack.c.l.b16 %v4545
        %v4642 = vunpack.c.l.b16 %v4546
        %v4643 = vunpack.c.l.b16 %v4547
        %v4644 = vunpack.c.l.b16 %v4548
        %v4645 = vunpack.c.l.b16 %v4549
        %v4646 = vunpack.c.l.b16 %v4550
        %v4647 = vunpack.c.l.b16 %v4551
        %v4648 = vunpack.c.l.b16 %v4552
        %v4649 = vunpack.c.l.b16 %v4553
        %v4650 = vunpack.c.l.b16 %v4554
        %v4651 = vunpack.c.l.b16 %v4555
        %v4652 = vunpack.c.l.b16 %v4556
        %v4653 = vunpack.c.l.b16 %v4557
        %v4654 = vunpack.c.l.b16 %v4558
        %v4655 = vunpack.c.l.b16 %v4559
        %v4656 = vunpack.c.l.b16 %v4560
        %v4657 = vunpack.c.l.b16 %v4561
        %v4658 = vunpack.c.l.b16 %v4562
        %v4659 = vunpack.c.l.b16 %v4563
        %v4660 = vunpack.c.l.b16 %v4564
        %v4661 = vunpack.c.l.b16 %v4565
        %v4662 = vunpack.c.l.b16 %v4566
        %v4663 = vunpack.c.l.b16 %v4567
        %v4664 = vunpack.c.l.b16 %v4568
        %v4665 = vunpack.c.l.b16 %v4569
        %v4666 = vunpack.c.l.b16 %v4570
        %v4667 = vunpack.c.l.b16 %v4571
        %v4668 = vunpack.c.l.b16 %v4572
        %v4669 = vunpack.c.l.b16 %v4573
        %v4670 = vunpack.c.l.b16 %v4574
        %v4671 = vunpack.c.l.b16 %v4575
        %v4672 = vunpack.c.l.b16 %v4576
        %v4673 = vunpack.c.l.b16 %v4577
        %v4674 = vunpack.c.l.b16 %v4578
        %v4675 = vunpack.c.l.b16 %v4579
        %v4676 = vunpack.c.l.b16 %v4580
        %v4677 = vunpack.c.l.b16 %v4581
        %v4678 = vunpack.c.l.b16 %v4582
        %v4679 = vunpack.c.l.b16 %v4583
        %v4680 = vunpack.c.l.b16 %v4584
        %v4681 = vunpack.c.l.b16 %v4585
        %v4682 = vunpack.c.l.b16 %v4586
        %v4683 = vunpack.c.l.b16 %v4587
        %v4684 = vunpack.c.l.b16 %v4588
        %v4685 = vunpack.c.l.b16 %v4589
        %v4686 = vpack.c.b16 %v4639, %v4638
        %v4687 = vpack.c.b16 %v4641, %v4640
        %v4688 = vpack.c.b16 %v4643, %v4642
        %v4689 = vpack.c.b16 %v4645, %v4644
        %v4690 = vpack.c.b16 %v4647, %v4646
        %v4691 = vpack.c.b16 %v4649, %v4648
        %v4692 = vpack.c.b16 %v4651, %v4650
        %v4693 = vpack.c.b16 %v4653, %v4652
        %v4694 = vpack.c.b16 %v4655, %v4654
        %v4695 = vpack.c.b16 %v4657, %v4656
        %v4696 = vpack.c.b16 %v4659, %v4658
        %v4697 = vpack.c.b16 %v4661, %v4660
        %v4698 = vpack.c.b16 %v4663, %v4662
        %v4699 = vpack.c.b16 %v4665, %v4664
        %v4700 = vpack.c.b16 %v4667, %v4666
        %v4701 = vpack.c.b16 %v4669, %v4668
        %v4702 = vpack.c.b16 %v4671, %v4670
        %v4703 = vpack.c.b16 %v4673, %v4672
        %v4704 = vpack.c.b16 %v4675, %v4674
        %v4705 = vpack.c.b16 %v4677, %v4676
        %v4706 = vpack.c.b16 %v4679, %v4678
        %v4707 = vpack.c.b16 %v4681, %v4680
        %v4708 = vpack.c.b16 %v4683, %v4682
        %v4709 = vpack.c.b16 %v4685, %v4684
        %4734 = vmatpush.bf16.msra.mxu0 %v4693
        %4735 = vmatpush.bf16.msra.mxu0 %v4692
        %4736 = vmatpush.bf16.msra.mxu0 %v4691
        %4737 = vmatpush.bf16.msra.mxu0 %v4690
        %4738 = vmatpush.bf16.msra.mxu0 %v4689
        %4739 = vmatpush.bf16.msra.mxu0 %v4688
        %4740 = vmatpush.bf16.msra.mxu0 %v4687
        %4741 = vmatpush.bf16.msra.mxu0 %v4686
        %4742 = vmatmul.bf16.gmra.mxu0 %v4529
        %v4743 = vpop.f32.mrf.mxu0
        %v4744 = vadd.f32 0.0, %v4743
        %v4745 = vpop.f32.mrf.mxu0
        %v4746 = vadd.f32 0.0, %v4745
        %4747 = vmatmul.bf16.gmra.mxu0 %v4532
        %v4748 = vpop.f32.mrf.mxu0
        %v4749 = vadd.f32 0.0, %v4748
        %v4750 = vpop.f32.mrf.mxu0
        %v4751 = vadd.f32 0.0, %v4750
        %4752 = vmatmul.bf16.gmra.mxu0 %v4535
        %v4753 = vpop.f32.mrf.mxu0
        %v4754 = vadd.f32 0.0, %v4753
        %v4755 = vpop.f32.mrf.mxu0
        %v4756 = vadd.f32 0.0, %v4755
        %4757 = vmatmul.bf16.gmra.mxu0 %v4538
        %v4758 = vpop.f32.mrf.mxu0
        %v4759 = vadd.f32 0.0, %v4758
        %v4760 = vpop.f32.mrf.mxu0
        %v4761 = vadd.f32 0.0, %v4760
        %4762 = vdwg.mxu0
        %4763 = vmatpush.bf16.msra.mxu0 %v4701
        %4764 = vmatpush.bf16.msra.mxu0 %v4700
        %4765 = vmatpush.bf16.msra.mxu0 %v4699
        %4766 = vmatpush.bf16.msra.mxu0 %v4698
        %4767 = vmatpush.bf16.msra.mxu0 %v4697
        %4768 = vmatpush.bf16.msra.mxu0 %v4696
        %4769 = vmatpush.bf16.msra.mxu0 %v4695
        %4770 = vmatpush.bf16.msra.mxu0 %v4694
        %4771 = vmatmul.bf16.gmra.mxu0 %v4530
        %v4772 = vpop.f32.mrf.mxu0
        %v4773 = vadd.f32 %v4744, %v4772
        %v4774 = vpop.f32.mrf.mxu0
        %v4775 = vadd.f32 %v4746, %v4774
        %4776 = vmatmul.bf16.gmra.mxu0 %v4533
        %v4777 = vpop.f32.mrf.mxu0
        %v4778 = vadd.f32 %v4749, %v4777
        %v4779 = vpop.f32.mrf.mxu0
        %v4780 = vadd.f32 %v4751, %v4779
        %4781 = vmatmul.bf16.gmra.mxu0 %v4536
        %v4782 = vpop.f32.mrf.mxu0
        %v4783 = vadd.f32 %v4754, %v4782
        %v4784 = vpop.f32.mrf.mxu0
        %v4785 = vadd.f32 %v4756, %v4784
        %4786 = vmatmul.bf16.gmra.mxu0 %v4539
        %v4787 = vpop.f32.mrf.mxu0
        %v4788 = vadd.f32 %v4759, %v4787
        %v4789 = vpop.f32.mrf.mxu0
        %v4790 = vadd.f32 %v4761, %v4789
        %4791 = vdwg.mxu0
        %4792 = vmatpush.bf16.msra.mxu0 %v4709
        %4793 = vmatpush.bf16.msra.mxu0 %v4708
        %4794 = vmatpush.bf16.msra.mxu0 %v4707
        %4795 = vmatpush.bf16.msra.mxu0 %v4706
        %4796 = vmatpush.bf16.msra.mxu0 %v4705
        %4797 = vmatpush.bf16.msra.mxu0 %v4704
        %4798 = vmatpush.bf16.msra.mxu0 %v4703
        %4799 = vmatpush.bf16.msra.mxu0 %v4702
        %4800 = vmatmul.bf16.gmra.mxu0 %v4531
        %v4801 = vpop.f32.mrf.mxu0
        %v4802 = vadd.f32 %v4773, %v4801
        %v4803 = vpop.f32.mrf.mxu0
        %v4804 = vadd.f32 %v4775, %v4803
        %4805 = vmatmul.bf16.gmra.mxu0 %v4534
        %v4806 = vpop.f32.mrf.mxu0
        %v4807 = vadd.f32 %v4778, %v4806
        %v4808 = vpop.f32.mrf.mxu0
        %v4809 = vadd.f32 %v4780, %v4808
        %4810 = vmatmul.bf16.gmra.mxu0 %v4537
        %v4811 = vpop.f32.mrf.mxu0
        %v4812 = vadd.f32 %v4783, %v4811
        %v4813 = vpop.f32.mrf.mxu0
        %v4814 = vadd.f32 %v4785, %v4813
        %4815 = vmatmul.bf16.gmra.mxu0 %v4540
        %v4816 = vpop.f32.mrf.mxu0
        %v4817 = vadd.f32 %v4788, %v4816
        %v4818 = vpop.f32.mrf.mxu0
        %v4819 = vadd.f32 %v4790, %v4818
        %4820 = vdwg.mxu0
        %v4869 = vunpack.c.l.b16 %v4385
        %v4870 = vunpack.c.l.b16 %v4386
        %v4871 = vunpack.c.l.b16 %v4387
        %v4872 = vunpack.c.l.b16 %v4388
        %v4873 = vunpack.c.l.b16 %v4389
        %v4874 = vunpack.c.l.b16 %v4390
        %v4875 = vunpack.c.l.b16 %v4391
        %v4876 = vunpack.c.l.b16 %v4392
        %v4877 = vunpack.c.l.b16 %v4393
        %v4878 = vunpack.c.l.b16 %v4394
        %v4879 = vunpack.c.l.b16 %v4395
        %v4880 = vunpack.c.l.b16 %v4396
        %v4881 = vunpack.c.l.b16 %v4397
        %v4882 = vunpack.c.l.b16 %v4398
        %v4883 = vunpack.c.l.b16 %v4399
        %v4884 = vunpack.c.l.b16 %v4400
        %v4885 = vunpack.c.l.b16 %v4401
        %v4886 = vunpack.c.l.b16 %v4402
        %v4887 = vunpack.c.l.b16 %v4403
        %v4888 = vunpack.c.l.b16 %v4404
        %v4889 = vunpack.c.l.b16 %v4405
        %v4890 = vunpack.c.l.b16 %v4406
        %v4891 = vunpack.c.l.b16 %v4407
        %v4892 = vunpack.c.l.b16 %v4408
        %v4893 = vunpack.c.l.b16 %v4409
        %v4894 = vunpack.c.l.b16 %v4410
        %v4895 = vunpack.c.l.b16 %v4411
        %v4896 = vunpack.c.l.b16 %v4412
        %v4897 = vunpack.c.l.b16 %v4413
        %v4898 = vunpack.c.l.b16 %v4414
        %v4899 = vunpack.c.l.b16 %v4415
        %v4900 = vunpack.c.l.b16 %v4416
        %v4901 = vunpack.c.l.b16 %v4417
        %v4902 = vunpack.c.l.b16 %v4418
        %v4903 = vunpack.c.l.b16 %v4419
        %v4904 = vunpack.c.l.b16 %v4420
        %v4905 = vunpack.c.l.b16 %v4421
        %v4906 = vunpack.c.l.b16 %v4422
        %v4907 = vunpack.c.l.b16 %v4423
        %v4908 = vunpack.c.l.b16 %v4424
        %v4909 = vunpack.c.l.b16 %v4425
        %v4910 = vunpack.c.l.b16 %v4426
        %v4911 = vunpack.c.l.b16 %v4427
        %v4912 = vunpack.c.l.b16 %v4428
        %v4913 = vunpack.c.l.b16 %v4429
        %v4914 = vunpack.c.l.b16 %v4430
        %v4915 = vunpack.c.l.b16 %v4431
        %v4916 = vunpack.c.l.b16 %v4432
        %v4917 = vpack.c.b16 %v4870, %v4869
        %v4918 = vpack.c.b16 %v4872, %v4871
        %v4919 = vpack.c.b16 %v4874, %v4873
        %v4920 = vpack.c.b16 %v4876, %v4875
        %v4921 = vpack.c.b16 %v4878, %v4877
        %v4922 = vpack.c.b16 %v4880, %v4879
        %v4923 = vpack.c.b16 %v4882, %v4881
        %v4924 = vpack.c.b16 %v4884, %v4883
        %v4925 = vpack.c.b16 %v4886, %v4885
        %v4926 = vpack.c.b16 %v4888, %v4887
        %v4927 = vpack.c.b16 %v4890, %v4889
        %v4928 = vpack.c.b16 %v4892, %v4891
        %v4929 = vpack.c.b16 %v4894, %v4893
        %v4930 = vpack.c.b16 %v4896, %v4895
        %v4931 = vpack.c.b16 %v4898, %v4897
        %v4932 = vpack.c.b16 %v4900, %v4899
        %v4933 = vpack.c.b16 %v4902, %v4901
        %v4934 = vpack.c.b16 %v4904, %v4903
        %v4935 = vpack.c.b16 %v4906, %v4905
        %v4936 = vpack.c.b16 %v4908, %v4907
        %v4937 = vpack.c.b16 %v4910, %v4909
        %v4938 = vpack.c.b16 %v4912, %v4911
        %v4939 = vpack.c.b16 %v4914, %v4913
        %v4940 = vpack.c.b16 %v4916, %v4915
        %4965 = vmatpush.bf16.msra.mxu0 %v4924
        %4966 = vmatpush.bf16.msra.mxu0 %v4923
        %4967 = vmatpush.bf16.msra.mxu0 %v4922
        %4968 = vmatpush.bf16.msra.mxu0 %v4921
        %4969 = vmatpush.bf16.msra.mxu0 %v4920
        %4970 = vmatpush.bf16.msra.mxu0 %v4919
        %4971 = vmatpush.bf16.msra.mxu0 %v4918
        %4972 = vmatpush.bf16.msra.mxu0 %v4917
        %4973 = vmatmul.bf16.gmra.mxu0 %v4373
        %v4974 = vpop.f32.mrf.mxu0
        %v4975 = vadd.f32 %v4802, %v4974
        %v4976 = vpop.f32.mrf.mxu0
        %v4977 = vadd.f32 %v4804, %v4976
        %4978 = vmatmul.bf16.gmra.mxu0 %v4376
        %v4979 = vpop.f32.mrf.mxu0
        %v4980 = vadd.f32 %v4807, %v4979
        %v4981 = vpop.f32.mrf.mxu0
        %v4982 = vadd.f32 %v4809, %v4981
        %4983 = vmatmul.bf16.gmra.mxu0 %v4379
        %v4984 = vpop.f32.mrf.mxu0
        %v4985 = vadd.f32 %v4812, %v4984
        %v4986 = vpop.f32.mrf.mxu0
        %v4987 = vadd.f32 %v4814, %v4986
        %4988 = vmatmul.bf16.gmra.mxu0 %v4382
        %v4989 = vpop.f32.mrf.mxu0
        %v4990 = vadd.f32 %v4817, %v4989
        %v4991 = vpop.f32.mrf.mxu0
        %v4992 = vadd.f32 %v4819, %v4991
        %4993 = vdwg.mxu0
        %4994 = vmatpush.bf16.msra.mxu0 %v4932
        %4995 = vmatpush.bf16.msra.mxu0 %v4931
        %4996 = vmatpush.bf16.msra.mxu0 %v4930
        %4997 = vmatpush.bf16.msra.mxu0 %v4929
        %4998 = vmatpush.bf16.msra.mxu0 %v4928
        %4999 = vmatpush.bf16.msra.mxu0 %v4927
        %5000 = vmatpush.bf16.msra.mxu0 %v4926
        %5001 = vmatpush.bf16.msra.mxu0 %v4925
        %5002 = vmatmul.bf16.gmra.mxu0 %v4374
        %v5003 = vpop.f32.mrf.mxu0
        %v5004 = vadd.f32 %v4975, %v5003
        %v5005 = vpop.f32.mrf.mxu0
        %v5006 = vadd.f32 %v4977, %v5005
        %5007 = vmatmul.bf16.gmra.mxu0 %v4377
        %v5008 = vpop.f32.mrf.mxu0
        %v5009 = vadd.f32 %v4980, %v5008
        %v5010 = vpop.f32.mrf.mxu0
        %v5011 = vadd.f32 %v4982, %v5010
        %5012 = vmatmul.bf16.gmra.mxu0 %v4380
        %v5013 = vpop.f32.mrf.mxu0
        %v5014 = vadd.f32 %v4985, %v5013
        %v5015 = vpop.f32.mrf.mxu0
        %v5016 = vadd.f32 %v4987, %v5015
        %5017 = vmatmul.bf16.gmra.mxu0 %v4383
        %v5018 = vpop.f32.mrf.mxu0
        %v5019 = vadd.f32 %v4990, %v5018
        %v5020 = vpop.f32.mrf.mxu0
        %v5021 = vadd.f32 %v4992, %v5020
        %5022 = vdwg.mxu0
        %5023 = vmatpush.bf16.msra.mxu0 %v4940
        %5024 = vmatpush.bf16.msra.mxu0 %v4939
        %5025 = vmatpush.bf16.msra.mxu0 %v4938
        %5026 = vmatpush.bf16.msra.mxu0 %v4937
        %5027 = vmatpush.bf16.msra.mxu0 %v4936
        %5028 = vmatpush.bf16.msra.mxu0 %v4935
        %5029 = vmatpush.bf16.msra.mxu0 %v4934
        %5030 = vmatpush.bf16.msra.mxu0 %v4933
        %5031 = vmatmul.bf16.gmra.mxu0 %v4375
        %v5032 = vpop.f32.mrf.mxu0
        %v5033 = vadd.f32 %v5004, %v5032
        %v5034 = vpop.f32.mrf.mxu0
        %v5035 = vadd.f32 %v5006, %v5034
        %5036 = vmatmul.bf16.gmra.mxu0 %v4378
        %v5037 = vpop.f32.mrf.mxu0
        %v5038 = vadd.f32 %v5009, %v5037
        %v5039 = vpop.f32.mrf.mxu0
        %v5040 = vadd.f32 %v5011, %v5039
        %5041 = vmatmul.bf16.gmra.mxu0 %v4381
        %v5042 = vpop.f32.mrf.mxu0
        %v5043 = vadd.f32 %v5014, %v5042
        %v5044 = vpop.f32.mrf.mxu0
        %v5045 = vadd.f32 %v5016, %v5044
        %5046 = vmatmul.bf16.gmra.mxu0 %v4384
        %v5047 = vpop.f32.mrf.mxu0
        %v5048 = vadd.f32 %v5019, %v5047
        %v5049 = vpop.f32.mrf.mxu0
        %v5050 = vadd.f32 %v5021, %v5049
        %5051 = vdwg.mxu0
        %s5052 = scalar_lea.vmem [#allocation4], 32
        %v5053 = vld [vmem:[%s5052] sm:$0xff]
        %v5054 = vld [vmem:[%s5052 + $0x8] sm:$0x3]
        %v5055 = vld [vmem:[%s5052 + $0x10] sm:$0xff]
        %v5056 = vld [vmem:[%s5052 + $0x18] sm:$0x3]
        %v5057 = vld [vmem:[%s5052 + $0x20] sm:$0xff]
        %v5058 = vld [vmem:[%s5052 + $0x28] sm:$0x3]
        %v5059 = vld [vmem:[%s5052 + $0x30] sm:$0xff]
        %v5060 = vld [vmem:[%s5052 + $0x38] sm:$0x3]
        %v5061 = vld [vmem:[%s5052 + $0x40] sm:$0xff]
        %v5062 = vld [vmem:[%s5052 + $0x48] sm:$0x3]
        %v5063 = vld [vmem:[%s5052 + $0x50] sm:$0xff]
        %v5064 = vld [vmem:[%s5052 + $0x58] sm:$0x3]
        %v5065 = vld [vmem:[%s5052 + $0x60] sm:$0xff]
        %v5066 = vld [vmem:[%s5052 + $0x68] sm:$0x3]
        %v5067 = vld [vmem:[%s5052 + $0x70] sm:$0xff]
        %v5068 = vld [vmem:[%s5052 + $0x78] sm:$0x3]
        %v5085 = vrot.slane %v5053, 1
        %v5086 = vrot.slane %v5054, 1
        %v5087 = vsel %vm753, %v5085, %v5086
        %v5088 = vrot.slane %v5055, 1
        %v5089 = vrot.slane %v5056, 1
        %v5090 = vsel %vm753, %v5088, %v5089
        %v5091 = vrot.slane %v5057, 1
        %v5092 = vrot.slane %v5058, 1
        %v5093 = vsel %vm753, %v5091, %v5092
        %v5094 = vrot.slane %v5059, 1
        %v5095 = vrot.slane %v5060, 1
        %v5096 = vsel %vm753, %v5094, %v5095
        %v5097 = vrot.slane %v5061, 1
        %v5098 = vrot.slane %v5062, 1
        %v5099 = vsel %vm753, %v5097, %v5098
        %v5100 = vrot.slane %v5063, 1
        %v5101 = vrot.slane %v5064, 1
        %v5102 = vsel %vm753, %v5100, %v5101
        %v5103 = vrot.slane %v5065, 1
        %v5104 = vrot.slane %v5066, 1
        %v5105 = vsel %vm753, %v5103, %v5104
        %v5106 = vrot.slane %v5067, 1
        %v5107 = vrot.slane %v5068, 1
        %v5108 = vsel %vm753, %v5106, %v5107
        %v5117 = vrot.slane %v5053, 2
        %v5118 = vrot.slane %v5054, 2
        %v5119 = vsel %vm818, %v5117, %v5118
        %v5120 = vrot.slane %v5055, 2
        %v5121 = vrot.slane %v5056, 2
        %v5122 = vsel %vm818, %v5120, %v5121
        %v5123 = vrot.slane %v5057, 2
        %v5124 = vrot.slane %v5058, 2
        %v5125 = vsel %vm818, %v5123, %v5124
        %v5126 = vrot.slane %v5059, 2
        %v5127 = vrot.slane %v5060, 2
        %v5128 = vsel %vm818, %v5126, %v5127
        %v5129 = vrot.slane %v5061, 2
        %v5130 = vrot.slane %v5062, 2
        %v5131 = vsel %vm818, %v5129, %v5130
        %v5132 = vrot.slane %v5063, 2
        %v5133 = vrot.slane %v5064, 2
        %v5134 = vsel %vm818, %v5132, %v5133
        %v5135 = vrot.slane %v5065, 2
        %v5136 = vrot.slane %v5066, 2
        %v5137 = vsel %vm818, %v5135, %v5136
        %v5138 = vrot.slane %v5067, 2
        %v5139 = vrot.slane %v5068, 2
        %v5140 = vsel %vm818, %v5138, %v5139
        %v5149 = vpack.c.bf16 %v5055, %v5053
        %v5150 = vpack.c.bf16 %v5090, %v5087
        %v5151 = vpack.c.bf16 %v5122, %v5119
        %v5152 = vpack.c.bf16 %v5059, %v5057
        %v5153 = vpack.c.bf16 %v5096, %v5093
        %v5154 = vpack.c.bf16 %v5128, %v5125
        %v5155 = vpack.c.bf16 %v5063, %v5061
        %v5156 = vpack.c.bf16 %v5102, %v5099
        %v5157 = vpack.c.bf16 %v5134, %v5131
        %v5158 = vpack.c.bf16 %v5067, %v5065
        %v5159 = vpack.c.bf16 %v5108, %v5105
        %v5160 = vpack.c.bf16 %v5140, %v5137
        %s5161 = scalar_lea.vmem %s9, 384
        %v5162 = vld [vmem:[%s5161] sm:$0xf]
        %v5163 = vld [vmem:[%s5161 + $0x4] sm:$0xf]
        %v5164 = vld [vmem:[%s5161 + $0x8] sm:$0xf]
        %v5165 = vld [vmem:[%s5161 + $0xc] sm:$0xf]
        %v5166 = vld [vmem:[%s5161 + $0x10] sm:$0xf]
        %v5167 = vld [vmem:[%s5161 + $0x14] sm:$0xf]
        %v5168 = vld [vmem:[%s5161 + $0x18] sm:$0xf]
        %v5169 = vld [vmem:[%s5161 + $0x1c] sm:$0xf]
        %v5170 = vld [vmem:[%s5161 + $0x20] sm:$0xf]
        %v5171 = vld [vmem:[%s5161 + $0x24] sm:$0xf]
        %v5172 = vld [vmem:[%s5161 + $0x28] sm:$0xf]
        %v5173 = vld [vmem:[%s5161 + $0x2c] sm:$0xf]
        %v5174 = vld [vmem:[%s5161 + $0x30] sm:$0xf]
        %v5175 = vld [vmem:[%s5161 + $0x34] sm:$0xf]
        %v5176 = vld [vmem:[%s5161 + $0x38] sm:$0xf]
        %v5177 = vld [vmem:[%s5161 + $0x3c] sm:$0xf]
        %v5178 = vld [vmem:[%s5161 + $0x40] sm:$0xf]
        %v5179 = vld [vmem:[%s5161 + $0x44] sm:$0xf]
        %v5180 = vld [vmem:[%s5161 + $0x48] sm:$0xf]
        %v5181 = vld [vmem:[%s5161 + $0x4c] sm:$0xf]
        %v5182 = vld [vmem:[%s5161 + $0x50] sm:$0xf]
        %v5183 = vld [vmem:[%s5161 + $0x54] sm:$0xf]
        %v5184 = vld [vmem:[%s5161 + $0x58] sm:$0xf]
        %v5185 = vld [vmem:[%s5161 + $0x5c] sm:$0xf]
        %v5186 = vld [vmem:[%s5161 + $0x60] sm:$0xf]
        %v5187 = vld [vmem:[%s5161 + $0x64] sm:$0xf]
        %v5188 = vld [vmem:[%s5161 + $0x68] sm:$0xf]
        %v5189 = vld [vmem:[%s5161 + $0x6c] sm:$0xf]
        %v5190 = vld [vmem:[%s5161 + $0x70] sm:$0xf]
        %v5191 = vld [vmem:[%s5161 + $0x74] sm:$0xf]
        %v5192 = vld [vmem:[%s5161 + $0x78] sm:$0xf]
        %v5193 = vld [vmem:[%s5161 + $0x7c] sm:$0xf]
        %v5194 = vld [vmem:[%s5161 + $0x80] sm:$0xf]
        %v5195 = vld [vmem:[%s5161 + $0x84] sm:$0xf]
        %v5196 = vld [vmem:[%s5161 + $0x88] sm:$0xf]
        %v5197 = vld [vmem:[%s5161 + $0x8c] sm:$0xf]
        %v5198 = vld [vmem:[%s5161 + $0x90] sm:$0xf]
        %v5199 = vld [vmem:[%s5161 + $0x94] sm:$0xf]
        %v5200 = vld [vmem:[%s5161 + $0x98] sm:$0xf]
        %v5201 = vld [vmem:[%s5161 + $0x9c] sm:$0xf]
        %v5202 = vld [vmem:[%s5161 + $0xa0] sm:$0xf]
        %v5203 = vld [vmem:[%s5161 + $0xa4] sm:$0xf]
        %v5204 = vld [vmem:[%s5161 + $0xa8] sm:$0xf]
        %v5205 = vld [vmem:[%s5161 + $0xac] sm:$0xf]
        %v5206 = vld [vmem:[%s5161 + $0xb0] sm:$0xf]
        %v5207 = vld [vmem:[%s5161 + $0xb4] sm:$0xf]
        %v5208 = vld [vmem:[%s5161 + $0xb8] sm:$0xf]
        %v5209 = vld [vmem:[%s5161 + $0xbc] sm:$0xf]
        %v5258 = vunpack.c.l.b16 %v5162
        %v5259 = vunpack.c.l.b16 %v5163
        %v5260 = vunpack.c.l.b16 %v5164
        %v5261 = vunpack.c.l.b16 %v5165
        %v5262 = vunpack.c.l.b16 %v5166
        %v5263 = vunpack.c.l.b16 %v5167
        %v5264 = vunpack.c.l.b16 %v5168
        %v5265 = vunpack.c.l.b16 %v5169
        %v5266 = vunpack.c.l.b16 %v5170
        %v5267 = vunpack.c.l.b16 %v5171
        %v5268 = vunpack.c.l.b16 %v5172
        %v5269 = vunpack.c.l.b16 %v5173
        %v5270 = vunpack.c.l.b16 %v5174
        %v5271 = vunpack.c.l.b16 %v5175
        %v5272 = vunpack.c.l.b16 %v5176
        %v5273 = vunpack.c.l.b16 %v5177
        %v5274 = vunpack.c.l.b16 %v5178
        %v5275 = vunpack.c.l.b16 %v5179
        %v5276 = vunpack.c.l.b16 %v5180
        %v5277 = vunpack.c.l.b16 %v5181
        %v5278 = vunpack.c.l.b16 %v5182
        %v5279 = vunpack.c.l.b16 %v5183
        %v5280 = vunpack.c.l.b16 %v5184
        %v5281 = vunpack.c.l.b16 %v5185
        %v5282 = vunpack.c.l.b16 %v5186
        %v5283 = vunpack.c.l.b16 %v5187
        %v5284 = vunpack.c.l.b16 %v5188
        %v5285 = vunpack.c.l.b16 %v5189
        %v5286 = vunpack.c.l.b16 %v5190
        %v5287 = vunpack.c.l.b16 %v5191
        %v5288 = vunpack.c.l.b16 %v5192
        %v5289 = vunpack.c.l.b16 %v5193
        %v5290 = vunpack.c.l.b16 %v5194
        %v5291 = vunpack.c.l.b16 %v5195
        %v5292 = vunpack.c.l.b16 %v5196
        %v5293 = vunpack.c.l.b16 %v5197
        %v5294 = vunpack.c.l.b16 %v5198
        %v5295 = vunpack.c.l.b16 %v5199
        %v5296 = vunpack.c.l.b16 %v5200
        %v5297 = vunpack.c.l.b16 %v5201
        %v5298 = vunpack.c.l.b16 %v5202
        %v5299 = vunpack.c.l.b16 %v5203
        %v5300 = vunpack.c.l.b16 %v5204
        %v5301 = vunpack.c.l.b16 %v5205
        %v5302 = vunpack.c.l.b16 %v5206
        %v5303 = vunpack.c.l.b16 %v5207
        %v5304 = vunpack.c.l.b16 %v5208
        %v5305 = vunpack.c.l.b16 %v5209
        %v5306 = vpack.c.b16 %v5259, %v5258
        %v5307 = vpack.c.b16 %v5261, %v5260
        %v5308 = vpack.c.b16 %v5263, %v5262
        %v5309 = vpack.c.b16 %v5265, %v5264
        %v5310 = vpack.c.b16 %v5267, %v5266
        %v5311 = vpack.c.b16 %v5269, %v5268
        %v5312 = vpack.c.b16 %v5271, %v5270
        %v5313 = vpack.c.b16 %v5273, %v5272
        %v5314 = vpack.c.b16 %v5275, %v5274
        %v5315 = vpack.c.b16 %v5277, %v5276
        %v5316 = vpack.c.b16 %v5279, %v5278
        %v5317 = vpack.c.b16 %v5281, %v5280
        %v5318 = vpack.c.b16 %v5283, %v5282
        %v5319 = vpack.c.b16 %v5285, %v5284
        %v5320 = vpack.c.b16 %v5287, %v5286
        %v5321 = vpack.c.b16 %v5289, %v5288
        %v5322 = vpack.c.b16 %v5291, %v5290
        %v5323 = vpack.c.b16 %v5293, %v5292
        %v5324 = vpack.c.b16 %v5295, %v5294
        %v5325 = vpack.c.b16 %v5297, %v5296
        %v5326 = vpack.c.b16 %v5299, %v5298
        %v5327 = vpack.c.b16 %v5301, %v5300
        %v5328 = vpack.c.b16 %v5303, %v5302
        %v5329 = vpack.c.b16 %v5305, %v5304
        %5354 = vmatpush.bf16.msra.mxu0 %v5313
        %5355 = vmatpush.bf16.msra.mxu0 %v5312
        %5356 = vmatpush.bf16.msra.mxu0 %v5311
        %5357 = vmatpush.bf16.msra.mxu0 %v5310
        %5358 = vmatpush.bf16.msra.mxu0 %v5309
        %5359 = vmatpush.bf16.msra.mxu0 %v5308
        %5360 = vmatpush.bf16.msra.mxu0 %v5307
        %5361 = vmatpush.bf16.msra.mxu0 %v5306
        %5362 = vmatmul.bf16.gmra.mxu0 %v5149
        %v5363 = vpop.f32.mrf.mxu0
        %v5364 = vadd.f32 0.0, %v5363
        %v5365 = vpop.f32.mrf.mxu0
        %v5366 = vadd.f32 0.0, %v5365
        %5367 = vmatmul.bf16.gmra.mxu0 %v5152
        %v5368 = vpop.f32.mrf.mxu0
        %v5369 = vadd.f32 0.0, %v5368
        %v5370 = vpop.f32.mrf.mxu0
        %v5371 = vadd.f32 0.0, %v5370
        %5372 = vmatmul.bf16.gmra.mxu0 %v5155
        %v5373 = vpop.f32.mrf.mxu0
        %v5374 = vadd.f32 0.0, %v5373
        %v5375 = vpop.f32.mrf.mxu0
        %v5376 = vadd.f32 0.0, %v5375
        %5377 = vmatmul.bf16.gmra.mxu0 %v5158
        %v5378 = vpop.f32.mrf.mxu0
        %v5379 = vadd.f32 0.0, %v5378
        %v5380 = vpop.f32.mrf.mxu0
        %v5381 = vadd.f32 0.0, %v5380
        %5382 = vdwg.mxu0
        %5383 = vmatpush.bf16.msra.mxu0 %v5321
        %5384 = vmatpush.bf16.msra.mxu0 %v5320
        %5385 = vmatpush.bf16.msra.mxu0 %v5319
        %5386 = vmatpush.bf16.msra.mxu0 %v5318
        %5387 = vmatpush.bf16.msra.mxu0 %v5317
        %5388 = vmatpush.bf16.msra.mxu0 %v5316
        %5389 = vmatpush.bf16.msra.mxu0 %v5315
        %5390 = vmatpush.bf16.msra.mxu0 %v5314
        %5391 = vmatmul.bf16.gmra.mxu0 %v5150
        %v5392 = vpop.f32.mrf.mxu0
        %v5393 = vadd.f32 %v5364, %v5392
        %v5394 = vpop.f32.mrf.mxu0
        %v5395 = vadd.f32 %v5366, %v5394
        %5396 = vmatmul.bf16.gmra.mxu0 %v5153
        %v5397 = vpop.f32.mrf.mxu0
        %v5398 = vadd.f32 %v5369, %v5397
        %v5399 = vpop.f32.mrf.mxu0
        %v5400 = vadd.f32 %v5371, %v5399
        %5401 = vmatmul.bf16.gmra.mxu0 %v5156
        %v5402 = vpop.f32.mrf.mxu0
        %v5403 = vadd.f32 %v5374, %v5402
        %v5404 = vpop.f32.mrf.mxu0
        %v5405 = vadd.f32 %v5376, %v5404
        %5406 = vmatmul.bf16.gmra.mxu0 %v5159
        %v5407 = vpop.f32.mrf.mxu0
        %v5408 = vadd.f32 %v5379, %v5407
        %v5409 = vpop.f32.mrf.mxu0
        %v5410 = vadd.f32 %v5381, %v5409
        %5411 = vdwg.mxu0
        %5412 = vmatpush.bf16.msra.mxu0 %v5329
        %5413 = vmatpush.bf16.msra.mxu0 %v5328
        %5414 = vmatpush.bf16.msra.mxu0 %v5327
        %5415 = vmatpush.bf16.msra.mxu0 %v5326
        %5416 = vmatpush.bf16.msra.mxu0 %v5325
        %5417 = vmatpush.bf16.msra.mxu0 %v5324
        %5418 = vmatpush.bf16.msra.mxu0 %v5323
        %5419 = vmatpush.bf16.msra.mxu0 %v5322
        %5420 = vmatmul.bf16.gmra.mxu0 %v5151
        %v5421 = vpop.f32.mrf.mxu0
        %v5422 = vadd.f32 %v5393, %v5421
        %v5423 = vpop.f32.mrf.mxu0
        %v5424 = vadd.f32 %v5395, %v5423
        %5425 = vmatmul.bf16.gmra.mxu0 %v5154
        %v5426 = vpop.f32.mrf.mxu0
        %v5427 = vadd.f32 %v5398, %v5426
        %v5428 = vpop.f32.mrf.mxu0
        %v5429 = vadd.f32 %v5400, %v5428
        %5430 = vmatmul.bf16.gmra.mxu0 %v5157
        %v5431 = vpop.f32.mrf.mxu0
        %v5432 = vadd.f32 %v5403, %v5431
        %v5433 = vpop.f32.mrf.mxu0
        %v5434 = vadd.f32 %v5405, %v5433
        %5435 = vmatmul.bf16.gmra.mxu0 %v5160
        %v5436 = vpop.f32.mrf.mxu0
        %v5437 = vadd.f32 %v5408, %v5436
        %v5438 = vpop.f32.mrf.mxu0
        %v5439 = vadd.f32 %v5410, %v5438
        %5440 = vdwg.mxu0
        %v5441 = vadd.f32 %v5033, %v5422
        %v5442 = vadd.f32 %v5035, %v5424
        %v5443 = vadd.f32 %v5038, %v5427
        %v5444 = vadd.f32 %v5040, %v5429
        %v5445 = vadd.f32 %v5043, %v5432
        %v5446 = vadd.f32 %v5045, %v5434
        %v5447 = vadd.f32 %v5048, %v5437
        %v5448 = vadd.f32 %v5050, %v5439
        %v5449 = vld [vmem:[%s10] sm:$0x1]
        %v5451 = vperm.slane %v5449, 0
        %v5453 = vmul.f32 %v5441, %v5451
        %v5454 = vmul.f32 %v5442, %v5451
        %v5455 = vmul.f32 %v5443, %v5451
        %v5456 = vmul.f32 %v5444, %v5451
        %v5457 = vmul.f32 %v5445, %v5451
        %v5458 = vmul.f32 %v5446, %v5451
        %v5459 = vmul.f32 %v5447, %v5451
        %v5460 = vmul.f32 %v5448, %v5451
        %v5461 = vld [vmem:[%s11] sm:$0x1]
        %v5463 = vperm.slane %v5461, 0
        %v5465 = vadd.f32 %v5453, %v5463
        %v5466 = vadd.f32 %v5454, %v5463
        %v5467 = vadd.f32 %v5455, %v5463
        %v5468 = vadd.f32 %v5456, %v5463
        %v5469 = vadd.f32 %v5457, %v5463
        %v5470 = vadd.f32 %v5458, %v5463
        %v5471 = vadd.f32 %v5459, %v5463
        %v5472 = vadd.f32 %v5460, %v5463
        %v5473 = vmax.f32 %v5465, 0.0
        %v5474 = vmax.f32 %v5466, 0.0
        %v5475 = vmax.f32 %v5467, 0.0
        %v5476 = vmax.f32 %v5468, 0.0
        %v5477 = vmax.f32 %v5469, 0.0
        %v5478 = vmax.f32 %v5470, 0.0
        %v5479 = vmax.f32 %v5471, 0.0
        %v5480 = vmax.f32 %v5472, 0.0
        %v5481 = vld [vmem:[%s12] sm:$0xff]
        %v5482 = vld [vmem:[%s12 + $0x8] sm:$0xff]
        %v5483 = vld [vmem:[%s12 + $0x10] sm:$0xff]
        %v5484 = vld [vmem:[%s12 + $0x18] sm:$0xff]
        %v5485 = vld [vmem:[%s12 + $0x20] sm:$0xff]
        %v5486 = vld [vmem:[%s12 + $0x28] sm:$0xff]
        %v5487 = vld [vmem:[%s12 + $0x30] sm:$0xff]
        %v5488 = vld [vmem:[%s12 + $0x38] sm:$0xff]
        %v5489 = vld [vmem:[%s12 + $0x40] sm:$0xff]
        %v5490 = vld [vmem:[%s12 + $0x48] sm:$0xff]
        %v5491 = vld [vmem:[%s12 + $0x50] sm:$0xff]
        %v5492 = vld [vmem:[%s12 + $0x58] sm:$0xff]
        %v5493 = vld [vmem:[%s12 + $0x60] sm:$0xff]
        %v5494 = vld [vmem:[%s12 + $0x68] sm:$0xff]
        %v5495 = vld [vmem:[%s12 + $0x70] sm:$0xff]
        %v5496 = vld [vmem:[%s12 + $0x78] sm:$0xff]
        %v5497 = vld [vmem:[%s12 + $0x80] sm:$0xff]
        %v5498 = vld [vmem:[%s12 + $0x88] sm:$0xff]
        %v5499 = vld [vmem:[%s12 + $0x90] sm:$0xff]
        %v5500 = vld [vmem:[%s12 + $0x98] sm:$0xff]
        %v5501 = vld [vmem:[%s12 + $0xa0] sm:$0xff]
        %v5502 = vld [vmem:[%s12 + $0xa8] sm:$0xff]
        %v5503 = vld [vmem:[%s12 + $0xb0] sm:$0xff]
        %v5504 = vld [vmem:[%s12 + $0xb8] sm:$0xff]
        %v5505 = vld [vmem:[%s12 + $0xc0] sm:$0xff]
        %v5506 = vld [vmem:[%s12 + $0xc8] sm:$0xff]
        %v5507 = vld [vmem:[%s12 + $0xd0] sm:$0xff]
        %v5508 = vld [vmem:[%s12 + $0xd8] sm:$0xff]
        %v5509 = vld [vmem:[%s12 + $0xe0] sm:$0xff]
        %v5510 = vld [vmem:[%s12 + $0xe8] sm:$0xff]
        %v5511 = vld [vmem:[%s12 + $0xf0] sm:$0xff]
        %v5512 = vld [vmem:[%s12 + $0xf8] sm:$0xff]
        %vm5513 = vcmask 523264
        %v5515 = vsel %vm5513, %v5481, 0
        %v5518 = vsel %vm5513, %v5482, 0
        %v5521 = vsel %vm5513, %v5483, 0
        %v5524 = vsel %vm5513, %v5484, 0
        %v5527 = vsel %vm5513, %v5485, 0
        %v5530 = vsel %vm5513, %v5486, 0
        %v5533 = vsel %vm5513, %v5487, 0
        %v5536 = vsel %vm5513, %v5488, 0
        %v5539 = vsel %vm5513, %v5489, 0
        %v5542 = vsel %vm5513, %v5490, 0
        %v5545 = vsel %vm5513, %v5491, 0
        %v5548 = vsel %vm5513, %v5492, 0
        %v5551 = vsel %vm5513, %v5493, 0
        %v5554 = vsel %vm5513, %v5494, 0
        %v5557 = vsel %vm5513, %v5495, 0
        %v5560 = vsel %vm5513, %v5496, 0
        %v5563 = vsel %vm5513, %v5497, 0
        %v5566 = vsel %vm5513, %v5498, 0
        %v5569 = vsel %vm5513, %v5499, 0
        %v5572 = vsel %vm5513, %v5500, 0
        %v5575 = vsel %vm5513, %v5501, 0
        %v5578 = vsel %vm5513, %v5502, 0
        %v5581 = vsel %vm5513, %v5503, 0
        %v5584 = vsel %vm5513, %v5504, 0
        %v5587 = vsel %vm5513, %v5505, 0
        %v5590 = vsel %vm5513, %v5506, 0
        %v5593 = vsel %vm5513, %v5507, 0
        %v5596 = vsel %vm5513, %v5508, 0
        %v5599 = vsel %vm5513, %v5509, 0
        %v5602 = vsel %vm5513, %v5510, 0
        %v5605 = vsel %vm5513, %v5511, 0
        %v5608 = vsel %vm5513, %v5512, 0
        %5610 = vmatpush.msra.mxu0 0.0
        %5611 = vmatpush.msra.mxu0 0.0
        %5612 = vmatpush.msra.mxu0 0.0
        %5613 = vmatpush.msra.mxu0 0.0
        %5614 = vmatpush.msra.mxu0 0.0
        %5615 = vmatpush.msra.mxu0 0.0
        %5616 = vmatpush.msra.mxu0 0.0
        %5617 = vmatpush.msra.mxu0 0.0
        %5618 = vmatpush.msra.mxu0 %v5480
        %5619 = vmatpush.msra.mxu0 %v5479
        %5620 = vmatpush.msra.mxu0 %v5478
        %5621 = vmatpush.msra.mxu0 %v5477
        %5622 = vmatpush.msra.mxu0 %v5476
        %5623 = vmatpush.msra.mxu0 %v5475
        %5624 = vmatpush.msra.mxu0 %v5474
        %5625 = vmatpush.msra.mxu0 %v5473
        %5626 = vmatmul.f32.gmra.mxu0 %v5515
        %v5627 = vpop.f32.mrf.mxu0
        %v5628 = vadd.f32 0.0, %v5627
        %5629 = vmatmul.f32.gmra.mxu0 %v5518
        %v5630 = vpop.f32.mrf.mxu0
        %v5631 = vadd.f32 0.0, %v5630
        %5632 = vmatmul.f32.gmra.mxu0 %v5521
        %v5633 = vpop.f32.mrf.mxu0
        %v5634 = vadd.f32 0.0, %v5633
        %5635 = vmatmul.f32.gmra.mxu0 %v5524
        %v5636 = vpop.f32.mrf.mxu0
        %v5637 = vadd.f32 0.0, %v5636
        %5638 = vmatmul.f32.gmra.mxu0 %v5527
        %v5639 = vpop.f32.mrf.mxu0
        %v5640 = vadd.f32 0.0, %v5639
        %5641 = vmatmul.f32.gmra.mxu0 %v5530
        %v5642 = vpop.f32.mrf.mxu0
        %v5643 = vadd.f32 0.0, %v5642
        %5644 = vmatmul.f32.gmra.mxu0 %v5533
        %v5645 = vpop.f32.mrf.mxu0
        %v5646 = vadd.f32 0.0, %v5645
        %5647 = vmatmul.f32.gmra.mxu0 %v5536
        %v5648 = vpop.f32.mrf.mxu0
        %v5649 = vadd.f32 0.0, %v5648
        %5650 = vmatmul.f32.gmra.mxu0 %v5539
        %v5651 = vpop.f32.mrf.mxu0
        %v5652 = vadd.f32 0.0, %v5651
        %5653 = vmatmul.f32.gmra.mxu0 %v5542
        %v5654 = vpop.f32.mrf.mxu0
        %v5655 = vadd.f32 0.0, %v5654
        %5656 = vmatmul.f32.gmra.mxu0 %v5545
        %v5657 = vpop.f32.mrf.mxu0
        %v5658 = vadd.f32 0.0, %v5657
        %5659 = vmatmul.f32.gmra.mxu0 %v5548
        %v5660 = vpop.f32.mrf.mxu0
        %v5661 = vadd.f32 0.0, %v5660
        %5662 = vmatmul.f32.gmra.mxu0 %v5551
        %v5663 = vpop.f32.mrf.mxu0
        %v5664 = vadd.f32 0.0, %v5663
        %5665 = vmatmul.f32.gmra.mxu0 %v5554
        %v5666 = vpop.f32.mrf.mxu0
        %v5667 = vadd.f32 0.0, %v5666
        %5668 = vmatmul.f32.gmra.mxu0 %v5557
        %v5669 = vpop.f32.mrf.mxu0
        %v5670 = vadd.f32 0.0, %v5669
        %5671 = vmatmul.f32.gmra.mxu0 %v5560
        %v5672 = vpop.f32.mrf.mxu0
        %v5673 = vadd.f32 0.0, %v5672
        %5674 = vmatmul.f32.gmra.mxu0 %v5563
        %v5675 = vpop.f32.mrf.mxu0
        %v5676 = vadd.f32 0.0, %v5675
        %5677 = vmatmul.f32.gmra.mxu0 %v5566
        %v5678 = vpop.f32.mrf.mxu0
        %v5679 = vadd.f32 0.0, %v5678
        %5680 = vmatmul.f32.gmra.mxu0 %v5569
        %v5681 = vpop.f32.mrf.mxu0
        %v5682 = vadd.f32 0.0, %v5681
        %5683 = vmatmul.f32.gmra.mxu0 %v5572
        %v5684 = vpop.f32.mrf.mxu0
        %v5685 = vadd.f32 0.0, %v5684
        %5686 = vmatmul.f32.gmra.mxu0 %v5575
        %v5687 = vpop.f32.mrf.mxu0
        %v5688 = vadd.f32 0.0, %v5687
        %5689 = vmatmul.f32.gmra.mxu0 %v5578
        %v5690 = vpop.f32.mrf.mxu0
        %v5691 = vadd.f32 0.0, %v5690
        %5692 = vmatmul.f32.gmra.mxu0 %v5581
        %v5693 = vpop.f32.mrf.mxu0
        %v5694 = vadd.f32 0.0, %v5693
        %5695 = vmatmul.f32.gmra.mxu0 %v5584
        %v5696 = vpop.f32.mrf.mxu0
        %v5697 = vadd.f32 0.0, %v5696
        %5698 = vmatmul.f32.gmra.mxu0 %v5587
        %v5699 = vpop.f32.mrf.mxu0
        %v5700 = vadd.f32 0.0, %v5699
        %5701 = vmatmul.f32.gmra.mxu0 %v5590
        %v5702 = vpop.f32.mrf.mxu0
        %v5703 = vadd.f32 0.0, %v5702
        %5704 = vmatmul.f32.gmra.mxu0 %v5593
        %v5705 = vpop.f32.mrf.mxu0
        %v5706 = vadd.f32 0.0, %v5705
        %5707 = vmatmul.f32.gmra.mxu0 %v5596
        %v5708 = vpop.f32.mrf.mxu0
        %v5709 = vadd.f32 0.0, %v5708
        %5710 = vmatmul.f32.gmra.mxu0 %v5599
        %v5711 = vpop.f32.mrf.mxu0
        %v5712 = vadd.f32 0.0, %v5711
        %5713 = vmatmul.f32.gmra.mxu0 %v5602
        %v5714 = vpop.f32.mrf.mxu0
        %v5715 = vadd.f32 0.0, %v5714
        %5716 = vmatmul.f32.gmra.mxu0 %v5605
        %v5717 = vpop.f32.mrf.mxu0
        %v5718 = vadd.f32 0.0, %v5717
        %5719 = vmatmul.f32.gmra.mxu0 %v5608
        %v5720 = vpop.f32.mrf.mxu0
        %v5721 = vadd.f32 0.0, %v5720
        %5722 = vdwg.mxu0
        %v5723 = vld [vmem:[%s478] sm:$0xff]
        %v5724 = vld [vmem:[%s478 + $0x8] sm:$0xff]
        %v5725 = vld [vmem:[%s478 + $0x10] sm:$0xff]
        %v5726 = vld [vmem:[%s478 + $0x18] sm:$0xff]
        %v5727 = vld [vmem:[%s478 + $0x20] sm:$0xff]
        %v5728 = vld [vmem:[%s478 + $0x28] sm:$0xff]
        %v5729 = vld [vmem:[%s478 + $0x30] sm:$0xff]
        %v5730 = vld [vmem:[%s478 + $0x38] sm:$0xff]
        %v5731 = vld [vmem:[%s478 + $0x40] sm:$0xff]
        %v5732 = vld [vmem:[%s478 + $0x48] sm:$0xff]
        %v5733 = vld [vmem:[%s478 + $0x50] sm:$0xff]
        %v5734 = vld [vmem:[%s478 + $0x58] sm:$0xff]
        %v5735 = vld [vmem:[%s478 + $0x60] sm:$0xff]
        %v5736 = vld [vmem:[%s478 + $0x68] sm:$0xff]
        %v5737 = vld [vmem:[%s478 + $0x70] sm:$0xff]
        %v5738 = vld [vmem:[%s478 + $0x78] sm:$0xff]
        %v5739 = vld [vmem:[%s478 + $0x80] sm:$0xff]
        %v5740 = vld [vmem:[%s478 + $0x88] sm:$0xff]
        %v5741 = vld [vmem:[%s478 + $0x90] sm:$0xff]
        %v5742 = vld [vmem:[%s478 + $0x98] sm:$0xff]
        %v5743 = vld [vmem:[%s478 + $0xa0] sm:$0xff]
        %v5744 = vld [vmem:[%s478 + $0xa8] sm:$0xff]
        %v5745 = vld [vmem:[%s478 + $0xb0] sm:$0xff]
        %v5746 = vld [vmem:[%s478 + $0xb8] sm:$0xff]
        %v5747 = vld [vmem:[%s478 + $0xc0] sm:$0xff]
        %v5748 = vld [vmem:[%s478 + $0xc8] sm:$0xff]
        %v5749 = vld [vmem:[%s478 + $0xd0] sm:$0xff]
        %v5750 = vld [vmem:[%s478 + $0xd8] sm:$0xff]
        %v5751 = vld [vmem:[%s478 + $0xe0] sm:$0xff]
        %v5752 = vld [vmem:[%s478 + $0xe8] sm:$0xff]
        %v5753 = vld [vmem:[%s478 + $0xf0] sm:$0xff]
        %v5754 = vld [vmem:[%s478 + $0xf8] sm:$0xff]
        %v5755 = vadd.f32 %v5628, %v5723
        %v5756 = vadd.f32 %v5631, %v5724
        %v5757 = vadd.f32 %v5634, %v5725
        %v5758 = vadd.f32 %v5637, %v5726
        %v5759 = vadd.f32 %v5640, %v5727
        %v5760 = vadd.f32 %v5643, %v5728
        %v5761 = vadd.f32 %v5646, %v5729
        %v5762 = vadd.f32 %v5649, %v5730
        %v5763 = vadd.f32 %v5652, %v5731
        %v5764 = vadd.f32 %v5655, %v5732
        %v5765 = vadd.f32 %v5658, %v5733
        %v5766 = vadd.f32 %v5661, %v5734
        %v5767 = vadd.f32 %v5664, %v5735
        %v5768 = vadd.f32 %v5667, %v5736
        %v5769 = vadd.f32 %v5670, %v5737
        %v5770 = vadd.f32 %v5673, %v5738
        %v5771 = vadd.f32 %v5676, %v5739
        %v5772 = vadd.f32 %v5679, %v5740
        %v5773 = vadd.f32 %v5682, %v5741
        %v5774 = vadd.f32 %v5685, %v5742
        %v5775 = vadd.f32 %v5688, %v5743
        %v5776 = vadd.f32 %v5691, %v5744
        %v5777 = vadd.f32 %v5694, %v5745
        %v5778 = vadd.f32 %v5697, %v5746
        %v5779 = vadd.f32 %v5700, %v5747
        %v5780 = vadd.f32 %v5703, %v5748
        %v5781 = vadd.f32 %v5706, %v5749
        %v5782 = vadd.f32 %v5709, %v5750
        %v5783 = vadd.f32 %v5712, %v5751
        %v5784 = vadd.f32 %v5715, %v5752
        %v5785 = vadd.f32 %v5718, %v5753
        %v5786 = vadd.f32 %v5721, %v5754
        %5787 = vst [vmem:[%s463] sm:$0xff] %v5755
        %5788 = vst [vmem:[%s463 + $0x8] sm:$0xff] %v5756
        %5789 = vst [vmem:[%s463 + $0x10] sm:$0xff] %v5757
        %5790 = vst [vmem:[%s463 + $0x18] sm:$0xff] %v5758
        %5791 = vst [vmem:[%s463 + $0x20] sm:$0xff] %v5759
        %5792 = vst [vmem:[%s463 + $0x28] sm:$0xff] %v5760
        %5793 = vst [vmem:[%s463 + $0x30] sm:$0xff] %v5761
        %5794 = vst [vmem:[%s463 + $0x38] sm:$0xff] %v5762
        %5795 = vst [vmem:[%s463 + $0x40] sm:$0xff] %v5763
        %5796 = vst [vmem:[%s463 + $0x48] sm:$0xff] %v5764
        %5797 = vst [vmem:[%s463 + $0x50] sm:$0xff] %v5765
        %5798 = vst [vmem:[%s463 + $0x58] sm:$0xff] %v5766
        %5799 = vst [vmem:[%s463 + $0x60] sm:$0xff] %v5767
        %5800 = vst [vmem:[%s463 + $0x68] sm:$0xff] %v5768
        %5801 = vst [vmem:[%s463 + $0x70] sm:$0xff] %v5769
        %5802 = vst [vmem:[%s463 + $0x78] sm:$0xff] %v5770
        %5803 = vst [vmem:[%s463 + $0x80] sm:$0xff] %v5771
        %5804 = vst [vmem:[%s463 + $0x88] sm:$0xff] %v5772
        %5805 = vst [vmem:[%s463 + $0x90] sm:$0xff] %v5773
        %5806 = vst [vmem:[%s463 + $0x98] sm:$0xff] %v5774
        %5807 = vst [vmem:[%s463 + $0xa0] sm:$0xff] %v5775
        %5808 = vst [vmem:[%s463 + $0xa8] sm:$0xff] %v5776
        %5809 = vst [vmem:[%s463 + $0xb0] sm:$0xff] %v5777
        %5810 = vst [vmem:[%s463 + $0xb8] sm:$0xff] %v5778
        %5811 = vst [vmem:[%s463 + $0xc0] sm:$0xff] %v5779
        %5812 = vst [vmem:[%s463 + $0xc8] sm:$0xff] %v5780
        %5813 = vst [vmem:[%s463 + $0xd0] sm:$0xff] %v5781
        %5814 = vst [vmem:[%s463 + $0xd8] sm:$0xff] %v5782
        %5815 = vst [vmem:[%s463 + $0xe0] sm:$0xff] %v5783
        %5816 = vst [vmem:[%s463 + $0xe8] sm:$0xff] %v5784
        %5817 = vst [vmem:[%s463 + $0xf0] sm:$0xff] %v5785
        %5818 = vst [vmem:[%s463 + $0xf8] sm:$0xff] %v5786
        %s5819 = sand.u32 %s323, 1
        %s5820 = scalar_lea.sflag [#allocation6], %s5819
        %s5821 = sand.u32 %s323, 1
        %s5822 = smul.addr %s5821, 256
        %s5823 = scalar_lea.vmem [#allocation5], %s5822
        // Predicated region
        $region73: #{dbga_forward.1} parent=71 // pred_check
          %p5824 = pneg %p333
        $region74: #{dbga_forward.1} parent=71 // pred_check_branch
          %5826 = sbr.rel (%p5824) target = $region76
        $region75: #{dbga_forward.1} parent=71 // pred_region
          %5828 = vsyncadd %s5820, 0
          %s5829 = smul.addr %s27, 32
          %s5830 = smul.addr %s5829, 8
          %s5831 = scalar_lea.hbm %s13, %s5830
          %s5832 = sshll.u32 %s5823, 4
          %s5833 = int_to_ptr.vmem [resolvable:$true] %s5832
          %s5834 = sshll.u32 %s5831, 4
          %s5835 = int_to_ptr.hbm [resolvable:$true] %s5834
          %5840 = dma.vmem_to_hbm [thread:$0]  %s5833, 4096, %s5835, %s5820, 128, 128, 8
        $region76: #{dbga_forward.1} parent=71 // pred_fallthru
          _
      $region72: #{dbga_forward.1} parent=5 // pred_fallthru
        _
      %p5841 = scmp.le.s32.totalorder 2, %s22
      // Predicated region
      $region77: #{dbga_forward.1} parent=5 // pred_check
        %p5842 = pneg %p5841
      $region78: #{dbga_forward.1} parent=5 // pred_check_branch
        %5844 = sbr.rel (%p5842) target = $region80
      $region79: #{dbga_forward.1} parent=5 // pred_region
        %s5845 = ssub.s32 %s22, 2
        // Predicated region
        $region81: #{dbga_forward.1} parent=79 // pred_check
          %p5846 = pneg %p339
        $region82: #{dbga_forward.1} parent=79 // pred_check_branch
          %5848 = sbr.rel (%p5846) target = $region84
        $region83: #{dbga_forward.1} parent=79 // pred_region
          %s5849 = sand.u32 %s324, 1
          %s5850 = scalar_lea.sflag [#allocation6], %s5849
          %s5851 = sand.u32 %s324, 1
          %s5852 = smul.addr %s5851, 256
          %s5853 = scalar_lea.vmem [#allocation5], %s5852
          %5855 = dma.done %s5850, 4096
        $region84: #{dbga_forward.1} parent=79 // pred_fallthru
          _
      $region80: #{dbga_forward.1} parent=5 // pred_fallthru
        _
    $region6: #{dbga_forward.1} parent=1 // loop_footer
      %s26 = sadd.s32 1, %s22
    $region7: #{dbga_forward.1} parent=1 // loop_footer_branch
      %21 = sbr.rel target = $region3
    $region8: #{dbga_forward.1} parent=1 // loop_exit
      _
    %5856 = vsyncpa [#allocation6], 1
    %s5857 = scalar_lea.sflag [#allocation6], 1
    %5858 = vsyncpa %s5857, 1

</llo_original>
